<compile_context>
chip_gen: v7x
topology: tpu7x:2x2x1
jax: 0.10.0
libtpu: 0.0.40
codegen_flags: <defaults>
</compile_context>

<pallas_src>
import jax
import jax.numpy as jnp
from jax.experimental import pallas as pl
from jax.experimental.pallas import tpu as pltpu


_LANE = 128
_VMEM_LIMIT_BYTES = 32 * 1024 * 1024   # <= physical VMEM on v5e/v6e/v7x


def _round_up(x, m):
    return ((x + m - 1) // m) * m


def _vmem_tile_budget_bytes():
    """Per-pipelined-buffer budget: ~4 MiB on 128-MiB-VMEM parts (v5e/v6e),
    ~2 MiB on 64-MiB parts (v7x). Conservative fallback if the HW query is
    unavailable."""
    try:
        cap = pltpu.get_tpu_info().vmem_capacity_bytes
    except Exception:
        cap = 64 * 1024 * 1024
    return (4 if cap >= 100 * 1024 * 1024 else 2) * 1024 * 1024


def _pick_rows_tile(rows, lane_width, itemsize, row_align, max_tile_rows):
    """Return (tile_rows, padded_rows).

    Classification-sized row counts get ONE fat tile (whole padded batch);
    larger row counts get >=128-row tiles (multiple of 128) sized to the
    generation-aware VMEM budget. `padded_rows` is a multiple of the tile."""
    padded_lanes = _round_up(max(lane_width, _LANE), _LANE)   # VMEM lane padding
    budget_rows = _vmem_tile_budget_bytes() // (padded_lanes * itemsize)
    budget_rows = max(_LANE, min(budget_rows, max_tile_rows))
    rows_aligned = _round_up(rows, row_align)
    if rows_aligned <= budget_rows:
        return rows_aligned, rows_aligned          # single grid step
    tile = (budget_rows // _LANE) * _LANE          # >=128, multiple of 128
    return tile, _round_up(rows, tile)


def _pad_rows(x, rows, fill=0):
    pad = rows - x.shape[0]
    if pad <= 0:
        return x
    widths = ((0, pad),) + ((0, 0),) * (x.ndim - 1)
    return jnp.pad(x, widths, constant_values=fill)


# ---------------------------------------------------------------------------
# Fused classifier head: fc1+bn1+relu -> fc2+bn2+relu -> fc3 -> log_softmax ->
# per-row target gather. bf16 MXU operands, f32 accumulation / softmax.
# Outputs: logits tile (f32) and per-row picked log-prob (f32). No resident
# accumulator -> the single grid axis is fully parallel (v7x megacore).
def _head_kernel(feat_ref, w1_ref, t1_ref, w2_ref, t2_ref, w3_ref, b3_ref,
                 tgt_ref, logits_ref, picked_ref):
    x = feat_ref[...]                                           # (TB, 1024) bf16
    # fc1 (+ folded bn1 scale) + shift + relu
    h = jnp.dot(x, w1_ref[...], preferred_element_type=jnp.float32)
    h = jnp.maximum(h + t1_ref[...], 0.0)
    # (dropout is identity in eval mode) fc2 (+ folded bn2 scale) + shift + relu
    h = jnp.dot(h.astype(w2_ref.dtype), w2_ref[...],
                preferred_element_type=jnp.float32)
    h = jnp.maximum(h + t2_ref[...], 0.0)
    # fc3
    logits = jnp.dot(h.astype(w3_ref.dtype), w3_ref[...],
                     preferred_element_type=jnp.float32)
    logits = logits + b3_ref[...]
    logits_ref[...] = logits                                    # module output

    # log_softmax + masked target gather (NOT a one-hot multiply: a -inf
    # log-prob at a non-target class can never produce NaN). Padded rows carry
    # target = -1 and therefore contribute exactly 0.
    m = jnp.max(logits, axis=-1, keepdims=True)
    lse = m + jnp.log(jnp.sum(jnp.exp(logits - m), axis=-1, keepdims=True))
    logp = logits - lse
    tb, c = logp.shape
    col = jax.lax.broadcasted_iota(jnp.int32, (tb, c), 1)
    picked_ref[...] = jnp.sum(jnp.where(col == tgt_ref[...], logp, 0.0),
                              axis=-1, keepdims=True)


def pointnet_head_forward(feat, params, target, *, tile_rows=None, eps=1e-5,
                          compute_dtype=jnp.bfloat16):
    """Pointnet.forward head on the (B, 1024) global feature, fused with
    log_softmax + F.nll_loss(mean). Returns (logits (B, C) f32, loss scalar).
    Targets must lie in [0, C)."""
    b, fdim = feat.shape
    w1, b1, g1, be1, m1, v1 = params["fc1"]
    w2, b2, g2, be2, m2, v2 = params["fc2"]
    w3, b3 = params["fc3"]
    h1, h2 = w1.shape[1], w2.shape[1]
    c = w3.shape[1]

    # Fold eval-mode BatchNorm1d (running stats) + linear bias:
    #   bn(xW + b) = x(W*s) + ((b - mean)*s + beta),  s = gamma / sqrt(var+eps)
    # The multiplicative part goes into the weights (done once per parameter
    # set, in f32, before the bf16 cast); only the additive shift stays in the
    # kernel.
    s1 = (g1 / jnp.sqrt(v1 + eps)).astype(jnp.float32)
    t1 = ((b1 - m1) * s1 + be1).reshape(1, h1).astype(jnp.float32)
    s2 = (g2 / jnp.sqrt(v2 + eps)).astype(jnp.float32)
    t2 = ((b2 - m2) * s2 + be2).reshape(1, h2).astype(jnp.float32)

    w1c = (w1.astype(jnp.float32) * s1).astype(compute_dtype)
    w2c = (w2.astype(jnp.float32) * s2).astype(compute_dtype)
    w3c = w3.astype(compute_dtype)
    b3_2d = b3.reshape(1, c).astype(jnp.float32)

    itemsize = jnp.dtype(compute_dtype).itemsize
    row_align = 16 if itemsize == 2 else 8          # bf16 sublane packing
    if tile_rows is None:
        tile, b_p = _pick_rows_tile(b, fdim, itemsize, row_align,
                                    max_tile_rows=1024)
    else:
        tile = _round_up(int(tile_rows), row_align)
        b_p = _round_up(b, tile)
    n_tiles = b_p // tile

    feat_p = _pad_rows(feat.astype(compute_dtype), b_p)
    tgt_p = _pad_rows(target.astype(jnp.int32).reshape(b, 1), b_p, fill=-1)

    flops = 2 * b_p * (fdim * h1 + h1 * h2 + h2 * c) + 6 * b_p * (h1 + h2 + c)
    bytes_accessed = (itemsize * (b_p * fdim + fdim * h1 + h1 * h2 + h2 * c)
                      + 4 * (h1 + h2 + c + b_p * c + 2 * b_p))
    cost = pl.CostEstimate(flops=int(flops), transcendentals=int(b_p * (c + 1)),
                           bytes_accessed=int(bytes_accessed))

    row_map = lambda i: (i, 0)
    const_map = lambda i: (0, 0)

    def _call(single_buffer_weights):
        def const_spec(shape):
            # Resident blocks (constant index_map) are never re-fetched:
            # single-buffer them to halve their VMEM footprint (most valuable
            # under v7x's 64 MiB VMEM).
            if single_buffer_weights:
                return pl.BlockSpec(shape, const_map,
                                    pipeline_mode=pl.Buffered(1))
            return pl.BlockSpec(shape, const_map)

        return pl.pallas_call(
            _head_kernel,
            grid=(n_tiles,),
            in_specs=(
                pl.BlockSpec((tile, fdim), row_map),   # feature tile (bf16)
                const_spec((fdim, h1)),                # fc1*bn1 weight
                const_spec((1, h1)),                   # bn1 shift
                const_spec((h1, h2)),                  # fc2*bn2 weight
                const_spec((1, h2)),                   # bn2 shift
                const_spec((h2, c)),                   # fc3 weight
                const_spec((1, c)),                    # fc3 bias
                pl.BlockSpec((tile, 1), row_map),      # target tile
            ),
            out_specs=(
                pl.BlockSpec((tile, c), row_map),      # logits tile
                pl.BlockSpec((tile, 1), row_map),      # picked log-prob per row
            ),
            out_shape=(
                jax.ShapeDtypeStruct((b_p, c), jnp.float32),
                jax.ShapeDtypeStruct((b_p, 1), jnp.float32),
            ),
            compiler_params=pltpu.CompilerParams(
                dimension_semantics=("parallel",),      # no reduction axis
                vmem_limit_bytes=_VMEM_LIMIT_BYTES),
            cost_estimate=cost,
        )(feat_p, w1c, t1, w2c, t2, w3c, b3_2d, tgt_p)

    try:
        logits_p, picked = _call(single_buffer_weights=True)
    except Exception:
        # pipeline_mode=pl.Buffered(1) not supported by this jax/Mosaic build;
        # fall back to default double-buffered resident weights (still tiny
        # in bf16).
        logits_p, picked = _call(single_buffer_weights=False)

    logits = logits_p[:b]
    # Padded rows contributed exactly 0 (target = -1); mean over the true B.
    loss = -jnp.sum(picked) / b
    return logits, loss


# ---------------------------------------------------------------------------
# Standalone NLL-loss kernel (F.nll_loss, reduction='mean') for pre-computed
# log-probs: per-row masked gather in the kernel, tiny mean in the wrapper.
# Row blocks are contiguous in HBM; at segmentation scale the preferred path
# is to fuse the gather into the producing kernel (as the head above does).
def _nll_gather_kernel(pred_ref, tgt_ref, picked_ref):
    pred = pred_ref[...]                                   # (TR, C) log-probs
    tr, c = pred.shape
    col = jax.lax.broadcasted_iota(jnp.int32, (tr, c), 1)
    picked_ref[...] = jnp.sum(jnp.where(col == tgt_ref[...], pred, 0.0),
                              axis=-1, keepdims=True)


def nll_loss_pallas(pred, target, *, tile_rows=None):
    """F.nll_loss(pred, target), reduction='mean'; pred is (R, C) log-probs."""
    rows, c = pred.shape
    if tile_rows is None:
        tile, rows_p = _pick_rows_tile(rows, c, 4, 8, max_tile_rows=4096)
    else:
        tile = _round_up(int(tile_rows), 8)
        rows_p = _round_up(rows, tile)
    n_tiles = rows_p // tile

    pred_p = _pad_rows(pred.astype(jnp.float32), rows_p)
    tgt_p = _pad_rows(target.astype(jnp.int32).reshape(rows, 1), rows_p, fill=-1)

    cost = pl.CostEstimate(flops=int(3 * rows_p * c), transcendentals=0,
                           bytes_accessed=int(4 * (rows_p * c + 2 * rows_p)))
    picked = pl.pallas_call(
        _nll_gather_kernel,
        grid=(n_tiles,),
        in_specs=(
            pl.BlockSpec((tile, c), lambda i: (i, 0)),
            pl.BlockSpec((tile, 1), lambda i: (i, 0)),
        ),
        out_specs=pl.BlockSpec((tile, 1), lambda i: (i, 0)),
        out_shape=jax.ShapeDtypeStruct((rows_p, 1), jnp.float32),
        compiler_params=pltpu.CompilerParams(
            dimension_semantics=("parallel",),
            vmem_limit_bytes=_VMEM_LIMIT_BYTES),
        cost_estimate=cost,
    )(pred_p, tgt_p)
    return -jnp.sum(picked) / rows


if __name__ == "__main__":
    key = jax.random.PRNGKey(0)
    ks = jax.random.split(key, 18)

    # Pointnet head dims are fixed by the module: 1024 -> 512 -> 256 -> 10.
    # B=20 deliberately not a multiple of 16 to exercise the padding path.
    B, FDIM, H1, H2, C = 20, 1024, 512, 256, 10

    feat = jax.random.normal(ks[0], (B, FDIM), dtype=jnp.float32)

    def lin(kw, kb, fan_in, fan_out):
        w = jax.random.normal(kw, (fan_in, fan_out), jnp.float32) / jnp.sqrt(fan_in)
        bias = 0.05 * jax.random.normal(kb, (fan_out,), jnp.float32)
        return w, bias

    w1, b1 = lin(ks[1], ks[2], FDIM, H1)
    w2, b2 = lin(ks[3], ks[4], H1, H2)
    w3, b3 = lin(ks[5], ks[6], H2, C)

    def bn(kg, kb, km, kv, n):
        g = 1.0 + 0.1 * jax.random.normal(kg, (n,), jnp.float32)
        be = 0.1 * jax.random.normal(kb, (n,), jnp.float32)
        mu = 0.1 * jax.random.normal(km, (n,), jnp.float32)
        var = 0.5 + jax.random.uniform(kv, (n,), jnp.float32)
        return g, be, mu, var

    g1, be1, m1, v1 = bn(ks[7], ks[8], ks[9], ks[10], H1)
    g2, be2, m2, v2 = bn(ks[11], ks[12], ks[13], ks[14], H2)
    target = jax.random.randint(ks[15], (B,), 0, C, dtype=jnp.int32)

    params = {"fc1": (w1, b1, g1, be1, m1, v1),
              "fc2": (w2, b2, g2, be2, m2, v2),
              "fc3": (w3, b3)}

    # Default configuration: single fat grid step for this classification-sized
    # batch (bf16 operands, f32 accumulation).
    logits, loss = pointnet_head_forward(feat, params, target)
    logits, loss = jax.block_until_ready((logits, loss))

    # Pure-JAX f32 reference (same eval-mode forward semantics).
    eps = 1e-5
    hp = jax.lax.Precision.HIGHEST
    h = jnp.dot(feat, w1, precision=hp) + b1
    h = jax.nn.relu(g1 * (h - m1) / jnp.sqrt(v1 + eps) + be1)
    h = jnp.dot(h, w2, precision=hp) + b2
    h = jax.nn.relu(g2 * (h - m2) / jnp.sqrt(v2 + eps) + be2)
    ref_logits = jnp.dot(h, w3, precision=hp) + b3
    ref_logp = jax.nn.log_softmax(ref_logits, axis=-1)
    ref_loss = -jnp.mean(ref_logp[jnp.arange(B), target])

    # Tolerance covers bf16 matmul operands with f32 accumulation.
    assert logits.shape == (B, C)
    assert jnp.allclose(logits, ref_logits, atol=5e-2, rtol=5e-2), \
        float(jnp.max(jnp.abs(logits - ref_logits)))
    assert jnp.allclose(loss, ref_loss, atol=5e-2, rtol=5e-2), (float(loss),
                                                                float(ref_loss))

    # Multi-tile grid path (correctness coverage only: the default picker uses
    # one fat tile for batches this small). Must match the single-step result.
    logits_t, loss_t = jax.block_until_ready(
        pointnet_head_forward(feat, params, target, tile_rows=16))
    assert jnp.allclose(logits_t, logits, atol=1e-5, rtol=1e-5)
    assert jnp.allclose(loss_t, loss, atol=1e-5, rtol=1e-5)

    # Standalone NLL-loss kernel; B2=300 exercises non-multiple-of-8 padding.
    B2 = 300
    logp2 = jax.nn.log_softmax(
        jax.random.normal(ks[16], (B2, C), jnp.float32), axis=-1)
    tgt2 = jax.random.randint(ks[17], (B2,), 0, C, dtype=jnp.int32)
    loss_nll = jax.block_until_ready(nll_loss_pallas(logp2, tgt2))
    ref_nll = -jnp.mean(logp2[jnp.arange(B2), tgt2])
    assert jnp.allclose(loss_nll, ref_nll, atol=1e-5, rtol=1e-5), \
        (float(loss_nll), float(ref_nll))
    # Tiled NLL path.
    loss_nll_t = jax.block_until_ready(nll_loss_pallas(logp2, tgt2, tile_rows=64))
    assert jnp.allclose(loss_nll_t, ref_nll, atol=1e-5, rtol=1e-5)

    print("KERNEL_OK")
</pallas_src>

<mosaic_0001>
module attributes {stable_mosaic.version = 11 : i64} {
  func.func @_head_kernel(%arg0: i32, %arg1: memref<32x1024xbf16, #tpu.memory_space<vmem>>, %arg2: memref<1024x512xbf16, #tpu.memory_space<vmem>>, %arg3: memref<1x512xf32, #tpu.memory_space<vmem>>, %arg4: memref<512x256xbf16, #tpu.memory_space<vmem>>, %arg5: memref<1x256xf32, #tpu.memory_space<vmem>>, %arg6: memref<256x10xbf16, #tpu.memory_space<vmem>>, %arg7: memref<1x10xf32, #tpu.memory_space<vmem>>, %arg8: memref<32x1xi32, #tpu.memory_space<vmem>>, %arg9: memref<32x10xf32, #tpu.memory_space<vmem>>, %arg10: memref<32x1xf32, #tpu.memory_space<vmem>>) attributes {dimension_semantics = [#tpu.dimension_semantics<parallel>], iteration_bounds = array<i64: 1>, scalar_prefetch = 0 : i64, scratch_operands = 0 : i64, tpu.core_type = #tpu.core_type<tc>, window_params = [{transform_indices = @transform_0, window_bounds = array<i64: 32, 1024>}, {pipeline_mode = #tpu.pipeline_mode<synchronous>, transform_indices = @transform_1, window_bounds = array<i64: 1024, 512>}, {pipeline_mode = #tpu.pipeline_mode<synchronous>, transform_indices = @transform_2, window_bounds = array<i64: 1, 512>}, {pipeline_mode = #tpu.pipeline_mode<synchronous>, transform_indices = @transform_3, window_bounds = array<i64: 512, 256>}, {pipeline_mode = #tpu.pipeline_mode<synchronous>, transform_indices = @transform_4, window_bounds = array<i64: 1, 256>}, {pipeline_mode = #tpu.pipeline_mode<synchronous>, transform_indices = @transform_5, window_bounds = array<i64: 256, 10>}, {pipeline_mode = #tpu.pipeline_mode<synchronous>, transform_indices = @transform_6, window_bounds = array<i64: 1, 10>}, {transform_indices = @transform_7, window_bounds = array<i64: 32, 1>}, {transform_indices = @transform_8, window_bounds = array<i64: 32, 10>}, {transform_indices = @transform_9, window_bounds = array<i64: 32, 1>}]} {
    %c0 = arith.constant 0 : index
    %c0_0 = arith.constant 0 : index
    %0 = vector.load %arg1[%c0, %c0_0] : memref<32x1024xbf16, #tpu.memory_space<vmem>>, vector<32x1024xbf16>
    %c0_1 = arith.constant 0 : index
    %c0_2 = arith.constant 0 : index
    %1 = vector.load %arg2[%c0_1, %c0_2] : memref<1024x512xbf16, #tpu.memory_space<vmem>>, vector<1024x512xbf16>
    %cst = arith.constant dense<0.000000e+00> : vector<32x512xf32>
    %2 = tpu.matmul %0, %1, %cst {dimension_numbers = #tpu.dot_dimension_numbers<[1], [0], [0], [1], [0, 0, 1, 1], [], []>} : vector<32x1024xbf16>, vector<1024x512xbf16>, vector<32x512xf32> -> vector<32x512xf32>
    %c0_3 = arith.constant 0 : index
    %c0_4 = arith.constant 0 : index
    %3 = vector.load %arg3[%c0_3, %c0_4] : memref<1x512xf32, #tpu.memory_space<vmem>>, vector<1x512xf32>
    %4 = vector.broadcast %3 : vector<1x512xf32> to vector<32x512xf32>
    %5 = arith.addf %2, %4 : vector<32x512xf32>
    %cst_5 = arith.constant 0.000000e+00 : f32
    %6 = vector.broadcast %cst_5 : f32 to vector<32x512xf32>
    %7 = arith.maximumf %5, %6 : vector<32x512xf32>
    %8 = arith.truncf %7 : vector<32x512xf32> to vector<32x512xbf16>
    %c0_6 = arith.constant 0 : index
    %c0_7 = arith.constant 0 : index
    %9 = vector.load %arg4[%c0_6, %c0_7] : memref<512x256xbf16, #tpu.memory_space<vmem>>, vector<512x256xbf16>
    %cst_8 = arith.constant dense<0.000000e+00> : vector<32x256xf32>
    %10 = tpu.matmul %8, %9, %cst_8 {dimension_numbers = #tpu.dot_dimension_numbers<[1], [0], [0], [1], [0, 0, 1, 1], [], []>} : vector<32x512xbf16>, vector<512x256xbf16>, vector<32x256xf32> -> vector<32x256xf32>
    %c0_9 = arith.constant 0 : index
    %c0_10 = arith.constant 0 : index
    %11 = vector.load %arg5[%c0_9, %c0_10] : memref<1x256xf32, #tpu.memory_space<vmem>>, vector<1x256xf32>
    %12 = vector.broadcast %11 : vector<1x256xf32> to vector<32x256xf32>
    %13 = arith.addf %10, %12 : vector<32x256xf32>
    %cst_11 = arith.constant 0.000000e+00 : f32
    %14 = vector.broadcast %cst_11 : f32 to vector<32x256xf32>
    %15 = arith.maximumf %13, %14 : vector<32x256xf32>
    %16 = arith.truncf %15 : vector<32x256xf32> to vector<32x256xbf16>
    %c0_12 = arith.constant 0 : index
    %c0_13 = arith.constant 0 : index
    %17 = vector.load %arg6[%c0_12, %c0_13] : memref<256x10xbf16, #tpu.memory_space<vmem>>, vector<256x10xbf16>
    %cst_14 = arith.constant dense<0.000000e+00> : vector<32x10xf32>
    %18 = tpu.matmul %16, %17, %cst_14 {dimension_numbers = #tpu.dot_dimension_numbers<[1], [0], [0], [1], [0, 0, 1, 1], [], []>} : vector<32x256xbf16>, vector<256x10xbf16>, vector<32x10xf32> -> vector<32x10xf32>
    %c0_15 = arith.constant 0 : index
    %c0_16 = arith.constant 0 : index
    %19 = vector.load %arg7[%c0_15, %c0_16] : memref<1x10xf32, #tpu.memory_space<vmem>>, vector<1x10xf32>
    %20 = vector.broadcast %19 : vector<1x10xf32> to vector<32x10xf32>
    %21 = arith.addf %18, %20 : vector<32x10xf32>
    %c0_17 = arith.constant 0 : index
    %c0_18 = arith.constant 0 : index
    %22 = vector.load %arg9[%c0_17, %c0_18] : memref<32x10xf32, #tpu.memory_space<vmem>>, vector<32x10xf32>
    tpu.vector_store %arg9[%c0_17, %c0_18], %21 {strides = array<i32>} : memref<32x10xf32, #tpu.memory_space<vmem>>, vector<32x10xf32>,
    %cst_19 = arith.constant dense<0xFF800000> : vector<32xf32>
    %23 = vector.multi_reduction <maximumf>, %21, %cst_19 [1] : vector<32x10xf32> to vector<32xf32>
    %24 = vector.shape_cast %23 : vector<32xf32> to vector<32x1xf32>
    %25 = vector.broadcast %24 : vector<32x1xf32> to vector<32x10xf32>
    %26 = arith.subf %21, %25 : vector<32x10xf32>
    %27 = math.exp %26 : vector<32x10xf32>
    %cst_20 = arith.constant dense<0.000000e+00> : vector<32xf32>
    %28 = vector.multi_reduction <add>, %27, %cst_20 [1] : vector<32x10xf32> to vector<32xf32>
    %29 = vector.shape_cast %28 : vector<32xf32> to vector<32x1xf32>
    %30 = math.log %29 : vector<32x1xf32>
    %31 = arith.addf %24, %30 : vector<32x1xf32>
    %32 = vector.broadcast %31 : vector<32x1xf32> to vector<32x10xf32>
    %33 = arith.subf %21, %32 : vector<32x10xf32>
    %34 = tpu.iota {dimensions = array<i32: 1>} : vector<32x10xi32>
    %c0_21 = arith.constant 0 : index
    %c0_22 = arith.constant 0 : index
    %35 = vector.load %arg8[%c0_21, %c0_22] : memref<32x1xi32, #tpu.memory_space<vmem>>, vector<32x1xi32>
    %36 = vector.broadcast %35 : vector<32x1xi32> to vector<32x10xi32>
    %37 = arith.cmpi eq, %34, %36 : vector<32x10xi32>
    %cst_23 = arith.constant 0.000000e+00 : f32
    %38 = vector.broadcast %cst_23 : f32 to vector<32x10xf32>
    %39 = arith.select %37, %33, %38 : vector<32x10xi1>, vector<32x10xf32>
    %cst_24 = arith.constant dense<0.000000e+00> : vector<32xf32>
    %40 = vector.multi_reduction <add>, %39, %cst_24 [1] : vector<32x10xf32> to vector<32xf32>
    %41 = vector.shape_cast %40 : vector<32xf32> to vector<32x1xf32>
    %c0_25 = arith.constant 0 : index
    %c0_26 = arith.constant 0 : index
    %42 = vector.load %arg10[%c0_25, %c0_26] : memref<32x1xf32, #tpu.memory_space<vmem>>, vector<32x1xf32>
    tpu.vector_store %arg10[%c0_25, %c0_26], %41 {strides = array<i32>} : memref<32x1xf32, #tpu.memory_space<vmem>>, vector<32x1xf32>,
    return
  }
  func.func @transform_0(%arg0: i32) -> (i32, i32) {
    %c0_i32 = arith.constant 0 : i32
    %c0_i32_0 = arith.constant 0 : i32
    return %arg0, %c0_i32 : i32, i32
  }
  func.func @transform_1(%arg0: i32) -> (i32, i32) {
    %c0_i32 = arith.constant 0 : i32
    %c0_i32_0 = arith.constant 0 : i32
    %c0_i32_1 = arith.constant 0 : i32
    return %c0_i32, %c0_i32_0 : i32, i32
  }
  func.func @transform_2(%arg0: i32) -> (i32, i32) {
    %c0_i32 = arith.constant 0 : i32
    %c0_i32_0 = arith.constant 0 : i32
    %c0_i32_1 = arith.constant 0 : i32
    return %c0_i32, %c0_i32_0 : i32, i32
  }
  func.func @transform_3(%arg0: i32) -> (i32, i32) {
    %c0_i32 = arith.constant 0 : i32
    %c0_i32_0 = arith.constant 0 : i32
    %c0_i32_1 = arith.constant 0 : i32
    return %c0_i32, %c0_i32_0 : i32, i32
  }
  func.func @transform_4(%arg0: i32) -> (i32, i32) {
    %c0_i32 = arith.constant 0 : i32
    %c0_i32_0 = arith.constant 0 : i32
    %c0_i32_1 = arith.constant 0 : i32
    return %c0_i32, %c0_i32_0 : i32, i32
  }
  func.func @transform_5(%arg0: i32) -> (i32, i32) {
    %c0_i32 = arith.constant 0 : i32
    %c0_i32_0 = arith.constant 0 : i32
    %c0_i32_1 = arith.constant 0 : i32
    return %c0_i32, %c0_i32_0 : i32, i32
  }
  func.func @transform_6(%arg0: i32) -> (i32, i32) {
    %c0_i32 = arith.constant 0 : i32
    %c0_i32_0 = arith.constant 0 : i32
    %c0_i32_1 = arith.constant 0 : i32
    return %c0_i32, %c0_i32_0 : i32, i32
  }
  func.func @transform_7(%arg0: i32) -> (i32, i32) {
    %c0_i32 = arith.constant 0 : i32
    %c0_i32_0 = arith.constant 0 : i32
    return %arg0, %c0_i32 : i32, i32
  }
  func.func @transform_8(%arg0: i32) -> (i32, i32) {
    %c0_i32 = arith.constant 0 : i32
    %c0_i32_0 = arith.constant 0 : i32
    return %arg0, %c0_i32 : i32, i32
  }
  func.func @transform_9(%arg0: i32) -> (i32, i32) {
    %c0_i32 = arith.constant 0 : i32
    %c0_i32_0 = arith.constant 0 : i32
    return %arg0, %c0_i32 : i32, i32
  }
}

module attributes {stable_mosaic.version = 11 : i64} {
  func.func @_head_kernel(%arg0: i32, %arg1: memref<32x1024xbf16, #tpu.memory_space<vmem>>, %arg2: memref<1024x512xbf16, #tpu.memory_space<vmem>>, %arg3: memref<1x512xf32, #tpu.memory_space<vmem>>, %arg4: memref<512x256xbf16, #tpu.memory_space<vmem>>, %arg5: memref<1x256xf32, #tpu.memory_space<vmem>>, %arg6: memref<256x10xbf16, #tpu.memory_space<vmem>>, %arg7: memref<1x10xf32, #tpu.memory_space<vmem>>, %arg8: memref<32x1xi32, #tpu.memory_space<vmem>>, %arg9: memref<32x10xf32, #tpu.memory_space<vmem>>, %arg10: memref<32x1xf32, #tpu.memory_space<vmem>>) attributes {dimension_semantics = [#tpu.dimension_semantics<parallel>], iteration_bounds = array<i64: 1>, scalar_prefetch = 0 : i64, scratch_operands = 0 : i64, tpu.core_type = #tpu.core_type<tc>, window_params = [{transform_indices = @transform_0, window_bounds = array<i64: 32, 1024>}, {pipeline_mode = #tpu.pipeline_mode<synchronous>, transform_indices = @transform_1, window_bounds = array<i64: 1024, 512>}, {pipeline_mode = #tpu.pipeline_mode<synchronous>, transform_indices = @transform_2, window_bounds = array<i64: 1, 512>}, {pipeline_mode = #tpu.pipeline_mode<synchronous>, transform_indices = @transform_3, window_bounds = array<i64: 512, 256>}, {pipeline_mode = #tpu.pipeline_mode<synchronous>, transform_indices = @transform_4, window_bounds = array<i64: 1, 256>}, {pipeline_mode = #tpu.pipeline_mode<synchronous>, transform_indices = @transform_5, window_bounds = array<i64: 256, 10>}, {pipeline_mode = #tpu.pipeline_mode<synchronous>, transform_indices = @transform_6, window_bounds = array<i64: 1, 10>}, {transform_indices = @transform_7, window_bounds = array<i64: 32, 1>}, {transform_indices = @transform_8, window_bounds = array<i64: 32, 10>}, {transform_indices = @transform_9, window_bounds = array<i64: 32, 1>}]} {
    %c0 = arith.constant 0 : index
    %c0_0 = arith.constant 0 : index
    %0 = vector.load %arg1[%c0, %c0_0] : memref<32x1024xbf16, #tpu.memory_space<vmem>>, vector<32x1024xbf16>
    %c0_1 = arith.constant 0 : index
    %c0_2 = arith.constant 0 : index
    %1 = vector.load %arg2[%c0_1, %c0_2] : memref<1024x512xbf16, #tpu.memory_space<vmem>>, vector<1024x512xbf16>
    %cst = arith.constant dense<0.000000e+00> : vector<32x512xf32>
    %2 = tpu.matmul %0, %1, %cst {dimension_numbers = #tpu.dot_dimension_numbers<[1], [0], [0], [1], [0, 0, 1, 1], [], []>} : vector<32x1024xbf16>, vector<1024x512xbf16>, vector<32x512xf32> -> vector<32x512xf32>
    %c0_3 = arith.constant 0 : index
    %c0_4 = arith.constant 0 : index
    %3 = vector.load %arg3[%c0_3, %c0_4] : memref<1x512xf32, #tpu.memory_space<vmem>>, vector<1x512xf32>
    %4 = vector.broadcast %3 : vector<1x512xf32> to vector<32x512xf32>
    %5 = arith.addf %2, %4 : vector<32x512xf32>
    %cst_5 = arith.constant 0.000000e+00 : f32
    %6 = vector.broadcast %cst_5 : f32 to vector<32x512xf32>
    %7 = arith.maximumf %5, %6 : vector<32x512xf32>
    %8 = arith.truncf %7 : vector<32x512xf32> to vector<32x512xbf16>
    %c0_6 = arith.constant 0 : index
    %c0_7 = arith.constant 0 : index
    %9 = vector.load %arg4[%c0_6, %c0_7] : memref<512x256xbf16, #tpu.memory_space<vmem>>, vector<512x256xbf16>
    %cst_8 = arith.constant dense<0.000000e+00> : vector<32x256xf32>
    %10 = tpu.matmul %8, %9, %cst_8 {dimension_numbers = #tpu.dot_dimension_numbers<[1], [0], [0], [1], [0, 0, 1, 1], [], []>} : vector<32x512xbf16>, vector<512x256xbf16>, vector<32x256xf32> -> vector<32x256xf32>
    %c0_9 = arith.constant 0 : index
    %c0_10 = arith.constant 0 : index
    %11 = vector.load %arg5[%c0_9, %c0_10] : memref<1x256xf32, #tpu.memory_space<vmem>>, vector<1x256xf32>
    %12 = vector.broadcast %11 : vector<1x256xf32> to vector<32x256xf32>
    %13 = arith.addf %10, %12 : vector<32x256xf32>
    %cst_11 = arith.constant 0.000000e+00 : f32
    %14 = vector.broadcast %cst_11 : f32 to vector<32x256xf32>
    %15 = arith.maximumf %13, %14 : vector<32x256xf32>
    %16 = arith.truncf %15 : vector<32x256xf32> to vector<32x256xbf16>
    %c0_12 = arith.constant 0 : index
    %c0_13 = arith.constant 0 : index
    %17 = vector.load %arg6[%c0_12, %c0_13] : memref<256x10xbf16, #tpu.memory_space<vmem>>, vector<256x10xbf16>
    %cst_14 = arith.constant dense<0.000000e+00> : vector<32x10xf32>
    %18 = tpu.matmul %16, %17, %cst_14 {dimension_numbers = #tpu.dot_dimension_numbers<[1], [0], [0], [1], [0, 0, 1, 1], [], []>} : vector<32x256xbf16>, vector<256x10xbf16>, vector<32x10xf32> -> vector<32x10xf32>
    %c0_15 = arith.constant 0 : index
    %c0_16 = arith.constant 0 : index
    %19 = vector.load %arg7[%c0_15, %c0_16] : memref<1x10xf32, #tpu.memory_space<vmem>>, vector<1x10xf32>
    %20 = vector.broadcast %19 : vector<1x10xf32> to vector<32x10xf32>
    %21 = arith.addf %18, %20 : vector<32x10xf32>
    %c0_17 = arith.constant 0 : index
    %c0_18 = arith.constant 0 : index
    %22 = vector.load %arg9[%c0_17, %c0_18] : memref<32x10xf32, #tpu.memory_space<vmem>>, vector<32x10xf32>
    tpu.vector_store %arg9[%c0_17, %c0_18], %21 {strides = array<i32>} : memref<32x10xf32, #tpu.memory_space<vmem>>, vector<32x10xf32>,
    %cst_19 = arith.constant dense<0xFF800000> : vector<32xf32>
    %23 = vector.multi_reduction <maximumf>, %21, %cst_19 [1] : vector<32x10xf32> to vector<32xf32>
    %24 = vector.shape_cast %23 : vector<32xf32> to vector<32x1xf32>
    %25 = vector.broadcast %24 : vector<32x1xf32> to vector<32x10xf32>
    %26 = arith.subf %21, %25 : vector<32x10xf32>
    %27 = math.exp %26 : vector<32x10xf32>
    %cst_20 = arith.constant dense<0.000000e+00> : vector<32xf32>
    %28 = vector.multi_reduction <add>, %27, %cst_20 [1] : vector<32x10xf32> to vector<32xf32>
    %29 = vector.shape_cast %28 : vector<32xf32> to vector<32x1xf32>
    %30 = math.log %29 : vector<32x1xf32>
    %31 = arith.addf %24, %30 : vector<32x1xf32>
    %32 = vector.broadcast %31 : vector<32x1xf32> to vector<32x10xf32>
    %33 = arith.subf %21, %32 : vector<32x10xf32>
    %34 = tpu.iota {dimensions = array<i32: 1>} : vector<32x10xi32>
    %c0_21 = arith.constant 0 : index
    %c0_22 = arith.constant 0 : index
    %35 = vector.load %arg8[%c0_21, %c0_22] : memref<32x1xi32, #tpu.memory_space<vmem>>, vector<32x1xi32>
    %36 = vector.broadcast %35 : vector<32x1xi32> to vector<32x10xi32>
    %37 = arith.cmpi eq, %34, %36 : vector<32x10xi32>
    %cst_23 = arith.constant 0.000000e+00 : f32
    %38 = vector.broadcast %cst_23 : f32 to vector<32x10xf32>
    %39 = arith.select %37, %33, %38 : vector<32x10xi1>, vector<32x10xf32>
    %cst_24 = arith.constant dense<0.000000e+00> : vector<32xf32>
    %40 = vector.multi_reduction <add>, %39, %cst_24 [1] : vector<32x10xf32> to vector<32xf32>
    %41 = vector.shape_cast %40 : vector<32xf32> to vector<32x1xf32>
    %c0_25 = arith.constant 0 : index
    %c0_26 = arith.constant 0 : index
    %42 = vector.load %arg10[%c0_25, %c0_26] : memref<32x1xf32, #tpu.memory_space<vmem>>, vector<32x1xf32>
    tpu.vector_store %arg10[%c0_25, %c0_26], %41 {strides = array<i32>} : memref<32x1xf32, #tpu.memory_space<vmem>>, vector<32x1xf32>,
    return
  }
  func.func @transform_0(%arg0: i32) -> (i32, i32) {
    %c0_i32 = arith.constant 0 : i32
    %c0_i32_0 = arith.constant 0 : i32
    return %arg0, %c0_i32 : i32, i32
  }
  func.func @transform_1(%arg0: i32) -> (i32, i32) {
    %c0_i32 = arith.constant 0 : i32
    %c0_i32_0 = arith.constant 0 : i32
    %c0_i32_1 = arith.constant 0 : i32
    return %c0_i32, %c0_i32_0 : i32, i32
  }
  func.func @transform_2(%arg0: i32) -> (i32, i32) {
    %c0_i32 = arith.constant 0 : i32
    %c0_i32_0 = arith.constant 0 : i32
    %c0_i32_1 = arith.constant 0 : i32
    return %c0_i32, %c0_i32_0 : i32, i32
  }
  func.func @transform_3(%arg0: i32) -> (i32, i32) {
    %c0_i32 = arith.constant 0 : i32
    %c0_i32_0 = arith.constant 0 : i32
    %c0_i32_1 = arith.constant 0 : i32
    return %c0_i32, %c0_i32_0 : i32, i32
  }
  func.func @transform_4(%arg0: i32) -> (i32, i32) {
    %c0_i32 = arith.constant 0 : i32
    %c0_i32_0 = arith.constant 0 : i32
    %c0_i32_1 = arith.constant 0 : i32
    return %c0_i32, %c0_i32_0 : i32, i32
  }
  func.func @transform_5(%arg0: i32) -> (i32, i32) {
    %c0_i32 = arith.constant 0 : i32
    %c0_i32_0 = arith.constant 0 : i32
    %c0_i32_1 = arith.constant 0 : i32
    return %c0_i32, %c0_i32_0 : i32, i32
  }
  func.func @transform_6(%arg0: i32) -> (i32, i32) {
    %c0_i32 = arith.constant 0 : i32
    %c0_i32_0 = arith.constant 0 : i32
    %c0_i32_1 = arith.constant 0 : i32
    return %c0_i32, %c0_i32_0 : i32, i32
  }
  func.func @transform_7(%arg0: i32) -> (i32, i32) {
    %c0_i32 = arith.constant 0 : i32
    %c0_i32_0 = arith.constant 0 : i32
    return %arg0, %c0_i32 : i32, i32
  }
  func.func @transform_8(%arg0: i32) -> (i32, i32) {
    %c0_i32 = arith.constant 0 : i32
    %c0_i32_0 = arith.constant 0 : i32
    return %arg0, %c0_i32 : i32, i32
  }
  func.func @transform_9(%arg0: i32) -> (i32, i32) {
    %c0_i32 = arith.constant 0 : i32
    %c0_i32_0 = arith.constant 0 : i32
    return %arg0, %c0_i32 : i32, i32
  }
}

</mosaic_0001>

<llo_original>
// kernel: tpu_custom_call.1
$region0: #{tpu_custom_call.1}
  #allocation0 [shape = 'u32[]', space=smem, size = 0x4, offset = 0x4, fixed_abs, tag = 'smem constant byte address 0x4 - core index']
  #allocation1 [shape = 'u32[144,128]{1,0:T(1,128)}', space=vmem, size = 0x12000, scoped, tag = 'internal scratch']
  %s0 = inlined_call_operand.vmem [shape: bf16[32,1024], index: 0, kind: input, shape index: {}]
  %s1 = inlined_call_operand.hbm [shape: bf16[1024,512], index: 1, kind: input, shape index: {}]
  %s2 = inlined_call_operand.vmem [shape: f32[1,512], index: 2, kind: input, shape index: {}]
  %s3 = inlined_call_operand.hbm [shape: bf16[512,256], index: 3, kind: input, shape index: {}]
  %s4 = inlined_call_operand.vmem [shape: f32[1,256], index: 4, kind: input, shape index: {}]
  %s5 = inlined_call_operand.vmem [shape: bf16[256,10], index: 5, kind: input, shape index: {}]
  %s6 = inlined_call_operand.vmem [shape: f32[1,10], index: 6, kind: input, shape index: {}]
  %s7 = inlined_call_operand.vmem [shape: s32[32,1], index: 7, kind: input, shape index: {}]
  %s8 = inlined_call_operand.vmem [shape: f32[32,10], index: 8, kind: output, shape index: {0}]
  %s9 = inlined_call_operand.vmem [shape: f32[32,1], index: 9, kind: output, shape index: {1}]
  %10 = xla_tuple %s8, %s9
  %s11 = sld [smem:[#allocation0]]
  $region58: #{tpu_custom_call.1} parent=0
    _
  %s13 = ssub.s32 1, %s11
  %s14 = scalar_select 0, %s13, %s11
  $region1: #{tpu_custom_call.1} parent=0
    #allocation2 [shape = 'u8[1048576]{0}', space=vmem, size = 0x100000, scoped, tag = 'input window, operand 1, single buffered']
    #allocation3 [shape = 's32[1]{0}', space=sflag, size = 0x4, scoped, tag = 'scoped memory for tpu_custom_call.1']
    #allocation4 [shape = 'u8[262144]{0}', space=vmem, size = 0x40000, scoped, tag = 'input window, operand 3, single buffered']
    #allocation5 [shape = 's32[1]{0}', space=sflag, size = 0x4, scoped, tag = 'scoped memory for tpu_custom_call.1']
    %15 = vsyncpa [#allocation3], 0
    %16 = vsyncpa [#allocation5], 0
    // Predicated region
    $region2: #{tpu_custom_call.1} parent=1 // pred_check
      _
    $region3: #{tpu_custom_call.1} parent=1 // pred_check_branch
      %18 = sbr.rel (0) target = $region5
    $region4: #{tpu_custom_call.1} parent=1 // pred_region
      _
    $region5: #{tpu_custom_call.1} parent=1 // pred_fallthru
      _
    // Predicated region
    $region6: #{tpu_custom_call.1} parent=1 // pred_check
      _
    $region7: #{tpu_custom_call.1} parent=1 // pred_check_branch
      %20 = sbr.rel (0) target = $region9
    $region8: #{tpu_custom_call.1} parent=1 // pred_region
      %s22 = ssub.s32 32768, 32768
      %23 = vsyncadd [#allocation3], %s22
      %s24 = sshll.u32 [#allocation2], 4
      %s25 = int_to_ptr.vmem [resolvable:$true] %s24
      %30 = dma.hbm_to_vmem [thread:$0]  %s1, 32768, %s25, [#allocation3], 256, 256, 16
    $region9: #{tpu_custom_call.1} parent=1 // pred_fallthru
      _
    // Predicated region
    $region10: #{tpu_custom_call.1} parent=1 // pred_check
      _
    $region11: #{tpu_custom_call.1} parent=1 // pred_check_branch
      %32 = sbr.rel (0) target = $region13
    $region12: #{tpu_custom_call.1} parent=1 // pred_region
      _
    $region13: #{tpu_custom_call.1} parent=1 // pred_fallthru
      _
    // Predicated region
    $region14: #{tpu_custom_call.1} parent=1 // pred_check
      _
    $region15: #{tpu_custom_call.1} parent=1 // pred_check_branch
      %34 = sbr.rel (0) target = $region17
    $region16: #{tpu_custom_call.1} parent=1 // pred_region
      %s36 = ssub.s32 8192, 8192
      %37 = vsyncadd [#allocation5], %s36
      %s38 = sshll.u32 [#allocation4], 4
      %s39 = int_to_ptr.vmem [resolvable:$true] %s38
      %44 = dma.hbm_to_vmem [thread:$0]  %s3, 8192, %s39, [#allocation5], 128, 128, 8
    $region17: #{tpu_custom_call.1} parent=1 // pred_fallthru
      _
    // Predicated region
    $region18: #{tpu_custom_call.1} parent=1 // pred_check
      _
    $region19: #{tpu_custom_call.1} parent=1 // pred_check_branch
      %46 = sbr.rel (0) target = $region21
    $region20: #{tpu_custom_call.1} parent=1 // pred_region
      _
    $region21: #{tpu_custom_call.1} parent=1 // pred_fallthru
      _
    // Predicated region
    $region22: #{tpu_custom_call.1} parent=1 // pred_check
      _
    $region23: #{tpu_custom_call.1} parent=1 // pred_check_branch
      %48 = sbr.rel (0) target = $region25
    $region24: #{tpu_custom_call.1} parent=1 // pred_region
      _
    $region25: #{tpu_custom_call.1} parent=1 // pred_fallthru
      _
    // Predicated region
    $region26: #{tpu_custom_call.1} parent=1 // pred_check
      _
    $region27: #{tpu_custom_call.1} parent=1 // pred_check_branch
      %50 = sbr.rel (0) target = $region29
    $region28: #{tpu_custom_call.1} parent=1 // pred_region
      _
    $region29: #{tpu_custom_call.1} parent=1 // pred_fallthru
      _
    // Predicated region
    $region30: #{tpu_custom_call.1} parent=1 // pred_check
      _
    $region31: #{tpu_custom_call.1} parent=1 // pred_check_branch
      %52 = sbr.rel (0) target = $region33
    $region32: #{tpu_custom_call.1} parent=1 // pred_region
      _
    $region33: #{tpu_custom_call.1} parent=1 // pred_fallthru
      _
    // Predicated region
    $region34: #{tpu_custom_call.1} parent=1 // pred_check
      _
    $region35: #{tpu_custom_call.1} parent=1 // pred_check_branch
      %54 = sbr.rel (0) target = $region37
    $region36: #{tpu_custom_call.1} parent=1 // pred_region
      %55 = dma.done [#allocation3], 32768
    $region37: #{tpu_custom_call.1} parent=1 // pred_fallthru
      _
    // Predicated region
    $region38: #{tpu_custom_call.1} parent=1 // pred_check
      _
    $region39: #{tpu_custom_call.1} parent=1 // pred_check_branch
      %57 = sbr.rel (0) target = $region41
    $region40: #{tpu_custom_call.1} parent=1 // pred_region
      %58 = dma.done [#allocation5], 8192
    $region41: #{tpu_custom_call.1} parent=1 // pred_fallthru
      _
    %v60 = vld [vmem:[%s0] sm:$0xff]
    %v61 = vld [vmem:[%s0 + $0x8] sm:$0xff]
    %v62 = vld [vmem:[%s0 + $0x10] sm:$0xff]
    %v63 = vld [vmem:[%s0 + $0x18] sm:$0xff]
    %v64 = vld [vmem:[%s0 + $0x20] sm:$0xff]
    %v65 = vld [vmem:[%s0 + $0x28] sm:$0xff]
    %v66 = vld [vmem:[%s0 + $0x30] sm:$0xff]
    %v67 = vld [vmem:[%s0 + $0x38] sm:$0xff]
    %v68 = vld [vmem:[%s0 + $0x40] sm:$0xff]
    %v69 = vld [vmem:[%s0 + $0x48] sm:$0xff]
    %v70 = vld [vmem:[%s0 + $0x50] sm:$0xff]
    %v71 = vld [vmem:[%s0 + $0x58] sm:$0xff]
    %v72 = vld [vmem:[%s0 + $0x60] sm:$0xff]
    %v73 = vld [vmem:[%s0 + $0x68] sm:$0xff]
    %v74 = vld [vmem:[%s0 + $0x70] sm:$0xff]
    %v75 = vld [vmem:[%s0 + $0x78] sm:$0xff]
    %v76 = vld [vmem:[#allocation2] sm:$0xff]
    %v77 = vld [vmem:[#allocation2 + $0x8] sm:$0xff]
    %v78 = vld [vmem:[#allocation2 + $0x10] sm:$0xff]
    %v79 = vld [vmem:[#allocation2 + $0x18] sm:$0xff]
    %v80 = vld [vmem:[#allocation2 + $0x20] sm:$0xff]
    %v81 = vld [vmem:[#allocation2 + $0x28] sm:$0xff]
    %v82 = vld [vmem:[#allocation2 + $0x30] sm:$0xff]
    %v83 = vld [vmem:[#allocation2 + $0x38] sm:$0xff]
    %v84 = vld [vmem:[#allocation2 + $0x40] sm:$0xff]
    %v85 = vld [vmem:[#allocation2 + $0x48] sm:$0xff]
    %v86 = vld [vmem:[#allocation2 + $0x50] sm:$0xff]
    %v87 = vld [vmem:[#allocation2 + $0x58] sm:$0xff]
    %v88 = vld [vmem:[#allocation2 + $0x60] sm:$0xff]
    %v89 = vld [vmem:[#allocation2 + $0x68] sm:$0xff]
    %v90 = vld [vmem:[#allocation2 + $0x70] sm:$0xff]
    %v91 = vld [vmem:[#allocation2 + $0x78] sm:$0xff]
    %v92 = vld [vmem:[#allocation2 + $0x80] sm:$0xff]
    %v93 = vld [vmem:[#allocation2 + $0x88] sm:$0xff]
    %v94 = vld [vmem:[#allocation2 + $0x90] sm:$0xff]
    %v95 = vld [vmem:[#allocation2 + $0x98] sm:$0xff]
    %v96 = vld [vmem:[#allocation2 + $0xa0] sm:$0xff]
    %v97 = vld [vmem:[#allocation2 + $0xa8] sm:$0xff]
    %v98 = vld [vmem:[#allocation2 + $0xb0] sm:$0xff]
    %v99 = vld [vmem:[#allocation2 + $0xb8] sm:$0xff]
    %v100 = vld [vmem:[#allocation2 + $0xc0] sm:$0xff]
    %v101 = vld [vmem:[#allocation2 + $0xc8] sm:$0xff]
    %v102 = vld [vmem:[#allocation2 + $0xd0] sm:$0xff]
    %v103 = vld [vmem:[#allocation2 + $0xd8] sm:$0xff]
    %v104 = vld [vmem:[#allocation2 + $0xe0] sm:$0xff]
    %v105 = vld [vmem:[#allocation2 + $0xe8] sm:$0xff]
    %v106 = vld [vmem:[#allocation2 + $0xf0] sm:$0xff]
    %v107 = vld [vmem:[#allocation2 + $0xf8] sm:$0xff]
    %v108 = vld [vmem:[#allocation2 + $0x100] sm:$0xff]
    %v109 = vld [vmem:[#allocation2 + $0x108] sm:$0xff]
    %v110 = vld [vmem:[#allocation2 + $0x110] sm:$0xff]
    %v111 = vld [vmem:[#allocation2 + $0x118] sm:$0xff]
    %v112 = vld [vmem:[#allocation2 + $0x120] sm:$0xff]
    %v113 = vld [vmem:[#allocation2 + $0x128] sm:$0xff]
    %v114 = vld [vmem:[#allocation2 + $0x130] sm:$0xff]
    %v115 = vld [vmem:[#allocation2 + $0x138] sm:$0xff]
    %v116 = vld [vmem:[#allocation2 + $0x140] sm:$0xff]
    %v117 = vld [vmem:[#allocation2 + $0x148] sm:$0xff]
    %v118 = vld [vmem:[#allocation2 + $0x150] sm:$0xff]
    %v119 = vld [vmem:[#allocation2 + $0x158] sm:$0xff]
    %v120 = vld [vmem:[#allocation2 + $0x160] sm:$0xff]
    %v121 = vld [vmem:[#allocation2 + $0x168] sm:$0xff]
    %v122 = vld [vmem:[#allocation2 + $0x170] sm:$0xff]
    %v123 = vld [vmem:[#allocation2 + $0x178] sm:$0xff]
    %v124 = vld [vmem:[#allocation2 + $0x180] sm:$0xff]
    %v125 = vld [vmem:[#allocation2 + $0x188] sm:$0xff]
    %v126 = vld [vmem:[#allocation2 + $0x190] sm:$0xff]
    %v127 = vld [vmem:[#allocation2 + $0x198] sm:$0xff]
    %v128 = vld [vmem:[#allocation2 + $0x1a0] sm:$0xff]
    %v129 = vld [vmem:[#allocation2 + $0x1a8] sm:$0xff]
    %v130 = vld [vmem:[#allocation2 + $0x1b0] sm:$0xff]
    %v131 = vld [vmem:[#allocation2 + $0x1b8] sm:$0xff]
    %v132 = vld [vmem:[#allocation2 + $0x1c0] sm:$0xff]
    %v133 = vld [vmem:[#allocation2 + $0x1c8] sm:$0xff]
    %v134 = vld [vmem:[#allocation2 + $0x1d0] sm:$0xff]
    %v135 = vld [vmem:[#allocation2 + $0x1d8] sm:$0xff]
    %v136 = vld [vmem:[#allocation2 + $0x1e0] sm:$0xff]
    %v137 = vld [vmem:[#allocation2 + $0x1e8] sm:$0xff]
    %v138 = vld [vmem:[#allocation2 + $0x1f0] sm:$0xff]
    %v139 = vld [vmem:[#allocation2 + $0x1f8] sm:$0xff]
    %v140 = vld [vmem:[#allocation2 + $0x200] sm:$0xff]
    %v141 = vld [vmem:[#allocation2 + $0x208] sm:$0xff]
    %v142 = vld [vmem:[#allocation2 + $0x210] sm:$0xff]
    %v143 = vld [vmem:[#allocation2 + $0x218] sm:$0xff]
    %v144 = vld [vmem:[#allocation2 + $0x220] sm:$0xff]
    %v145 = vld [vmem:[#allocation2 + $0x228] sm:$0xff]
    %v146 = vld [vmem:[#allocation2 + $0x230] sm:$0xff]
    %v147 = vld [vmem:[#allocation2 + $0x238] sm:$0xff]
    %v148 = vld [vmem:[#allocation2 + $0x240] sm:$0xff]
    %v149 = vld [vmem:[#allocation2 + $0x248] sm:$0xff]
    %v150 = vld [vmem:[#allocation2 + $0x250] sm:$0xff]
    %v151 = vld [vmem:[#allocation2 + $0x258] sm:$0xff]
    %v152 = vld [vmem:[#allocation2 + $0x260] sm:$0xff]
    %v153 = vld [vmem:[#allocation2 + $0x268] sm:$0xff]
    %v154 = vld [vmem:[#allocation2 + $0x270] sm:$0xff]
    %v155 = vld [vmem:[#allocation2 + $0x278] sm:$0xff]
    %v156 = vld [vmem:[#allocation2 + $0x280] sm:$0xff]
    %v157 = vld [vmem:[#allocation2 + $0x288] sm:$0xff]
    %v158 = vld [vmem:[#allocation2 + $0x290] sm:$0xff]
    %v159 = vld [vmem:[#allocation2 + $0x298] sm:$0xff]
    %v160 = vld [vmem:[#allocation2 + $0x2a0] sm:$0xff]
    %v161 = vld [vmem:[#allocation2 + $0x2a8] sm:$0xff]
    %v162 = vld [vmem:[#allocation2 + $0x2b0] sm:$0xff]
    %v163 = vld [vmem:[#allocation2 + $0x2b8] sm:$0xff]
    %v164 = vld [vmem:[#allocation2 + $0x2c0] sm:$0xff]
    %v165 = vld [vmem:[#allocation2 + $0x2c8] sm:$0xff]
    %v166 = vld [vmem:[#allocation2 + $0x2d0] sm:$0xff]
    %v167 = vld [vmem:[#allocation2 + $0x2d8] sm:$0xff]
    %v168 = vld [vmem:[#allocation2 + $0x2e0] sm:$0xff]
    %v169 = vld [vmem:[#allocation2 + $0x2e8] sm:$0xff]
    %v170 = vld [vmem:[#allocation2 + $0x2f0] sm:$0xff]
    %v171 = vld [vmem:[#allocation2 + $0x2f8] sm:$0xff]
    %v172 = vld [vmem:[#allocation2 + $0x300] sm:$0xff]
    %v173 = vld [vmem:[#allocation2 + $0x308] sm:$0xff]
    %v174 = vld [vmem:[#allocation2 + $0x310] sm:$0xff]
    %v175 = vld [vmem:[#allocation2 + $0x318] sm:$0xff]
    %v176 = vld [vmem:[#allocation2 + $0x320] sm:$0xff]
    %v177 = vld [vmem:[#allocation2 + $0x328] sm:$0xff]
    %v178 = vld [vmem:[#allocation2 + $0x330] sm:$0xff]
    %v179 = vld [vmem:[#allocation2 + $0x338] sm:$0xff]
    %v180 = vld [vmem:[#allocation2 + $0x340] sm:$0xff]
    %v181 = vld [vmem:[#allocation2 + $0x348] sm:$0xff]
    %v182 = vld [vmem:[#allocation2 + $0x350] sm:$0xff]
    %v183 = vld [vmem:[#allocation2 + $0x358] sm:$0xff]
    %v184 = vld [vmem:[#allocation2 + $0x360] sm:$0xff]
    %v185 = vld [vmem:[#allocation2 + $0x368] sm:$0xff]
    %v186 = vld [vmem:[#allocation2 + $0x370] sm:$0xff]
    %v187 = vld [vmem:[#allocation2 + $0x378] sm:$0xff]
    %v188 = vld [vmem:[#allocation2 + $0x380] sm:$0xff]
    %v189 = vld [vmem:[#allocation2 + $0x388] sm:$0xff]
    %v190 = vld [vmem:[#allocation2 + $0x390] sm:$0xff]
    %v191 = vld [vmem:[#allocation2 + $0x398] sm:$0xff]
    %v192 = vld [vmem:[#allocation2 + $0x3a0] sm:$0xff]
    %v193 = vld [vmem:[#allocation2 + $0x3a8] sm:$0xff]
    %v194 = vld [vmem:[#allocation2 + $0x3b0] sm:$0xff]
    %v195 = vld [vmem:[#allocation2 + $0x3b8] sm:$0xff]
    %v196 = vld [vmem:[#allocation2 + $0x3c0] sm:$0xff]
    %v197 = vld [vmem:[#allocation2 + $0x3c8] sm:$0xff]
    %v198 = vld [vmem:[#allocation2 + $0x3d0] sm:$0xff]
    %v199 = vld [vmem:[#allocation2 + $0x3d8] sm:$0xff]
    %v200 = vld [vmem:[#allocation2 + $0x3e0] sm:$0xff]
    %v201 = vld [vmem:[#allocation2 + $0x3e8] sm:$0xff]
    %v202 = vld [vmem:[#allocation2 + $0x3f0] sm:$0xff]
    %v203 = vld [vmem:[#allocation2 + $0x3f8] sm:$0xff]
    %v204 = vld [vmem:[#allocation2 + $0x400] sm:$0xff]
    %v205 = vld [vmem:[#allocation2 + $0x408] sm:$0xff]
    %v206 = vld [vmem:[#allocation2 + $0x410] sm:$0xff]
    %v207 = vld [vmem:[#allocation2 + $0x418] sm:$0xff]
    %v208 = vld [vmem:[#allocation2 + $0x420] sm:$0xff]
    %v209 = vld [vmem:[#allocation2 + $0x428] sm:$0xff]
    %v210 = vld [vmem:[#allocation2 + $0x430] sm:$0xff]
    %v211 = vld [vmem:[#allocation2 + $0x438] sm:$0xff]
    %v212 = vld [vmem:[#allocation2 + $0x440] sm:$0xff]
    %v213 = vld [vmem:[#allocation2 + $0x448] sm:$0xff]
    %v214 = vld [vmem:[#allocation2 + $0x450] sm:$0xff]
    %v215 = vld [vmem:[#allocation2 + $0x458] sm:$0xff]
    %v216 = vld [vmem:[#allocation2 + $0x460] sm:$0xff]
    %v217 = vld [vmem:[#allocation2 + $0x468] sm:$0xff]
    %v218 = vld [vmem:[#allocation2 + $0x470] sm:$0xff]
    %v219 = vld [vmem:[#allocation2 + $0x478] sm:$0xff]
    %v220 = vld [vmem:[#allocation2 + $0x480] sm:$0xff]
    %v221 = vld [vmem:[#allocation2 + $0x488] sm:$0xff]
    %v222 = vld [vmem:[#allocation2 + $0x490] sm:$0xff]
    %v223 = vld [vmem:[#allocation2 + $0x498] sm:$0xff]
    %v224 = vld [vmem:[#allocation2 + $0x4a0] sm:$0xff]
    %v225 = vld [vmem:[#allocation2 + $0x4a8] sm:$0xff]
    %v226 = vld [vmem:[#allocation2 + $0x4b0] sm:$0xff]
    %v227 = vld [vmem:[#allocation2 + $0x4b8] sm:$0xff]
    %v228 = vld [vmem:[#allocation2 + $0x4c0] sm:$0xff]
    %v229 = vld [vmem:[#allocation2 + $0x4c8] sm:$0xff]
    %v230 = vld [vmem:[#allocation2 + $0x4d0] sm:$0xff]
    %v231 = vld [vmem:[#allocation2 + $0x4d8] sm:$0xff]
    %v232 = vld [vmem:[#allocation2 + $0x4e0] sm:$0xff]
    %v233 = vld [vmem:[#allocation2 + $0x4e8] sm:$0xff]
    %v234 = vld [vmem:[#allocation2 + $0x4f0] sm:$0xff]
    %v235 = vld [vmem:[#allocation2 + $0x4f8] sm:$0xff]
    %v236 = vld [vmem:[#allocation2 + $0x500] sm:$0xff]
    %v237 = vld [vmem:[#allocation2 + $0x508] sm:$0xff]
    %v238 = vld [vmem:[#allocation2 + $0x510] sm:$0xff]
    %v239 = vld [vmem:[#allocation2 + $0x518] sm:$0xff]
    %v240 = vld [vmem:[#allocation2 + $0x520] sm:$0xff]
    %v241 = vld [vmem:[#allocation2 + $0x528] sm:$0xff]
    %v242 = vld [vmem:[#allocation2 + $0x530] sm:$0xff]
    %v243 = vld [vmem:[#allocation2 + $0x538] sm:$0xff]
    %v244 = vld [vmem:[#allocation2 + $0x540] sm:$0xff]
    %v245 = vld [vmem:[#allocation2 + $0x548] sm:$0xff]
    %v246 = vld [vmem:[#allocation2 + $0x550] sm:$0xff]
    %v247 = vld [vmem:[#allocation2 + $0x558] sm:$0xff]
    %v248 = vld [vmem:[#allocation2 + $0x560] sm:$0xff]
    %v249 = vld [vmem:[#allocation2 + $0x568] sm:$0xff]
    %v250 = vld [vmem:[#allocation2 + $0x570] sm:$0xff]
    %v251 = vld [vmem:[#allocation2 + $0x578] sm:$0xff]
    %v252 = vld [vmem:[#allocation2 + $0x580] sm:$0xff]
    %v253 = vld [vmem:[#allocation2 + $0x588] sm:$0xff]
    %v254 = vld [vmem:[#allocation2 + $0x590] sm:$0xff]
    %v255 = vld [vmem:[#allocation2 + $0x598] sm:$0xff]
    %v256 = vld [vmem:[#allocation2 + $0x5a0] sm:$0xff]
    %v257 = vld [vmem:[#allocation2 + $0x5a8] sm:$0xff]
    %v258 = vld [vmem:[#allocation2 + $0x5b0] sm:$0xff]
    %v259 = vld [vmem:[#allocation2 + $0x5b8] sm:$0xff]
    %v260 = vld [vmem:[#allocation2 + $0x5c0] sm:$0xff]
    %v261 = vld [vmem:[#allocation2 + $0x5c8] sm:$0xff]
    %v262 = vld [vmem:[#allocation2 + $0x5d0] sm:$0xff]
    %v263 = vld [vmem:[#allocation2 + $0x5d8] sm:$0xff]
    %v264 = vld [vmem:[#allocation2 + $0x5e0] sm:$0xff]
    %v265 = vld [vmem:[#allocation2 + $0x5e8] sm:$0xff]
    %v266 = vld [vmem:[#allocation2 + $0x5f0] sm:$0xff]
    %v267 = vld [vmem:[#allocation2 + $0x5f8] sm:$0xff]
    %v268 = vld [vmem:[#allocation2 + $0x600] sm:$0xff]
    %v269 = vld [vmem:[#allocation2 + $0x608] sm:$0xff]
    %v270 = vld [vmem:[#allocation2 + $0x610] sm:$0xff]
    %v271 = vld [vmem:[#allocation2 + $0x618] sm:$0xff]
    %v272 = vld [vmem:[#allocation2 + $0x620] sm:$0xff]
    %v273 = vld [vmem:[#allocation2 + $0x628] sm:$0xff]
    %v274 = vld [vmem:[#allocation2 + $0x630] sm:$0xff]
    %v275 = vld [vmem:[#allocation2 + $0x638] sm:$0xff]
    %v276 = vld [vmem:[#allocation2 + $0x640] sm:$0xff]
    %v277 = vld [vmem:[#allocation2 + $0x648] sm:$0xff]
    %v278 = vld [vmem:[#allocation2 + $0x650] sm:$0xff]
    %v279 = vld [vmem:[#allocation2 + $0x658] sm:$0xff]
    %v280 = vld [vmem:[#allocation2 + $0x660] sm:$0xff]
    %v281 = vld [vmem:[#allocation2 + $0x668] sm:$0xff]
    %v282 = vld [vmem:[#allocation2 + $0x670] sm:$0xff]
    %v283 = vld [vmem:[#allocation2 + $0x678] sm:$0xff]
    %v284 = vld [vmem:[#allocation2 + $0x680] sm:$0xff]
    %v285 = vld [vmem:[#allocation2 + $0x688] sm:$0xff]
    %v286 = vld [vmem:[#allocation2 + $0x690] sm:$0xff]
    %v287 = vld [vmem:[#allocation2 + $0x698] sm:$0xff]
    %v288 = vld [vmem:[#allocation2 + $0x6a0] sm:$0xff]
    %v289 = vld [vmem:[#allocation2 + $0x6a8] sm:$0xff]
    %v290 = vld [vmem:[#allocation2 + $0x6b0] sm:$0xff]
    %v291 = vld [vmem:[#allocation2 + $0x6b8] sm:$0xff]
    %v292 = vld [vmem:[#allocation2 + $0x6c0] sm:$0xff]
    %v293 = vld [vmem:[#allocation2 + $0x6c8] sm:$0xff]
    %v294 = vld [vmem:[#allocation2 + $0x6d0] sm:$0xff]
    %v295 = vld [vmem:[#allocation2 + $0x6d8] sm:$0xff]
    %v296 = vld [vmem:[#allocation2 + $0x6e0] sm:$0xff]
    %v297 = vld [vmem:[#allocation2 + $0x6e8] sm:$0xff]
    %v298 = vld [vmem:[#allocation2 + $0x6f0] sm:$0xff]
    %v299 = vld [vmem:[#allocation2 + $0x6f8] sm:$0xff]
    %v300 = vld [vmem:[#allocation2 + $0x700] sm:$0xff]
    %v301 = vld [vmem:[#allocation2 + $0x708] sm:$0xff]
    %v302 = vld [vmem:[#allocation2 + $0x710] sm:$0xff]
    %v303 = vld [vmem:[#allocation2 + $0x718] sm:$0xff]
    %v304 = vld [vmem:[#allocation2 + $0x720] sm:$0xff]
    %v305 = vld [vmem:[#allocation2 + $0x728] sm:$0xff]
    %v306 = vld [vmem:[#allocation2 + $0x730] sm:$0xff]
    %v307 = vld [vmem:[#allocation2 + $0x738] sm:$0xff]
    %v308 = vld [vmem:[#allocation2 + $0x740] sm:$0xff]
    %v309 = vld [vmem:[#allocation2 + $0x748] sm:$0xff]
    %v310 = vld [vmem:[#allocation2 + $0x750] sm:$0xff]
    %v311 = vld [vmem:[#allocation2 + $0x758] sm:$0xff]
    %v312 = vld [vmem:[#allocation2 + $0x760] sm:$0xff]
    %v313 = vld [vmem:[#allocation2 + $0x768] sm:$0xff]
    %v314 = vld [vmem:[#allocation2 + $0x770] sm:$0xff]
    %v315 = vld [vmem:[#allocation2 + $0x778] sm:$0xff]
    %v316 = vld [vmem:[#allocation2 + $0x780] sm:$0xff]
    %v317 = vld [vmem:[#allocation2 + $0x788] sm:$0xff]
    %v318 = vld [vmem:[#allocation2 + $0x790] sm:$0xff]
    %v319 = vld [vmem:[#allocation2 + $0x798] sm:$0xff]
    %v320 = vld [vmem:[#allocation2 + $0x7a0] sm:$0xff]
    %v321 = vld [vmem:[#allocation2 + $0x7a8] sm:$0xff]
    %v322 = vld [vmem:[#allocation2 + $0x7b0] sm:$0xff]
    %v323 = vld [vmem:[#allocation2 + $0x7b8] sm:$0xff]
    %v324 = vld [vmem:[#allocation2 + $0x7c0] sm:$0xff]
    %v325 = vld [vmem:[#allocation2 + $0x7c8] sm:$0xff]
    %v326 = vld [vmem:[#allocation2 + $0x7d0] sm:$0xff]
    %v327 = vld [vmem:[#allocation2 + $0x7d8] sm:$0xff]
    %v328 = vld [vmem:[#allocation2 + $0x7e0] sm:$0xff]
    %v329 = vld [vmem:[#allocation2 + $0x7e8] sm:$0xff]
    %v330 = vld [vmem:[#allocation2 + $0x7f0] sm:$0xff]
    %v331 = vld [vmem:[#allocation2 + $0x7f8] sm:$0xff]
    %v332 = vld [vmem:[%s2] sm:$0xf]
    %v334 = vlaneseq
    %v335 = vshrl.u32 %v334, 7
    %v336 = vsub.s32 0, %v335
    %v337 = vrot.slane %v332, %v336
    %v338 = vlaneseq
    %v339 = vshrl.u32 %v338, 7
    %v340 = vsub.s32 1, %v339
    %v341 = vrot.slane %v332, %v340
    %v342 = vlaneseq
    %v343 = vshrl.u32 %v342, 7
    %v344 = vsub.s32 2, %v343
    %v345 = vrot.slane %v332, %v344
    %v346 = vlaneseq
    %v347 = vshrl.u32 %v346, 7
    %v348 = vsub.s32 3, %v347
    %v349 = vrot.slane %v332, %v348
    %v370 = vunpack.c.l.b16 %v60
    %v371 = vunpack.c.h.b16 %v60
    %v372 = vunpack.c.l.b16 %v61
    %v373 = vunpack.c.h.b16 %v61
    %v374 = vunpack.c.l.b16 %v62
    %v375 = vunpack.c.h.b16 %v62
    %v376 = vunpack.c.l.b16 %v63
    %v377 = vunpack.c.h.b16 %v63
    %v378 = vunpack.c.l.b16 %v64
    %v379 = vunpack.c.h.b16 %v64
    %v380 = vunpack.c.l.b16 %v65
    %v381 = vunpack.c.h.b16 %v65
    %v382 = vunpack.c.l.b16 %v66
    %v383 = vunpack.c.h.b16 %v66
    %v384 = vunpack.c.l.b16 %v67
    %v385 = vunpack.c.h.b16 %v67
    %v386 = vunpack.c.l.b16 %v68
    %v387 = vunpack.c.h.b16 %v68
    %v388 = vunpack.c.l.b16 %v69
    %v389 = vunpack.c.h.b16 %v69
    %v390 = vunpack.c.l.b16 %v70
    %v391 = vunpack.c.h.b16 %v70
    %v392 = vunpack.c.l.b16 %v71
    %v393 = vunpack.c.h.b16 %v71
    %v394 = vunpack.c.l.b16 %v72
    %v395 = vunpack.c.h.b16 %v72
    %v396 = vunpack.c.l.b16 %v73
    %v397 = vunpack.c.h.b16 %v73
    %v398 = vunpack.c.l.b16 %v74
    %v399 = vunpack.c.h.b16 %v74
    %v400 = vunpack.c.l.b16 %v75
    %v401 = vunpack.c.h.b16 %v75
    %v402 = vpack.c.b16 %v378, %v370
    %v403 = vpack.c.b16 %v379, %v371
    %v404 = vpack.c.b16 %v380, %v372
    %v405 = vpack.c.b16 %v381, %v373
    %v406 = vpack.c.b16 %v382, %v374
    %v407 = vpack.c.b16 %v383, %v375
    %v408 = vpack.c.b16 %v384, %v376
    %v409 = vpack.c.b16 %v385, %v377
    %v410 = vpack.c.b16 %v394, %v386
    %v411 = vpack.c.b16 %v395, %v387
    %v412 = vpack.c.b16 %v396, %v388
    %v413 = vpack.c.b16 %v397, %v389
    %v414 = vpack.c.b16 %v398, %v390
    %v415 = vpack.c.b16 %v399, %v391
    %v416 = vpack.c.b16 %v400, %v392
    %v417 = vpack.c.b16 %v401, %v393
    %v690 = vunpack.c.l.b16 %v76
    %v691 = vunpack.c.h.b16 %v76
    %v692 = vunpack.c.l.b16 %v77
    %v693 = vunpack.c.h.b16 %v77
    %v694 = vunpack.c.l.b16 %v78
    %v695 = vunpack.c.h.b16 %v78
    %v696 = vunpack.c.l.b16 %v79
    %v697 = vunpack.c.h.b16 %v79
    %v698 = vunpack.c.l.b16 %v80
    %v699 = vunpack.c.h.b16 %v80
    %v700 = vunpack.c.l.b16 %v81
    %v701 = vunpack.c.h.b16 %v81
    %v702 = vunpack.c.l.b16 %v82
    %v703 = vunpack.c.h.b16 %v82
    %v704 = vunpack.c.l.b16 %v83
    %v705 = vunpack.c.h.b16 %v83
    %v706 = vunpack.c.l.b16 %v84
    %v707 = vunpack.c.h.b16 %v84
    %v708 = vunpack.c.l.b16 %v85
    %v709 = vunpack.c.h.b16 %v85
    %v710 = vunpack.c.l.b16 %v86
    %v711 = vunpack.c.h.b16 %v86
    %v712 = vunpack.c.l.b16 %v87
    %v713 = vunpack.c.h.b16 %v87
    %v714 = vunpack.c.l.b16 %v88
    %v715 = vunpack.c.h.b16 %v88
    %v716 = vunpack.c.l.b16 %v89
    %v717 = vunpack.c.h.b16 %v89
    %v718 = vunpack.c.l.b16 %v90
    %v719 = vunpack.c.h.b16 %v90
    %v720 = vunpack.c.l.b16 %v91
    %v721 = vunpack.c.h.b16 %v91
    %v722 = vunpack.c.l.b16 %v92
    %v723 = vunpack.c.h.b16 %v92
    %v724 = vunpack.c.l.b16 %v93
    %v725 = vunpack.c.h.b16 %v93
    %v726 = vunpack.c.l.b16 %v94
    %v727 = vunpack.c.h.b16 %v94
    %v728 = vunpack.c.l.b16 %v95
    %v729 = vunpack.c.h.b16 %v95
    %v730 = vunpack.c.l.b16 %v96
    %v731 = vunpack.c.h.b16 %v96
    %v732 = vunpack.c.l.b16 %v97
    %v733 = vunpack.c.h.b16 %v97
    %v734 = vunpack.c.l.b16 %v98
    %v735 = vunpack.c.h.b16 %v98
    %v736 = vunpack.c.l.b16 %v99
    %v737 = vunpack.c.h.b16 %v99
    %v738 = vunpack.c.l.b16 %v100
    %v739 = vunpack.c.h.b16 %v100
    %v740 = vunpack.c.l.b16 %v101
    %v741 = vunpack.c.h.b16 %v101
    %v742 = vunpack.c.l.b16 %v102
    %v743 = vunpack.c.h.b16 %v102
    %v744 = vunpack.c.l.b16 %v103
    %v745 = vunpack.c.h.b16 %v103
    %v746 = vunpack.c.l.b16 %v104
    %v747 = vunpack.c.h.b16 %v104
    %v748 = vunpack.c.l.b16 %v105
    %v749 = vunpack.c.h.b16 %v105
    %v750 = vunpack.c.l.b16 %v106
    %v751 = vunpack.c.h.b16 %v106
    %v752 = vunpack.c.l.b16 %v107
    %v753 = vunpack.c.h.b16 %v107
    %v754 = vunpack.c.l.b16 %v108
    %v755 = vunpack.c.h.b16 %v108
    %v756 = vunpack.c.l.b16 %v109
    %v757 = vunpack.c.h.b16 %v109
    %v758 = vunpack.c.l.b16 %v110
    %v759 = vunpack.c.h.b16 %v110
    %v760 = vunpack.c.l.b16 %v111
    %v761 = vunpack.c.h.b16 %v111
    %v762 = vunpack.c.l.b16 %v112
    %v763 = vunpack.c.h.b16 %v112
    %v764 = vunpack.c.l.b16 %v113
    %v765 = vunpack.c.h.b16 %v113
    %v766 = vunpack.c.l.b16 %v114
    %v767 = vunpack.c.h.b16 %v114
    %v768 = vunpack.c.l.b16 %v115
    %v769 = vunpack.c.h.b16 %v115
    %v770 = vunpack.c.l.b16 %v116
    %v771 = vunpack.c.h.b16 %v116
    %v772 = vunpack.c.l.b16 %v117
    %v773 = vunpack.c.h.b16 %v117
    %v774 = vunpack.c.l.b16 %v118
    %v775 = vunpack.c.h.b16 %v118
    %v776 = vunpack.c.l.b16 %v119
    %v777 = vunpack.c.h.b16 %v119
    %v778 = vunpack.c.l.b16 %v120
    %v779 = vunpack.c.h.b16 %v120
    %v780 = vunpack.c.l.b16 %v121
    %v781 = vunpack.c.h.b16 %v121
    %v782 = vunpack.c.l.b16 %v122
    %v783 = vunpack.c.h.b16 %v122
    %v784 = vunpack.c.l.b16 %v123
    %v785 = vunpack.c.h.b16 %v123
    %v786 = vunpack.c.l.b16 %v124
    %v787 = vunpack.c.h.b16 %v124
    %v788 = vunpack.c.l.b16 %v125
    %v789 = vunpack.c.h.b16 %v125
    %v790 = vunpack.c.l.b16 %v126
    %v791 = vunpack.c.h.b16 %v126
    %v792 = vunpack.c.l.b16 %v127
    %v793 = vunpack.c.h.b16 %v127
    %v794 = vunpack.c.l.b16 %v128
    %v795 = vunpack.c.h.b16 %v128
    %v796 = vunpack.c.l.b16 %v129
    %v797 = vunpack.c.h.b16 %v129
    %v798 = vunpack.c.l.b16 %v130
    %v799 = vunpack.c.h.b16 %v130
    %v800 = vunpack.c.l.b16 %v131
    %v801 = vunpack.c.h.b16 %v131
    %v802 = vunpack.c.l.b16 %v132
    %v803 = vunpack.c.h.b16 %v132
    %v804 = vunpack.c.l.b16 %v133
    %v805 = vunpack.c.h.b16 %v133
    %v806 = vunpack.c.l.b16 %v134
    %v807 = vunpack.c.h.b16 %v134
    %v808 = vunpack.c.l.b16 %v135
    %v809 = vunpack.c.h.b16 %v135
    %v810 = vunpack.c.l.b16 %v136
    %v811 = vunpack.c.h.b16 %v136
    %v812 = vunpack.c.l.b16 %v137
    %v813 = vunpack.c.h.b16 %v137
    %v814 = vunpack.c.l.b16 %v138
    %v815 = vunpack.c.h.b16 %v138
    %v816 = vunpack.c.l.b16 %v139
    %v817 = vunpack.c.h.b16 %v139
    %v818 = vunpack.c.l.b16 %v140
    %v819 = vunpack.c.h.b16 %v140
    %v820 = vunpack.c.l.b16 %v141
    %v821 = vunpack.c.h.b16 %v141
    %v822 = vunpack.c.l.b16 %v142
    %v823 = vunpack.c.h.b16 %v142
    %v824 = vunpack.c.l.b16 %v143
    %v825 = vunpack.c.h.b16 %v143
    %v826 = vunpack.c.l.b16 %v144
    %v827 = vunpack.c.h.b16 %v144
    %v828 = vunpack.c.l.b16 %v145
    %v829 = vunpack.c.h.b16 %v145
    %v830 = vunpack.c.l.b16 %v146
    %v831 = vunpack.c.h.b16 %v146
    %v832 = vunpack.c.l.b16 %v147
    %v833 = vunpack.c.h.b16 %v147
    %v834 = vunpack.c.l.b16 %v148
    %v835 = vunpack.c.h.b16 %v148
    %v836 = vunpack.c.l.b16 %v149
    %v837 = vunpack.c.h.b16 %v149
    %v838 = vunpack.c.l.b16 %v150
    %v839 = vunpack.c.h.b16 %v150
    %v840 = vunpack.c.l.b16 %v151
    %v841 = vunpack.c.h.b16 %v151
    %v842 = vunpack.c.l.b16 %v152
    %v843 = vunpack.c.h.b16 %v152
    %v844 = vunpack.c.l.b16 %v153
    %v845 = vunpack.c.h.b16 %v153
    %v846 = vunpack.c.l.b16 %v154
    %v847 = vunpack.c.h.b16 %v154
    %v848 = vunpack.c.l.b16 %v155
    %v849 = vunpack.c.h.b16 %v155
    %v850 = vunpack.c.l.b16 %v156
    %v851 = vunpack.c.h.b16 %v156
    %v852 = vunpack.c.l.b16 %v157
    %v853 = vunpack.c.h.b16 %v157
    %v854 = vunpack.c.l.b16 %v158
    %v855 = vunpack.c.h.b16 %v158
    %v856 = vunpack.c.l.b16 %v159
    %v857 = vunpack.c.h.b16 %v159
    %v858 = vunpack.c.l.b16 %v160
    %v859 = vunpack.c.h.b16 %v160
    %v860 = vunpack.c.l.b16 %v161
    %v861 = vunpack.c.h.b16 %v161
    %v862 = vunpack.c.l.b16 %v162
    %v863 = vunpack.c.h.b16 %v162
    %v864 = vunpack.c.l.b16 %v163
    %v865 = vunpack.c.h.b16 %v163
    %v866 = vunpack.c.l.b16 %v164
    %v867 = vunpack.c.h.b16 %v164
    %v868 = vunpack.c.l.b16 %v165
    %v869 = vunpack.c.h.b16 %v165
    %v870 = vunpack.c.l.b16 %v166
    %v871 = vunpack.c.h.b16 %v166
    %v872 = vunpack.c.l.b16 %v167
    %v873 = vunpack.c.h.b16 %v167
    %v874 = vunpack.c.l.b16 %v168
    %v875 = vunpack.c.h.b16 %v168
    %v876 = vunpack.c.l.b16 %v169
    %v877 = vunpack.c.h.b16 %v169
    %v878 = vunpack.c.l.b16 %v170
    %v879 = vunpack.c.h.b16 %v170
    %v880 = vunpack.c.l.b16 %v171
    %v881 = vunpack.c.h.b16 %v171
    %v882 = vunpack.c.l.b16 %v172
    %v883 = vunpack.c.h.b16 %v172
    %v884 = vunpack.c.l.b16 %v173
    %v885 = vunpack.c.h.b16 %v173
    %v886 = vunpack.c.l.b16 %v174
    %v887 = vunpack.c.h.b16 %v174
    %v888 = vunpack.c.l.b16 %v175
    %v889 = vunpack.c.h.b16 %v175
    %v890 = vunpack.c.l.b16 %v176
    %v891 = vunpack.c.h.b16 %v176
    %v892 = vunpack.c.l.b16 %v177
    %v893 = vunpack.c.h.b16 %v177
    %v894 = vunpack.c.l.b16 %v178
    %v895 = vunpack.c.h.b16 %v178
    %v896 = vunpack.c.l.b16 %v179
    %v897 = vunpack.c.h.b16 %v179
    %v898 = vunpack.c.l.b16 %v180
    %v899 = vunpack.c.h.b16 %v180
    %v900 = vunpack.c.l.b16 %v181
    %v901 = vunpack.c.h.b16 %v181
    %v902 = vunpack.c.l.b16 %v182
    %v903 = vunpack.c.h.b16 %v182
    %v904 = vunpack.c.l.b16 %v183
    %v905 = vunpack.c.h.b16 %v183
    %v906 = vunpack.c.l.b16 %v184
    %v907 = vunpack.c.h.b16 %v184
    %v908 = vunpack.c.l.b16 %v185
    %v909 = vunpack.c.h.b16 %v185
    %v910 = vunpack.c.l.b16 %v186
    %v911 = vunpack.c.h.b16 %v186
    %v912 = vunpack.c.l.b16 %v187
    %v913 = vunpack.c.h.b16 %v187
    %v914 = vunpack.c.l.b16 %v188
    %v915 = vunpack.c.h.b16 %v188
    %v916 = vunpack.c.l.b16 %v189
    %v917 = vunpack.c.h.b16 %v189
    %v918 = vunpack.c.l.b16 %v190
    %v919 = vunpack.c.h.b16 %v190
    %v920 = vunpack.c.l.b16 %v191
    %v921 = vunpack.c.h.b16 %v191
    %v922 = vunpack.c.l.b16 %v192
    %v923 = vunpack.c.h.b16 %v192
    %v924 = vunpack.c.l.b16 %v193
    %v925 = vunpack.c.h.b16 %v193
    %v926 = vunpack.c.l.b16 %v194
    %v927 = vunpack.c.h.b16 %v194
    %v928 = vunpack.c.l.b16 %v195
    %v929 = vunpack.c.h.b16 %v195
    %v930 = vunpack.c.l.b16 %v196
    %v931 = vunpack.c.h.b16 %v196
    %v932 = vunpack.c.l.b16 %v197
    %v933 = vunpack.c.h.b16 %v197
    %v934 = vunpack.c.l.b16 %v198
    %v935 = vunpack.c.h.b16 %v198
    %v936 = vunpack.c.l.b16 %v199
    %v937 = vunpack.c.h.b16 %v199
    %v938 = vunpack.c.l.b16 %v200
    %v939 = vunpack.c.h.b16 %v200
    %v940 = vunpack.c.l.b16 %v201
    %v941 = vunpack.c.h.b16 %v201
    %v942 = vunpack.c.l.b16 %v202
    %v943 = vunpack.c.h.b16 %v202
    %v944 = vunpack.c.l.b16 %v203
    %v945 = vunpack.c.h.b16 %v203
    %v946 = vunpack.c.l.b16 %v204
    %v947 = vunpack.c.h.b16 %v204
    %v948 = vunpack.c.l.b16 %v205
    %v949 = vunpack.c.h.b16 %v205
    %v950 = vunpack.c.l.b16 %v206
    %v951 = vunpack.c.h.b16 %v206
    %v952 = vunpack.c.l.b16 %v207
    %v953 = vunpack.c.h.b16 %v207
    %v954 = vunpack.c.l.b16 %v208
    %v955 = vunpack.c.h.b16 %v208
    %v956 = vunpack.c.l.b16 %v209
    %v957 = vunpack.c.h.b16 %v209
    %v958 = vunpack.c.l.b16 %v210
    %v959 = vunpack.c.h.b16 %v210
    %v960 = vunpack.c.l.b16 %v211
    %v961 = vunpack.c.h.b16 %v211
    %v962 = vunpack.c.l.b16 %v212
    %v963 = vunpack.c.h.b16 %v212
    %v964 = vunpack.c.l.b16 %v213
    %v965 = vunpack.c.h.b16 %v213
    %v966 = vunpack.c.l.b16 %v214
    %v967 = vunpack.c.h.b16 %v214
    %v968 = vunpack.c.l.b16 %v215
    %v969 = vunpack.c.h.b16 %v215
    %v970 = vunpack.c.l.b16 %v216
    %v971 = vunpack.c.h.b16 %v216
    %v972 = vunpack.c.l.b16 %v217
    %v973 = vunpack.c.h.b16 %v217
    %v974 = vunpack.c.l.b16 %v218
    %v975 = vunpack.c.h.b16 %v218
    %v976 = vunpack.c.l.b16 %v219
    %v977 = vunpack.c.h.b16 %v219
    %v978 = vunpack.c.l.b16 %v220
    %v979 = vunpack.c.h.b16 %v220
    %v980 = vunpack.c.l.b16 %v221
    %v981 = vunpack.c.h.b16 %v221
    %v982 = vunpack.c.l.b16 %v222
    %v983 = vunpack.c.h.b16 %v222
    %v984 = vunpack.c.l.b16 %v223
    %v985 = vunpack.c.h.b16 %v223
    %v986 = vunpack.c.l.b16 %v224
    %v987 = vunpack.c.h.b16 %v224
    %v988 = vunpack.c.l.b16 %v225
    %v989 = vunpack.c.h.b16 %v225
    %v990 = vunpack.c.l.b16 %v226
    %v991 = vunpack.c.h.b16 %v226
    %v992 = vunpack.c.l.b16 %v227
    %v993 = vunpack.c.h.b16 %v227
    %v994 = vunpack.c.l.b16 %v228
    %v995 = vunpack.c.h.b16 %v228
    %v996 = vunpack.c.l.b16 %v229
    %v997 = vunpack.c.h.b16 %v229
    %v998 = vunpack.c.l.b16 %v230
    %v999 = vunpack.c.h.b16 %v230
    %v1000 = vunpack.c.l.b16 %v231
    %v1001 = vunpack.c.h.b16 %v231
    %v1002 = vunpack.c.l.b16 %v232
    %v1003 = vunpack.c.h.b16 %v232
    %v1004 = vunpack.c.l.b16 %v233
    %v1005 = vunpack.c.h.b16 %v233
    %v1006 = vunpack.c.l.b16 %v234
    %v1007 = vunpack.c.h.b16 %v234
    %v1008 = vunpack.c.l.b16 %v235
    %v1009 = vunpack.c.h.b16 %v235
    %v1010 = vunpack.c.l.b16 %v236
    %v1011 = vunpack.c.h.b16 %v236
    %v1012 = vunpack.c.l.b16 %v237
    %v1013 = vunpack.c.h.b16 %v237
    %v1014 = vunpack.c.l.b16 %v238
    %v1015 = vunpack.c.h.b16 %v238
    %v1016 = vunpack.c.l.b16 %v239
    %v1017 = vunpack.c.h.b16 %v239
    %v1018 = vunpack.c.l.b16 %v240
    %v1019 = vunpack.c.h.b16 %v240
    %v1020 = vunpack.c.l.b16 %v241
    %v1021 = vunpack.c.h.b16 %v241
    %v1022 = vunpack.c.l.b16 %v242
    %v1023 = vunpack.c.h.b16 %v242
    %v1024 = vunpack.c.l.b16 %v243
    %v1025 = vunpack.c.h.b16 %v243
    %v1026 = vunpack.c.l.b16 %v244
    %v1027 = vunpack.c.h.b16 %v244
    %v1028 = vunpack.c.l.b16 %v245
    %v1029 = vunpack.c.h.b16 %v245
    %v1030 = vunpack.c.l.b16 %v246
    %v1031 = vunpack.c.h.b16 %v246
    %v1032 = vunpack.c.l.b16 %v247
    %v1033 = vunpack.c.h.b16 %v247
    %v1034 = vunpack.c.l.b16 %v248
    %v1035 = vunpack.c.h.b16 %v248
    %v1036 = vunpack.c.l.b16 %v249
    %v1037 = vunpack.c.h.b16 %v249
    %v1038 = vunpack.c.l.b16 %v250
    %v1039 = vunpack.c.h.b16 %v250
    %v1040 = vunpack.c.l.b16 %v251
    %v1041 = vunpack.c.h.b16 %v251
    %v1042 = vunpack.c.l.b16 %v252
    %v1043 = vunpack.c.h.b16 %v252
    %v1044 = vunpack.c.l.b16 %v253
    %v1045 = vunpack.c.h.b16 %v253
    %v1046 = vunpack.c.l.b16 %v254
    %v1047 = vunpack.c.h.b16 %v254
    %v1048 = vunpack.c.l.b16 %v255
    %v1049 = vunpack.c.h.b16 %v255
    %v1050 = vunpack.c.l.b16 %v256
    %v1051 = vunpack.c.h.b16 %v256
    %v1052 = vunpack.c.l.b16 %v257
    %v1053 = vunpack.c.h.b16 %v257
    %v1054 = vunpack.c.l.b16 %v258
    %v1055 = vunpack.c.h.b16 %v258
    %v1056 = vunpack.c.l.b16 %v259
    %v1057 = vunpack.c.h.b16 %v259
    %v1058 = vunpack.c.l.b16 %v260
    %v1059 = vunpack.c.h.b16 %v260
    %v1060 = vunpack.c.l.b16 %v261
    %v1061 = vunpack.c.h.b16 %v261
    %v1062 = vunpack.c.l.b16 %v262
    %v1063 = vunpack.c.h.b16 %v262
    %v1064 = vunpack.c.l.b16 %v263
    %v1065 = vunpack.c.h.b16 %v263
    %v1066 = vunpack.c.l.b16 %v264
    %v1067 = vunpack.c.h.b16 %v264
    %v1068 = vunpack.c.l.b16 %v265
    %v1069 = vunpack.c.h.b16 %v265
    %v1070 = vunpack.c.l.b16 %v266
    %v1071 = vunpack.c.h.b16 %v266
    %v1072 = vunpack.c.l.b16 %v267
    %v1073 = vunpack.c.h.b16 %v267
    %v1074 = vunpack.c.l.b16 %v268
    %v1075 = vunpack.c.h.b16 %v268
    %v1076 = vunpack.c.l.b16 %v269
    %v1077 = vunpack.c.h.b16 %v269
    %v1078 = vunpack.c.l.b16 %v270
    %v1079 = vunpack.c.h.b16 %v270
    %v1080 = vunpack.c.l.b16 %v271
    %v1081 = vunpack.c.h.b16 %v271
    %v1082 = vunpack.c.l.b16 %v272
    %v1083 = vunpack.c.h.b16 %v272
    %v1084 = vunpack.c.l.b16 %v273
    %v1085 = vunpack.c.h.b16 %v273
    %v1086 = vunpack.c.l.b16 %v274
    %v1087 = vunpack.c.h.b16 %v274
    %v1088 = vunpack.c.l.b16 %v275
    %v1089 = vunpack.c.h.b16 %v275
    %v1090 = vunpack.c.l.b16 %v276
    %v1091 = vunpack.c.h.b16 %v276
    %v1092 = vunpack.c.l.b16 %v277
    %v1093 = vunpack.c.h.b16 %v277
    %v1094 = vunpack.c.l.b16 %v278
    %v1095 = vunpack.c.h.b16 %v278
    %v1096 = vunpack.c.l.b16 %v279
    %v1097 = vunpack.c.h.b16 %v279
    %v1098 = vunpack.c.l.b16 %v280
    %v1099 = vunpack.c.h.b16 %v280
    %v1100 = vunpack.c.l.b16 %v281
    %v1101 = vunpack.c.h.b16 %v281
    %v1102 = vunpack.c.l.b16 %v282
    %v1103 = vunpack.c.h.b16 %v282
    %v1104 = vunpack.c.l.b16 %v283
    %v1105 = vunpack.c.h.b16 %v283
    %v1106 = vunpack.c.l.b16 %v284
    %v1107 = vunpack.c.h.b16 %v284
    %v1108 = vunpack.c.l.b16 %v285
    %v1109 = vunpack.c.h.b16 %v285
    %v1110 = vunpack.c.l.b16 %v286
    %v1111 = vunpack.c.h.b16 %v286
    %v1112 = vunpack.c.l.b16 %v287
    %v1113 = vunpack.c.h.b16 %v287
    %v1114 = vunpack.c.l.b16 %v288
    %v1115 = vunpack.c.h.b16 %v288
    %v1116 = vunpack.c.l.b16 %v289
    %v1117 = vunpack.c.h.b16 %v289
    %v1118 = vunpack.c.l.b16 %v290
    %v1119 = vunpack.c.h.b16 %v290
    %v1120 = vunpack.c.l.b16 %v291
    %v1121 = vunpack.c.h.b16 %v291
    %v1122 = vunpack.c.l.b16 %v292
    %v1123 = vunpack.c.h.b16 %v292
    %v1124 = vunpack.c.l.b16 %v293
    %v1125 = vunpack.c.h.b16 %v293
    %v1126 = vunpack.c.l.b16 %v294
    %v1127 = vunpack.c.h.b16 %v294
    %v1128 = vunpack.c.l.b16 %v295
    %v1129 = vunpack.c.h.b16 %v295
    %v1130 = vunpack.c.l.b16 %v296
    %v1131 = vunpack.c.h.b16 %v296
    %v1132 = vunpack.c.l.b16 %v297
    %v1133 = vunpack.c.h.b16 %v297
    %v1134 = vunpack.c.l.b16 %v298
    %v1135 = vunpack.c.h.b16 %v298
    %v1136 = vunpack.c.l.b16 %v299
    %v1137 = vunpack.c.h.b16 %v299
    %v1138 = vunpack.c.l.b16 %v300
    %v1139 = vunpack.c.h.b16 %v300
    %v1140 = vunpack.c.l.b16 %v301
    %v1141 = vunpack.c.h.b16 %v301
    %v1142 = vunpack.c.l.b16 %v302
    %v1143 = vunpack.c.h.b16 %v302
    %v1144 = vunpack.c.l.b16 %v303
    %v1145 = vunpack.c.h.b16 %v303
    %v1146 = vunpack.c.l.b16 %v304
    %v1147 = vunpack.c.h.b16 %v304
    %v1148 = vunpack.c.l.b16 %v305
    %v1149 = vunpack.c.h.b16 %v305
    %v1150 = vunpack.c.l.b16 %v306
    %v1151 = vunpack.c.h.b16 %v306
    %v1152 = vunpack.c.l.b16 %v307
    %v1153 = vunpack.c.h.b16 %v307
    %v1154 = vunpack.c.l.b16 %v308
    %v1155 = vunpack.c.h.b16 %v308
    %v1156 = vunpack.c.l.b16 %v309
    %v1157 = vunpack.c.h.b16 %v309
    %v1158 = vunpack.c.l.b16 %v310
    %v1159 = vunpack.c.h.b16 %v310
    %v1160 = vunpack.c.l.b16 %v311
    %v1161 = vunpack.c.h.b16 %v311
    %v1162 = vunpack.c.l.b16 %v312
    %v1163 = vunpack.c.h.b16 %v312
    %v1164 = vunpack.c.l.b16 %v313
    %v1165 = vunpack.c.h.b16 %v313
    %v1166 = vunpack.c.l.b16 %v314
    %v1167 = vunpack.c.h.b16 %v314
    %v1168 = vunpack.c.l.b16 %v315
    %v1169 = vunpack.c.h.b16 %v315
    %v1170 = vunpack.c.l.b16 %v316
    %v1171 = vunpack.c.h.b16 %v316
    %v1172 = vunpack.c.l.b16 %v317
    %v1173 = vunpack.c.h.b16 %v317
    %v1174 = vunpack.c.l.b16 %v318
    %v1175 = vunpack.c.h.b16 %v318
    %v1176 = vunpack.c.l.b16 %v319
    %v1177 = vunpack.c.h.b16 %v319
    %v1178 = vunpack.c.l.b16 %v320
    %v1179 = vunpack.c.h.b16 %v320
    %v1180 = vunpack.c.l.b16 %v321
    %v1181 = vunpack.c.h.b16 %v321
    %v1182 = vunpack.c.l.b16 %v322
    %v1183 = vunpack.c.h.b16 %v322
    %v1184 = vunpack.c.l.b16 %v323
    %v1185 = vunpack.c.h.b16 %v323
    %v1186 = vunpack.c.l.b16 %v324
    %v1187 = vunpack.c.h.b16 %v324
    %v1188 = vunpack.c.l.b16 %v325
    %v1189 = vunpack.c.h.b16 %v325
    %v1190 = vunpack.c.l.b16 %v326
    %v1191 = vunpack.c.h.b16 %v326
    %v1192 = vunpack.c.l.b16 %v327
    %v1193 = vunpack.c.h.b16 %v327
    %v1194 = vunpack.c.l.b16 %v328
    %v1195 = vunpack.c.h.b16 %v328
    %v1196 = vunpack.c.l.b16 %v329
    %v1197 = vunpack.c.h.b16 %v329
    %v1198 = vunpack.c.l.b16 %v330
    %v1199 = vunpack.c.h.b16 %v330
    %v1200 = vunpack.c.l.b16 %v331
    %v1201 = vunpack.c.h.b16 %v331
    %v1202 = vpack.c.b16 %v694, %v690
    %v1203 = vpack.c.b16 %v695, %v691
    %v1204 = vpack.c.b16 %v696, %v692
    %v1205 = vpack.c.b16 %v697, %v693
    %v1206 = vpack.c.b16 %v702, %v698
    %v1207 = vpack.c.b16 %v703, %v699
    %v1208 = vpack.c.b16 %v704, %v700
    %v1209 = vpack.c.b16 %v705, %v701
    %v1210 = vpack.c.b16 %v710, %v706
    %v1211 = vpack.c.b16 %v711, %v707
    %v1212 = vpack.c.b16 %v712, %v708
    %v1213 = vpack.c.b16 %v713, %v709
    %v1214 = vpack.c.b16 %v718, %v714
    %v1215 = vpack.c.b16 %v719, %v715
    %v1216 = vpack.c.b16 %v720, %v716
    %v1217 = vpack.c.b16 %v721, %v717
    %v1218 = vpack.c.b16 %v726, %v722
    %v1219 = vpack.c.b16 %v727, %v723
    %v1220 = vpack.c.b16 %v728, %v724
    %v1221 = vpack.c.b16 %v729, %v725
    %v1222 = vpack.c.b16 %v734, %v730
    %v1223 = vpack.c.b16 %v735, %v731
    %v1224 = vpack.c.b16 %v736, %v732
    %v1225 = vpack.c.b16 %v737, %v733
    %v1226 = vpack.c.b16 %v742, %v738
    %v1227 = vpack.c.b16 %v743, %v739
    %v1228 = vpack.c.b16 %v744, %v740
    %v1229 = vpack.c.b16 %v745, %v741
    %v1230 = vpack.c.b16 %v750, %v746
    %v1231 = vpack.c.b16 %v751, %v747
    %v1232 = vpack.c.b16 %v752, %v748
    %v1233 = vpack.c.b16 %v753, %v749
    %v1234 = vpack.c.b16 %v758, %v754
    %v1235 = vpack.c.b16 %v759, %v755
    %v1236 = vpack.c.b16 %v760, %v756
    %v1237 = vpack.c.b16 %v761, %v757
    %v1238 = vpack.c.b16 %v766, %v762
    %v1239 = vpack.c.b16 %v767, %v763
    %v1240 = vpack.c.b16 %v768, %v764
    %v1241 = vpack.c.b16 %v769, %v765
    %v1242 = vpack.c.b16 %v774, %v770
    %v1243 = vpack.c.b16 %v775, %v771
    %v1244 = vpack.c.b16 %v776, %v772
    %v1245 = vpack.c.b16 %v777, %v773
    %v1246 = vpack.c.b16 %v782, %v778
    %v1247 = vpack.c.b16 %v783, %v779
    %v1248 = vpack.c.b16 %v784, %v780
    %v1249 = vpack.c.b16 %v785, %v781
    %v1250 = vpack.c.b16 %v790, %v786
    %v1251 = vpack.c.b16 %v791, %v787
    %v1252 = vpack.c.b16 %v792, %v788
    %v1253 = vpack.c.b16 %v793, %v789
    %v1254 = vpack.c.b16 %v798, %v794
    %v1255 = vpack.c.b16 %v799, %v795
    %v1256 = vpack.c.b16 %v800, %v796
    %v1257 = vpack.c.b16 %v801, %v797
    %v1258 = vpack.c.b16 %v806, %v802
    %v1259 = vpack.c.b16 %v807, %v803
    %v1260 = vpack.c.b16 %v808, %v804
    %v1261 = vpack.c.b16 %v809, %v805
    %v1262 = vpack.c.b16 %v814, %v810
    %v1263 = vpack.c.b16 %v815, %v811
    %v1264 = vpack.c.b16 %v816, %v812
    %v1265 = vpack.c.b16 %v817, %v813
    %v1266 = vpack.c.b16 %v822, %v818
    %v1267 = vpack.c.b16 %v823, %v819
    %v1268 = vpack.c.b16 %v824, %v820
    %v1269 = vpack.c.b16 %v825, %v821
    %v1270 = vpack.c.b16 %v830, %v826
    %v1271 = vpack.c.b16 %v831, %v827
    %v1272 = vpack.c.b16 %v832, %v828
    %v1273 = vpack.c.b16 %v833, %v829
    %v1274 = vpack.c.b16 %v838, %v834
    %v1275 = vpack.c.b16 %v839, %v835
    %v1276 = vpack.c.b16 %v840, %v836
    %v1277 = vpack.c.b16 %v841, %v837
    %v1278 = vpack.c.b16 %v846, %v842
    %v1279 = vpack.c.b16 %v847, %v843
    %v1280 = vpack.c.b16 %v848, %v844
    %v1281 = vpack.c.b16 %v849, %v845
    %v1282 = vpack.c.b16 %v854, %v850
    %v1283 = vpack.c.b16 %v855, %v851
    %v1284 = vpack.c.b16 %v856, %v852
    %v1285 = vpack.c.b16 %v857, %v853
    %v1286 = vpack.c.b16 %v862, %v858
    %v1287 = vpack.c.b16 %v863, %v859
    %v1288 = vpack.c.b16 %v864, %v860
    %v1289 = vpack.c.b16 %v865, %v861
    %v1290 = vpack.c.b16 %v870, %v866
    %v1291 = vpack.c.b16 %v871, %v867
    %v1292 = vpack.c.b16 %v872, %v868
    %v1293 = vpack.c.b16 %v873, %v869
    %v1294 = vpack.c.b16 %v878, %v874
    %v1295 = vpack.c.b16 %v879, %v875
    %v1296 = vpack.c.b16 %v880, %v876
    %v1297 = vpack.c.b16 %v881, %v877
    %v1298 = vpack.c.b16 %v886, %v882
    %v1299 = vpack.c.b16 %v887, %v883
    %v1300 = vpack.c.b16 %v888, %v884
    %v1301 = vpack.c.b16 %v889, %v885
    %v1302 = vpack.c.b16 %v894, %v890
    %v1303 = vpack.c.b16 %v895, %v891
    %v1304 = vpack.c.b16 %v896, %v892
    %v1305 = vpack.c.b16 %v897, %v893
    %v1306 = vpack.c.b16 %v902, %v898
    %v1307 = vpack.c.b16 %v903, %v899
    %v1308 = vpack.c.b16 %v904, %v900
    %v1309 = vpack.c.b16 %v905, %v901
    %v1310 = vpack.c.b16 %v910, %v906
    %v1311 = vpack.c.b16 %v911, %v907
    %v1312 = vpack.c.b16 %v912, %v908
    %v1313 = vpack.c.b16 %v913, %v909
    %v1314 = vpack.c.b16 %v918, %v914
    %v1315 = vpack.c.b16 %v919, %v915
    %v1316 = vpack.c.b16 %v920, %v916
    %v1317 = vpack.c.b16 %v921, %v917
    %v1318 = vpack.c.b16 %v926, %v922
    %v1319 = vpack.c.b16 %v927, %v923
    %v1320 = vpack.c.b16 %v928, %v924
    %v1321 = vpack.c.b16 %v929, %v925
    %v1322 = vpack.c.b16 %v934, %v930
    %v1323 = vpack.c.b16 %v935, %v931
    %v1324 = vpack.c.b16 %v936, %v932
    %v1325 = vpack.c.b16 %v937, %v933
    %v1326 = vpack.c.b16 %v942, %v938
    %v1327 = vpack.c.b16 %v943, %v939
    %v1328 = vpack.c.b16 %v944, %v940
    %v1329 = vpack.c.b16 %v945, %v941
    %v1330 = vpack.c.b16 %v950, %v946
    %v1331 = vpack.c.b16 %v951, %v947
    %v1332 = vpack.c.b16 %v952, %v948
    %v1333 = vpack.c.b16 %v953, %v949
    %v1334 = vpack.c.b16 %v958, %v954
    %v1335 = vpack.c.b16 %v959, %v955
    %v1336 = vpack.c.b16 %v960, %v956
    %v1337 = vpack.c.b16 %v961, %v957
    %v1338 = vpack.c.b16 %v966, %v962
    %v1339 = vpack.c.b16 %v967, %v963
    %v1340 = vpack.c.b16 %v968, %v964
    %v1341 = vpack.c.b16 %v969, %v965
    %v1342 = vpack.c.b16 %v974, %v970
    %v1343 = vpack.c.b16 %v975, %v971
    %v1344 = vpack.c.b16 %v976, %v972
    %v1345 = vpack.c.b16 %v977, %v973
    %v1346 = vpack.c.b16 %v982, %v978
    %v1347 = vpack.c.b16 %v983, %v979
    %v1348 = vpack.c.b16 %v984, %v980
    %v1349 = vpack.c.b16 %v985, %v981
    %v1350 = vpack.c.b16 %v990, %v986
    %v1351 = vpack.c.b16 %v991, %v987
    %v1352 = vpack.c.b16 %v992, %v988
    %v1353 = vpack.c.b16 %v993, %v989
    %v1354 = vpack.c.b16 %v998, %v994
    %v1355 = vpack.c.b16 %v999, %v995
    %v1356 = vpack.c.b16 %v1000, %v996
    %v1357 = vpack.c.b16 %v1001, %v997
    %v1358 = vpack.c.b16 %v1006, %v1002
    %v1359 = vpack.c.b16 %v1007, %v1003
    %v1360 = vpack.c.b16 %v1008, %v1004
    %v1361 = vpack.c.b16 %v1009, %v1005
    %v1362 = vpack.c.b16 %v1014, %v1010
    %v1363 = vpack.c.b16 %v1015, %v1011
    %v1364 = vpack.c.b16 %v1016, %v1012
    %v1365 = vpack.c.b16 %v1017, %v1013
    %v1366 = vpack.c.b16 %v1022, %v1018
    %v1367 = vpack.c.b16 %v1023, %v1019
    %v1368 = vpack.c.b16 %v1024, %v1020
    %v1369 = vpack.c.b16 %v1025, %v1021
    %v1370 = vpack.c.b16 %v1030, %v1026
    %v1371 = vpack.c.b16 %v1031, %v1027
    %v1372 = vpack.c.b16 %v1032, %v1028
    %v1373 = vpack.c.b16 %v1033, %v1029
    %v1374 = vpack.c.b16 %v1038, %v1034
    %v1375 = vpack.c.b16 %v1039, %v1035
    %v1376 = vpack.c.b16 %v1040, %v1036
    %v1377 = vpack.c.b16 %v1041, %v1037
    %v1378 = vpack.c.b16 %v1046, %v1042
    %v1379 = vpack.c.b16 %v1047, %v1043
    %v1380 = vpack.c.b16 %v1048, %v1044
    %v1381 = vpack.c.b16 %v1049, %v1045
    %v1382 = vpack.c.b16 %v1054, %v1050
    %v1383 = vpack.c.b16 %v1055, %v1051
    %v1384 = vpack.c.b16 %v1056, %v1052
    %v1385 = vpack.c.b16 %v1057, %v1053
    %v1386 = vpack.c.b16 %v1062, %v1058
    %v1387 = vpack.c.b16 %v1063, %v1059
    %v1388 = vpack.c.b16 %v1064, %v1060
    %v1389 = vpack.c.b16 %v1065, %v1061
    %v1390 = vpack.c.b16 %v1070, %v1066
    %v1391 = vpack.c.b16 %v1071, %v1067
    %v1392 = vpack.c.b16 %v1072, %v1068
    %v1393 = vpack.c.b16 %v1073, %v1069
    %v1394 = vpack.c.b16 %v1078, %v1074
    %v1395 = vpack.c.b16 %v1079, %v1075
    %v1396 = vpack.c.b16 %v1080, %v1076
    %v1397 = vpack.c.b16 %v1081, %v1077
    %v1398 = vpack.c.b16 %v1086, %v1082
    %v1399 = vpack.c.b16 %v1087, %v1083
    %v1400 = vpack.c.b16 %v1088, %v1084
    %v1401 = vpack.c.b16 %v1089, %v1085
    %v1402 = vpack.c.b16 %v1094, %v1090
    %v1403 = vpack.c.b16 %v1095, %v1091
    %v1404 = vpack.c.b16 %v1096, %v1092
    %v1405 = vpack.c.b16 %v1097, %v1093
    %v1406 = vpack.c.b16 %v1102, %v1098
    %v1407 = vpack.c.b16 %v1103, %v1099
    %v1408 = vpack.c.b16 %v1104, %v1100
    %v1409 = vpack.c.b16 %v1105, %v1101
    %v1410 = vpack.c.b16 %v1110, %v1106
    %v1411 = vpack.c.b16 %v1111, %v1107
    %v1412 = vpack.c.b16 %v1112, %v1108
    %v1413 = vpack.c.b16 %v1113, %v1109
    %v1414 = vpack.c.b16 %v1118, %v1114
    %v1415 = vpack.c.b16 %v1119, %v1115
    %v1416 = vpack.c.b16 %v1120, %v1116
    %v1417 = vpack.c.b16 %v1121, %v1117
    %v1418 = vpack.c.b16 %v1126, %v1122
    %v1419 = vpack.c.b16 %v1127, %v1123
    %v1420 = vpack.c.b16 %v1128, %v1124
    %v1421 = vpack.c.b16 %v1129, %v1125
    %v1422 = vpack.c.b16 %v1134, %v1130
    %v1423 = vpack.c.b16 %v1135, %v1131
    %v1424 = vpack.c.b16 %v1136, %v1132
    %v1425 = vpack.c.b16 %v1137, %v1133
    %v1426 = vpack.c.b16 %v1142, %v1138
    %v1427 = vpack.c.b16 %v1143, %v1139
    %v1428 = vpack.c.b16 %v1144, %v1140
    %v1429 = vpack.c.b16 %v1145, %v1141
    %v1430 = vpack.c.b16 %v1150, %v1146
    %v1431 = vpack.c.b16 %v1151, %v1147
    %v1432 = vpack.c.b16 %v1152, %v1148
    %v1433 = vpack.c.b16 %v1153, %v1149
    %v1434 = vpack.c.b16 %v1158, %v1154
    %v1435 = vpack.c.b16 %v1159, %v1155
    %v1436 = vpack.c.b16 %v1160, %v1156
    %v1437 = vpack.c.b16 %v1161, %v1157
    %v1438 = vpack.c.b16 %v1166, %v1162
    %v1439 = vpack.c.b16 %v1167, %v1163
    %v1440 = vpack.c.b16 %v1168, %v1164
    %v1441 = vpack.c.b16 %v1169, %v1165
    %v1442 = vpack.c.b16 %v1174, %v1170
    %v1443 = vpack.c.b16 %v1175, %v1171
    %v1444 = vpack.c.b16 %v1176, %v1172
    %v1445 = vpack.c.b16 %v1177, %v1173
    %v1446 = vpack.c.b16 %v1182, %v1178
    %v1447 = vpack.c.b16 %v1183, %v1179
    %v1448 = vpack.c.b16 %v1184, %v1180
    %v1449 = vpack.c.b16 %v1185, %v1181
    %v1450 = vpack.c.b16 %v1190, %v1186
    %v1451 = vpack.c.b16 %v1191, %v1187
    %v1452 = vpack.c.b16 %v1192, %v1188
    %v1453 = vpack.c.b16 %v1193, %v1189
    %v1454 = vpack.c.b16 %v1198, %v1194
    %v1455 = vpack.c.b16 %v1199, %v1195
    %v1456 = vpack.c.b16 %v1200, %v1196
    %v1457 = vpack.c.b16 %v1201, %v1197
    %1714 = vmatprep.subr.bf16.mxu0 %v1203
    %1715 = vmatpush1.bf16.msra.mxu0 %v1202
    %1716 = vmatprep.subr.bf16.mxu0 %v1207
    %1717 = vmatpush1.bf16.msra.mxu0 %v1206
    %1718 = vmatprep.subr.bf16.mxu0 %v1211
    %1719 = vmatpush1.bf16.msra.mxu0 %v1210
    %1720 = vmatprep.subr.bf16.mxu0 %v1215
    %1721 = vmatpush1.bf16.msra.mxu0 %v1214
    %1722 = vmatprep.subr.bf16.mxu0 %v1219
    %1723 = vmatpush1.bf16.msra.mxu0 %v1218
    %1724 = vmatprep.subr.bf16.mxu0 %v1223
    %1725 = vmatpush1.bf16.msra.mxu0 %v1222
    %1726 = vmatprep.subr.bf16.mxu0 %v1227
    %1727 = vmatpush1.bf16.msra.mxu0 %v1226
    %1728 = vmatprep.subr.bf16.mxu0 %v1231
    %1729 = vmatpush1.bf16.msra.mxu0 %v1230
    %1730 = vmatprep.subr.bf16.mxu0 %v1235
    %1731 = vmatpush1.bf16.msra.mxu0 %v1234
    %1732 = vmatprep.subr.bf16.mxu0 %v1239
    %1733 = vmatpush1.bf16.msra.mxu0 %v1238
    %1734 = vmatprep.subr.bf16.mxu0 %v1243
    %1735 = vmatpush1.bf16.msra.mxu0 %v1242
    %1736 = vmatprep.subr.bf16.mxu0 %v1247
    %1737 = vmatpush1.bf16.msra.mxu0 %v1246
    %1738 = vmatprep.subr.bf16.mxu0 %v1251
    %1739 = vmatpush1.bf16.msra.mxu0 %v1250
    %1740 = vmatprep.subr.bf16.mxu0 %v1255
    %1741 = vmatpush1.bf16.msra.mxu0 %v1254
    %1742 = vmatprep.subr.bf16.mxu0 %v1259
    %1743 = vmatpush1.bf16.msra.mxu0 %v1258
    %1744 = vmatprep.subr.bf16.mxu0 %v1263
    %1745 = vmatpush1.bf16.msra.mxu0 %v1262
    %1746 = vmatprep.mubr.bf16.mxu0 %v403
    %1747 = vmatmul.mubr.bf16.gmra.mrb[0].mxu0 %v402
    %v1748 = vpop.f32.mrb[0].mxu0
    %v1749 = vadd.f32 %v337, %v1748
    %v1750 = vpop.f32.mrb[0].mxu0
    %v1751 = vadd.f32 %v341, %v1750
    %v1752 = vpop.f32.mrb[0].mxu0
    %v1753 = vadd.f32 %v337, %v1752
    %v1754 = vpop.f32.mrb[0].mxu0
    %v1755 = vadd.f32 %v341, %v1754
    %1756 = vmatprep.mubr.bf16.mxu0 %v411
    %1757 = vmatmul.mubr.bf16.gmra.mrb[0].mxu0 %v410
    %v1758 = vpop.f32.mrb[0].mxu0
    %v1759 = vadd.f32 %v337, %v1758
    %v1760 = vpop.f32.mrb[0].mxu0
    %v1761 = vadd.f32 %v341, %v1760
    %v1762 = vpop.f32.mrb[0].mxu0
    %v1763 = vadd.f32 %v337, %v1762
    %v1764 = vpop.f32.mrb[0].mxu0
    %v1765 = vadd.f32 %v341, %v1764
    %1766 = vdwg.mxu0
    %1767 = vmatprep.subr.bf16.mxu0 %v1267
    %1768 = vmatpush1.bf16.msra.mxu0 %v1266
    %1769 = vmatprep.subr.bf16.mxu0 %v1271
    %1770 = vmatpush1.bf16.msra.mxu0 %v1270
    %1771 = vmatprep.subr.bf16.mxu0 %v1275
    %1772 = vmatpush1.bf16.msra.mxu0 %v1274
    %1773 = vmatprep.subr.bf16.mxu0 %v1279
    %1774 = vmatpush1.bf16.msra.mxu0 %v1278
    %1775 = vmatprep.subr.bf16.mxu0 %v1283
    %1776 = vmatpush1.bf16.msra.mxu0 %v1282
    %1777 = vmatprep.subr.bf16.mxu0 %v1287
    %1778 = vmatpush1.bf16.msra.mxu0 %v1286
    %1779 = vmatprep.subr.bf16.mxu0 %v1291
    %1780 = vmatpush1.bf16.msra.mxu0 %v1290
    %1781 = vmatprep.subr.bf16.mxu0 %v1295
    %1782 = vmatpush1.bf16.msra.mxu0 %v1294
    %1783 = vmatprep.subr.bf16.mxu0 %v1299
    %1784 = vmatpush1.bf16.msra.mxu0 %v1298
    %1785 = vmatprep.subr.bf16.mxu0 %v1303
    %1786 = vmatpush1.bf16.msra.mxu0 %v1302
    %1787 = vmatprep.subr.bf16.mxu0 %v1307
    %1788 = vmatpush1.bf16.msra.mxu0 %v1306
    %1789 = vmatprep.subr.bf16.mxu0 %v1311
    %1790 = vmatpush1.bf16.msra.mxu0 %v1310
    %1791 = vmatprep.subr.bf16.mxu0 %v1315
    %1792 = vmatpush1.bf16.msra.mxu0 %v1314
    %1793 = vmatprep.subr.bf16.mxu0 %v1319
    %1794 = vmatpush1.bf16.msra.mxu0 %v1318
    %1795 = vmatprep.subr.bf16.mxu0 %v1323
    %1796 = vmatpush1.bf16.msra.mxu0 %v1322
    %1797 = vmatprep.subr.bf16.mxu0 %v1327
    %1798 = vmatpush1.bf16.msra.mxu0 %v1326
    %1799 = vmatprep.mubr.bf16.mxu0 %v405
    %1800 = vmatmul.mubr.bf16.gmra.mrb[0].mxu0 %v404
    %v1801 = vpop.f32.mrb[0].mxu0
    %v1802 = vadd.f32 %v1749, %v1801
    %v1803 = vpop.f32.mrb[0].mxu0
    %v1804 = vadd.f32 %v1751, %v1803
    %v1805 = vpop.f32.mrb[0].mxu0
    %v1806 = vadd.f32 %v1753, %v1805
    %v1807 = vpop.f32.mrb[0].mxu0
    %v1808 = vadd.f32 %v1755, %v1807
    %1809 = vmatprep.mubr.bf16.mxu0 %v413
    %1810 = vmatmul.mubr.bf16.gmra.mrb[0].mxu0 %v412
    %v1811 = vpop.f32.mrb[0].mxu0
    %v1812 = vadd.f32 %v1759, %v1811
    %v1813 = vpop.f32.mrb[0].mxu0
    %v1814 = vadd.f32 %v1761, %v1813
    %v1815 = vpop.f32.mrb[0].mxu0
    %v1816 = vadd.f32 %v1763, %v1815
    %v1817 = vpop.f32.mrb[0].mxu0
    %v1818 = vadd.f32 %v1765, %v1817
    %1819 = vdwg.mxu0
    %1820 = vmatprep.subr.bf16.mxu0 %v1331
    %1821 = vmatpush1.bf16.msra.mxu0 %v1330
    %1822 = vmatprep.subr.bf16.mxu0 %v1335
    %1823 = vmatpush1.bf16.msra.mxu0 %v1334
    %1824 = vmatprep.subr.bf16.mxu0 %v1339
    %1825 = vmatpush1.bf16.msra.mxu0 %v1338
    %1826 = vmatprep.subr.bf16.mxu0 %v1343
    %1827 = vmatpush1.bf16.msra.mxu0 %v1342
    %1828 = vmatprep.subr.bf16.mxu0 %v1347
    %1829 = vmatpush1.bf16.msra.mxu0 %v1346
    %1830 = vmatprep.subr.bf16.mxu0 %v1351
    %1831 = vmatpush1.bf16.msra.mxu0 %v1350
    %1832 = vmatprep.subr.bf16.mxu0 %v1355
    %1833 = vmatpush1.bf16.msra.mxu0 %v1354
    %1834 = vmatprep.subr.bf16.mxu0 %v1359
    %1835 = vmatpush1.bf16.msra.mxu0 %v1358
    %1836 = vmatprep.subr.bf16.mxu0 %v1363
    %1837 = vmatpush1.bf16.msra.mxu0 %v1362
    %1838 = vmatprep.subr.bf16.mxu0 %v1367
    %1839 = vmatpush1.bf16.msra.mxu0 %v1366
    %1840 = vmatprep.subr.bf16.mxu0 %v1371
    %1841 = vmatpush1.bf16.msra.mxu0 %v1370
    %1842 = vmatprep.subr.bf16.mxu0 %v1375
    %1843 = vmatpush1.bf16.msra.mxu0 %v1374
    %1844 = vmatprep.subr.bf16.mxu0 %v1379
    %1845 = vmatpush1.bf16.msra.mxu0 %v1378
    %1846 = vmatprep.subr.bf16.mxu0 %v1383
    %1847 = vmatpush1.bf16.msra.mxu0 %v1382
    %1848 = vmatprep.subr.bf16.mxu0 %v1387
    %1849 = vmatpush1.bf16.msra.mxu0 %v1386
    %1850 = vmatprep.subr.bf16.mxu0 %v1391
    %1851 = vmatpush1.bf16.msra.mxu0 %v1390
    %1852 = vmatprep.mubr.bf16.mxu0 %v407
    %1853 = vmatmul.mubr.bf16.gmra.mrb[0].mxu0 %v406
    %v1854 = vpop.f32.mrb[0].mxu0
    %v1855 = vadd.f32 %v1802, %v1854
    %v1856 = vpop.f32.mrb[0].mxu0
    %v1857 = vadd.f32 %v1804, %v1856
    %v1858 = vpop.f32.mrb[0].mxu0
    %v1859 = vadd.f32 %v1806, %v1858
    %v1860 = vpop.f32.mrb[0].mxu0
    %v1861 = vadd.f32 %v1808, %v1860
    %1862 = vmatprep.mubr.bf16.mxu0 %v415
    %1863 = vmatmul.mubr.bf16.gmra.mrb[0].mxu0 %v414
    %v1864 = vpop.f32.mrb[0].mxu0
    %v1865 = vadd.f32 %v1812, %v1864
    %v1866 = vpop.f32.mrb[0].mxu0
    %v1867 = vadd.f32 %v1814, %v1866
    %v1868 = vpop.f32.mrb[0].mxu0
    %v1869 = vadd.f32 %v1816, %v1868
    %v1870 = vpop.f32.mrb[0].mxu0
    %v1871 = vadd.f32 %v1818, %v1870
    %1872 = vdwg.mxu0
    %1873 = vmatprep.subr.bf16.mxu0 %v1395
    %1874 = vmatpush1.bf16.msra.mxu0 %v1394
    %1875 = vmatprep.subr.bf16.mxu0 %v1399
    %1876 = vmatpush1.bf16.msra.mxu0 %v1398
    %1877 = vmatprep.subr.bf16.mxu0 %v1403
    %1878 = vmatpush1.bf16.msra.mxu0 %v1402
    %1879 = vmatprep.subr.bf16.mxu0 %v1407
    %1880 = vmatpush1.bf16.msra.mxu0 %v1406
    %1881 = vmatprep.subr.bf16.mxu0 %v1411
    %1882 = vmatpush1.bf16.msra.mxu0 %v1410
    %1883 = vmatprep.subr.bf16.mxu0 %v1415
    %1884 = vmatpush1.bf16.msra.mxu0 %v1414
    %1885 = vmatprep.subr.bf16.mxu0 %v1419
    %1886 = vmatpush1.bf16.msra.mxu0 %v1418
    %1887 = vmatprep.subr.bf16.mxu0 %v1423
    %1888 = vmatpush1.bf16.msra.mxu0 %v1422
    %1889 = vmatprep.subr.bf16.mxu0 %v1427
    %1890 = vmatpush1.bf16.msra.mxu0 %v1426
    %1891 = vmatprep.subr.bf16.mxu0 %v1431
    %1892 = vmatpush1.bf16.msra.mxu0 %v1430
    %1893 = vmatprep.subr.bf16.mxu0 %v1435
    %1894 = vmatpush1.bf16.msra.mxu0 %v1434
    %1895 = vmatprep.subr.bf16.mxu0 %v1439
    %1896 = vmatpush1.bf16.msra.mxu0 %v1438
    %1897 = vmatprep.subr.bf16.mxu0 %v1443
    %1898 = vmatpush1.bf16.msra.mxu0 %v1442
    %1899 = vmatprep.subr.bf16.mxu0 %v1447
    %1900 = vmatpush1.bf16.msra.mxu0 %v1446
    %1901 = vmatprep.subr.bf16.mxu0 %v1451
    %1902 = vmatpush1.bf16.msra.mxu0 %v1450
    %1903 = vmatprep.subr.bf16.mxu0 %v1455
    %1904 = vmatpush1.bf16.msra.mxu0 %v1454
    %1905 = vmatprep.mubr.bf16.mxu0 %v409
    %1906 = vmatmul.mubr.bf16.gmra.mrb[0].mxu0 %v408
    %v1907 = vpop.f32.mrb[0].mxu0
    %v1908 = vadd.f32 %v1855, %v1907
    %v1909 = vpop.f32.mrb[0].mxu0
    %v1910 = vadd.f32 %v1857, %v1909
    %v1911 = vpop.f32.mrb[0].mxu0
    %v1912 = vadd.f32 %v1859, %v1911
    %v1913 = vpop.f32.mrb[0].mxu0
    %v1914 = vadd.f32 %v1861, %v1913
    %1915 = vmatprep.mubr.bf16.mxu0 %v417
    %1916 = vmatmul.mubr.bf16.gmra.mrb[0].mxu0 %v416
    %v1917 = vpop.f32.mrb[0].mxu0
    %v1918 = vadd.f32 %v1865, %v1917
    %v1919 = vpop.f32.mrb[0].mxu0
    %v1920 = vadd.f32 %v1867, %v1919
    %v1921 = vpop.f32.mrb[0].mxu0
    %v1922 = vadd.f32 %v1869, %v1921
    %v1923 = vpop.f32.mrb[0].mxu0
    %v1924 = vadd.f32 %v1871, %v1923
    %1925 = vdwg.mxu0
    %1926 = vmatprep.subr.bf16.mxu0 %v1205
    %1927 = vmatpush1.bf16.msra.mxu0 %v1204
    %1928 = vmatprep.subr.bf16.mxu0 %v1209
    %1929 = vmatpush1.bf16.msra.mxu0 %v1208
    %1930 = vmatprep.subr.bf16.mxu0 %v1213
    %1931 = vmatpush1.bf16.msra.mxu0 %v1212
    %1932 = vmatprep.subr.bf16.mxu0 %v1217
    %1933 = vmatpush1.bf16.msra.mxu0 %v1216
    %1934 = vmatprep.subr.bf16.mxu0 %v1221
    %1935 = vmatpush1.bf16.msra.mxu0 %v1220
    %1936 = vmatprep.subr.bf16.mxu0 %v1225
    %1937 = vmatpush1.bf16.msra.mxu0 %v1224
    %1938 = vmatprep.subr.bf16.mxu0 %v1229
    %1939 = vmatpush1.bf16.msra.mxu0 %v1228
    %1940 = vmatprep.subr.bf16.mxu0 %v1233
    %1941 = vmatpush1.bf16.msra.mxu0 %v1232
    %1942 = vmatprep.subr.bf16.mxu0 %v1237
    %1943 = vmatpush1.bf16.msra.mxu0 %v1236
    %1944 = vmatprep.subr.bf16.mxu0 %v1241
    %1945 = vmatpush1.bf16.msra.mxu0 %v1240
    %1946 = vmatprep.subr.bf16.mxu0 %v1245
    %1947 = vmatpush1.bf16.msra.mxu0 %v1244
    %1948 = vmatprep.subr.bf16.mxu0 %v1249
    %1949 = vmatpush1.bf16.msra.mxu0 %v1248
    %1950 = vmatprep.subr.bf16.mxu0 %v1253
    %1951 = vmatpush1.bf16.msra.mxu0 %v1252
    %1952 = vmatprep.subr.bf16.mxu0 %v1257
    %1953 = vmatpush1.bf16.msra.mxu0 %v1256
    %1954 = vmatprep.subr.bf16.mxu0 %v1261
    %1955 = vmatpush1.bf16.msra.mxu0 %v1260
    %1956 = vmatprep.subr.bf16.mxu0 %v1265
    %1957 = vmatpush1.bf16.msra.mxu0 %v1264
    %1958 = vmatprep.mubr.bf16.mxu0 %v403
    %1959 = vmatmul.mubr.bf16.gmra.mrb[0].mxu0 %v402
    %v1960 = vpop.f32.mrb[0].mxu0
    %v1961 = vadd.f32 %v345, %v1960
    %v1962 = vpop.f32.mrb[0].mxu0
    %v1963 = vadd.f32 %v349, %v1962
    %v1964 = vpop.f32.mrb[0].mxu0
    %v1965 = vadd.f32 %v345, %v1964
    %v1966 = vpop.f32.mrb[0].mxu0
    %v1967 = vadd.f32 %v349, %v1966
    %1968 = vmatprep.mubr.bf16.mxu0 %v411
    %1969 = vmatmul.mubr.bf16.gmra.mrb[0].mxu0 %v410
    %v1970 = vpop.f32.mrb[0].mxu0
    %v1971 = vadd.f32 %v345, %v1970
    %v1972 = vpop.f32.mrb[0].mxu0
    %v1973 = vadd.f32 %v349, %v1972
    %v1974 = vpop.f32.mrb[0].mxu0
    %v1975 = vadd.f32 %v345, %v1974
    %v1976 = vpop.f32.mrb[0].mxu0
    %v1977 = vadd.f32 %v349, %v1976
    %1978 = vdwg.mxu0
    %1979 = vmatprep.subr.bf16.mxu0 %v1269
    %1980 = vmatpush1.bf16.msra.mxu0 %v1268
    %1981 = vmatprep.subr.bf16.mxu0 %v1273
    %1982 = vmatpush1.bf16.msra.mxu0 %v1272
    %1983 = vmatprep.subr.bf16.mxu0 %v1277
    %1984 = vmatpush1.bf16.msra.mxu0 %v1276
    %1985 = vmatprep.subr.bf16.mxu0 %v1281
    %1986 = vmatpush1.bf16.msra.mxu0 %v1280
    %1987 = vmatprep.subr.bf16.mxu0 %v1285
    %1988 = vmatpush1.bf16.msra.mxu0 %v1284
    %1989 = vmatprep.subr.bf16.mxu0 %v1289
    %1990 = vmatpush1.bf16.msra.mxu0 %v1288
    %1991 = vmatprep.subr.bf16.mxu0 %v1293
    %1992 = vmatpush1.bf16.msra.mxu0 %v1292
    %1993 = vmatprep.subr.bf16.mxu0 %v1297
    %1994 = vmatpush1.bf16.msra.mxu0 %v1296
    %1995 = vmatprep.subr.bf16.mxu0 %v1301
    %1996 = vmatpush1.bf16.msra.mxu0 %v1300
    %1997 = vmatprep.subr.bf16.mxu0 %v1305
    %1998 = vmatpush1.bf16.msra.mxu0 %v1304
    %1999 = vmatprep.subr.bf16.mxu0 %v1309
    %2000 = vmatpush1.bf16.msra.mxu0 %v1308
    %2001 = vmatprep.subr.bf16.mxu0 %v1313
    %2002 = vmatpush1.bf16.msra.mxu0 %v1312
    %2003 = vmatprep.subr.bf16.mxu0 %v1317
    %2004 = vmatpush1.bf16.msra.mxu0 %v1316
    %2005 = vmatprep.subr.bf16.mxu0 %v1321
    %2006 = vmatpush1.bf16.msra.mxu0 %v1320
    %2007 = vmatprep.subr.bf16.mxu0 %v1325
    %2008 = vmatpush1.bf16.msra.mxu0 %v1324
    %2009 = vmatprep.subr.bf16.mxu0 %v1329
    %2010 = vmatpush1.bf16.msra.mxu0 %v1328
    %2011 = vmatprep.mubr.bf16.mxu0 %v405
    %2012 = vmatmul.mubr.bf16.gmra.mrb[0].mxu0 %v404
    %v2013 = vpop.f32.mrb[0].mxu0
    %v2014 = vadd.f32 %v1961, %v2013
    %v2015 = vpop.f32.mrb[0].mxu0
    %v2016 = vadd.f32 %v1963, %v2015
    %v2017 = vpop.f32.mrb[0].mxu0
    %v2018 = vadd.f32 %v1965, %v2017
    %v2019 = vpop.f32.mrb[0].mxu0
    %v2020 = vadd.f32 %v1967, %v2019
    %2021 = vmatprep.mubr.bf16.mxu0 %v413
    %2022 = vmatmul.mubr.bf16.gmra.mrb[0].mxu0 %v412
    %v2023 = vpop.f32.mrb[0].mxu0
    %v2024 = vadd.f32 %v1971, %v2023
    %v2025 = vpop.f32.mrb[0].mxu0
    %v2026 = vadd.f32 %v1973, %v2025
    %v2027 = vpop.f32.mrb[0].mxu0
    %v2028 = vadd.f32 %v1975, %v2027
    %v2029 = vpop.f32.mrb[0].mxu0
    %v2030 = vadd.f32 %v1977, %v2029
    %2031 = vdwg.mxu0
    %2032 = vmatprep.subr.bf16.mxu0 %v1333
    %2033 = vmatpush1.bf16.msra.mxu0 %v1332
    %2034 = vmatprep.subr.bf16.mxu0 %v1337
    %2035 = vmatpush1.bf16.msra.mxu0 %v1336
    %2036 = vmatprep.subr.bf16.mxu0 %v1341
    %2037 = vmatpush1.bf16.msra.mxu0 %v1340
    %2038 = vmatprep.subr.bf16.mxu0 %v1345
    %2039 = vmatpush1.bf16.msra.mxu0 %v1344
    %2040 = vmatprep.subr.bf16.mxu0 %v1349
    %2041 = vmatpush1.bf16.msra.mxu0 %v1348
    %2042 = vmatprep.subr.bf16.mxu0 %v1353
    %2043 = vmatpush1.bf16.msra.mxu0 %v1352
    %2044 = vmatprep.subr.bf16.mxu0 %v1357
    %2045 = vmatpush1.bf16.msra.mxu0 %v1356
    %2046 = vmatprep.subr.bf16.mxu0 %v1361
    %2047 = vmatpush1.bf16.msra.mxu0 %v1360
    %2048 = vmatprep.subr.bf16.mxu0 %v1365
    %2049 = vmatpush1.bf16.msra.mxu0 %v1364
    %2050 = vmatprep.subr.bf16.mxu0 %v1369
    %2051 = vmatpush1.bf16.msra.mxu0 %v1368
    %2052 = vmatprep.subr.bf16.mxu0 %v1373
    %2053 = vmatpush1.bf16.msra.mxu0 %v1372
    %2054 = vmatprep.subr.bf16.mxu0 %v1377
    %2055 = vmatpush1.bf16.msra.mxu0 %v1376
    %2056 = vmatprep.subr.bf16.mxu0 %v1381
    %2057 = vmatpush1.bf16.msra.mxu0 %v1380
    %2058 = vmatprep.subr.bf16.mxu0 %v1385
    %2059 = vmatpush1.bf16.msra.mxu0 %v1384
    %2060 = vmatprep.subr.bf16.mxu0 %v1389
    %2061 = vmatpush1.bf16.msra.mxu0 %v1388
    %2062 = vmatprep.subr.bf16.mxu0 %v1393
    %2063 = vmatpush1.bf16.msra.mxu0 %v1392
    %2064 = vmatprep.mubr.bf16.mxu0 %v407
    %2065 = vmatmul.mubr.bf16.gmra.mrb[0].mxu0 %v406
    %v2066 = vpop.f32.mrb[0].mxu0
    %v2067 = vadd.f32 %v2014, %v2066
    %v2068 = vpop.f32.mrb[0].mxu0
    %v2069 = vadd.f32 %v2016, %v2068
    %v2070 = vpop.f32.mrb[0].mxu0
    %v2071 = vadd.f32 %v2018, %v2070
    %v2072 = vpop.f32.mrb[0].mxu0
    %v2073 = vadd.f32 %v2020, %v2072
    %2074 = vmatprep.mubr.bf16.mxu0 %v415
    %2075 = vmatmul.mubr.bf16.gmra.mrb[0].mxu0 %v414
    %v2076 = vpop.f32.mrb[0].mxu0
    %v2077 = vadd.f32 %v2024, %v2076
    %v2078 = vpop.f32.mrb[0].mxu0
    %v2079 = vadd.f32 %v2026, %v2078
    %v2080 = vpop.f32.mrb[0].mxu0
    %v2081 = vadd.f32 %v2028, %v2080
    %v2082 = vpop.f32.mrb[0].mxu0
    %v2083 = vadd.f32 %v2030, %v2082
    %2084 = vdwg.mxu0
    %2085 = vmatprep.subr.bf16.mxu0 %v1397
    %2086 = vmatpush1.bf16.msra.mxu0 %v1396
    %2087 = vmatprep.subr.bf16.mxu0 %v1401
    %2088 = vmatpush1.bf16.msra.mxu0 %v1400
    %2089 = vmatprep.subr.bf16.mxu0 %v1405
    %2090 = vmatpush1.bf16.msra.mxu0 %v1404
    %2091 = vmatprep.subr.bf16.mxu0 %v1409
    %2092 = vmatpush1.bf16.msra.mxu0 %v1408
    %2093 = vmatprep.subr.bf16.mxu0 %v1413
    %2094 = vmatpush1.bf16.msra.mxu0 %v1412
    %2095 = vmatprep.subr.bf16.mxu0 %v1417
    %2096 = vmatpush1.bf16.msra.mxu0 %v1416
    %2097 = vmatprep.subr.bf16.mxu0 %v1421
    %2098 = vmatpush1.bf16.msra.mxu0 %v1420
    %2099 = vmatprep.subr.bf16.mxu0 %v1425
    %2100 = vmatpush1.bf16.msra.mxu0 %v1424
    %2101 = vmatprep.subr.bf16.mxu0 %v1429
    %2102 = vmatpush1.bf16.msra.mxu0 %v1428
    %2103 = vmatprep.subr.bf16.mxu0 %v1433
    %2104 = vmatpush1.bf16.msra.mxu0 %v1432
    %2105 = vmatprep.subr.bf16.mxu0 %v1437
    %2106 = vmatpush1.bf16.msra.mxu0 %v1436
    %2107 = vmatprep.subr.bf16.mxu0 %v1441
    %2108 = vmatpush1.bf16.msra.mxu0 %v1440
    %2109 = vmatprep.subr.bf16.mxu0 %v1445
    %2110 = vmatpush1.bf16.msra.mxu0 %v1444
    %2111 = vmatprep.subr.bf16.mxu0 %v1449
    %2112 = vmatpush1.bf16.msra.mxu0 %v1448
    %2113 = vmatprep.subr.bf16.mxu0 %v1453
    %2114 = vmatpush1.bf16.msra.mxu0 %v1452
    %2115 = vmatprep.subr.bf16.mxu0 %v1457
    %2116 = vmatpush1.bf16.msra.mxu0 %v1456
    %2117 = vmatprep.mubr.bf16.mxu0 %v409
    %2118 = vmatmul.mubr.bf16.gmra.mrb[0].mxu0 %v408
    %v2119 = vpop.f32.mrb[0].mxu0
    %v2120 = vadd.f32 %v2067, %v2119
    %v2121 = vpop.f32.mrb[0].mxu0
    %v2122 = vadd.f32 %v2069, %v2121
    %v2123 = vpop.f32.mrb[0].mxu0
    %v2124 = vadd.f32 %v2071, %v2123
    %v2125 = vpop.f32.mrb[0].mxu0
    %v2126 = vadd.f32 %v2073, %v2125
    %2127 = vmatprep.mubr.bf16.mxu0 %v417
    %2128 = vmatmul.mubr.bf16.gmra.mrb[0].mxu0 %v416
    %v2129 = vpop.f32.mrb[0].mxu0
    %v2130 = vadd.f32 %v2077, %v2129
    %v2131 = vpop.f32.mrb[0].mxu0
    %v2132 = vadd.f32 %v2079, %v2131
    %v2133 = vpop.f32.mrb[0].mxu0
    %v2134 = vadd.f32 %v2081, %v2133
    %v2135 = vpop.f32.mrb[0].mxu0
    %v2136 = vadd.f32 %v2083, %v2135
    %2137 = vdwg.mxu0
    %v2138 = vmax.f32 %v1908, 0.0
    %v2139 = vmax.f32 %v1910, 0.0
    %v2140 = vmax.f32 %v2120, 0.0
    %v2141 = vmax.f32 %v2122, 0.0
    %v2142 = vmax.f32 %v1912, 0.0
    %v2143 = vmax.f32 %v1914, 0.0
    %v2144 = vmax.f32 %v2124, 0.0
    %v2145 = vmax.f32 %v2126, 0.0
    %v2146 = vmax.f32 %v1918, 0.0
    %v2147 = vmax.f32 %v1920, 0.0
    %v2148 = vmax.f32 %v2130, 0.0
    %v2149 = vmax.f32 %v2132, 0.0
    %v2150 = vmax.f32 %v1922, 0.0
    %v2151 = vmax.f32 %v1924, 0.0
    %v2152 = vmax.f32 %v2134, 0.0
    %v2153 = vmax.f32 %v2136, 0.0
    %v2154 = vpack.c.bf16 %v2142, %v2138
    %v2155 = vpack.c.bf16 %v2143, %v2139
    %v2156 = vpack.c.bf16 %v2144, %v2140
    %v2157 = vpack.c.bf16 %v2145, %v2141
    %v2158 = vpack.c.bf16 %v2150, %v2146
    %v2159 = vpack.c.bf16 %v2151, %v2147
    %v2160 = vpack.c.bf16 %v2152, %v2148
    %v2161 = vpack.c.bf16 %v2153, %v2149
    %v2162 = vld [vmem:[#allocation4] sm:$0xff]
    %v2163 = vld [vmem:[#allocation4 + $0x8] sm:$0xff]
    %v2164 = vld [vmem:[#allocation4 + $0x10] sm:$0xff]
    %v2165 = vld [vmem:[#allocation4 + $0x18] sm:$0xff]
    %v2166 = vld [vmem:[#allocation4 + $0x20] sm:$0xff]
    %v2167 = vld [vmem:[#allocation4 + $0x28] sm:$0xff]
    %v2168 = vld [vmem:[#allocation4 + $0x30] sm:$0xff]
    %v2169 = vld [vmem:[#allocation4 + $0x38] sm:$0xff]
    %v2170 = vld [vmem:[#allocation4 + $0x40] sm:$0xff]
    %v2171 = vld [vmem:[#allocation4 + $0x48] sm:$0xff]
    %v2172 = vld [vmem:[#allocation4 + $0x50] sm:$0xff]
    %v2173 = vld [vmem:[#allocation4 + $0x58] sm:$0xff]
    %v2174 = vld [vmem:[#allocation4 + $0x60] sm:$0xff]
    %v2175 = vld [vmem:[#allocation4 + $0x68] sm:$0xff]
    %v2176 = vld [vmem:[#allocation4 + $0x70] sm:$0xff]
    %v2177 = vld [vmem:[#allocation4 + $0x78] sm:$0xff]
    %v2178 = vld [vmem:[#allocation4 + $0x80] sm:$0xff]
    %v2179 = vld [vmem:[#allocation4 + $0x88] sm:$0xff]
    %v2180 = vld [vmem:[#allocation4 + $0x90] sm:$0xff]
    %v2181 = vld [vmem:[#allocation4 + $0x98] sm:$0xff]
    %v2182 = vld [vmem:[#allocation4 + $0xa0] sm:$0xff]
    %v2183 = vld [vmem:[#allocation4 + $0xa8] sm:$0xff]
    %v2184 = vld [vmem:[#allocation4 + $0xb0] sm:$0xff]
    %v2185 = vld [vmem:[#allocation4 + $0xb8] sm:$0xff]
    %v2186 = vld [vmem:[#allocation4 + $0xc0] sm:$0xff]
    %v2187 = vld [vmem:[#allocation4 + $0xc8] sm:$0xff]
    %v2188 = vld [vmem:[#allocation4 + $0xd0] sm:$0xff]
    %v2189 = vld [vmem:[#allocation4 + $0xd8] sm:$0xff]
    %v2190 = vld [vmem:[#allocation4 + $0xe0] sm:$0xff]
    %v2191 = vld [vmem:[#allocation4 + $0xe8] sm:$0xff]
    %v2192 = vld [vmem:[#allocation4 + $0xf0] sm:$0xff]
    %v2193 = vld [vmem:[#allocation4 + $0xf8] sm:$0xff]
    %v2194 = vld [vmem:[#allocation4 + $0x100] sm:$0xff]
    %v2195 = vld [vmem:[#allocation4 + $0x108] sm:$0xff]
    %v2196 = vld [vmem:[#allocation4 + $0x110] sm:$0xff]
    %v2197 = vld [vmem:[#allocation4 + $0x118] sm:$0xff]
    %v2198 = vld [vmem:[#allocation4 + $0x120] sm:$0xff]
    %v2199 = vld [vmem:[#allocation4 + $0x128] sm:$0xff]
    %v2200 = vld [vmem:[#allocation4 + $0x130] sm:$0xff]
    %v2201 = vld [vmem:[#allocation4 + $0x138] sm:$0xff]
    %v2202 = vld [vmem:[#allocation4 + $0x140] sm:$0xff]
    %v2203 = vld [vmem:[#allocation4 + $0x148] sm:$0xff]
    %v2204 = vld [vmem:[#allocation4 + $0x150] sm:$0xff]
    %v2205 = vld [vmem:[#allocation4 + $0x158] sm:$0xff]
    %v2206 = vld [vmem:[#allocation4 + $0x160] sm:$0xff]
    %v2207 = vld [vmem:[#allocation4 + $0x168] sm:$0xff]
    %v2208 = vld [vmem:[#allocation4 + $0x170] sm:$0xff]
    %v2209 = vld [vmem:[#allocation4 + $0x178] sm:$0xff]
    %v2210 = vld [vmem:[#allocation4 + $0x180] sm:$0xff]
    %v2211 = vld [vmem:[#allocation4 + $0x188] sm:$0xff]
    %v2212 = vld [vmem:[#allocation4 + $0x190] sm:$0xff]
    %v2213 = vld [vmem:[#allocation4 + $0x198] sm:$0xff]
    %v2214 = vld [vmem:[#allocation4 + $0x1a0] sm:$0xff]
    %v2215 = vld [vmem:[#allocation4 + $0x1a8] sm:$0xff]
    %v2216 = vld [vmem:[#allocation4 + $0x1b0] sm:$0xff]
    %v2217 = vld [vmem:[#allocation4 + $0x1b8] sm:$0xff]
    %v2218 = vld [vmem:[#allocation4 + $0x1c0] sm:$0xff]
    %v2219 = vld [vmem:[#allocation4 + $0x1c8] sm:$0xff]
    %v2220 = vld [vmem:[#allocation4 + $0x1d0] sm:$0xff]
    %v2221 = vld [vmem:[#allocation4 + $0x1d8] sm:$0xff]
    %v2222 = vld [vmem:[#allocation4 + $0x1e0] sm:$0xff]
    %v2223 = vld [vmem:[#allocation4 + $0x1e8] sm:$0xff]
    %v2224 = vld [vmem:[#allocation4 + $0x1f0] sm:$0xff]
    %v2225 = vld [vmem:[#allocation4 + $0x1f8] sm:$0xff]
    %v2226 = vld [vmem:[%s4] sm:$0x3]
    %v2228 = vlaneseq
    %v2229 = vshrl.u32 %v2228, 7
    %v2230 = vsub.s32 0, %v2229
    %v2231 = vrot.slane %v2226, %v2230
    %v2232 = vlaneseq
    %v2233 = vshrl.u32 %v2232, 7
    %v2234 = vsub.s32 1, %v2233
    %v2235 = vrot.slane %v2226, %v2234
    %v2302 = vunpack.c.l.b16 %v2162
    %v2303 = vunpack.c.h.b16 %v2162
    %v2304 = vunpack.c.l.b16 %v2163
    %v2305 = vunpack.c.h.b16 %v2163
    %v2306 = vunpack.c.l.b16 %v2164
    %v2307 = vunpack.c.h.b16 %v2164
    %v2308 = vunpack.c.l.b16 %v2165
    %v2309 = vunpack.c.h.b16 %v2165
    %v2310 = vunpack.c.l.b16 %v2166
    %v2311 = vunpack.c.h.b16 %v2166
    %v2312 = vunpack.c.l.b16 %v2167
    %v2313 = vunpack.c.h.b16 %v2167
    %v2314 = vunpack.c.l.b16 %v2168
    %v2315 = vunpack.c.h.b16 %v2168
    %v2316 = vunpack.c.l.b16 %v2169
    %v2317 = vunpack.c.h.b16 %v2169
    %v2318 = vunpack.c.l.b16 %v2170
    %v2319 = vunpack.c.h.b16 %v2170
    %v2320 = vunpack.c.l.b16 %v2171
    %v2321 = vunpack.c.h.b16 %v2171
    %v2322 = vunpack.c.l.b16 %v2172
    %v2323 = vunpack.c.h.b16 %v2172
    %v2324 = vunpack.c.l.b16 %v2173
    %v2325 = vunpack.c.h.b16 %v2173
    %v2326 = vunpack.c.l.b16 %v2174
    %v2327 = vunpack.c.h.b16 %v2174
    %v2328 = vunpack.c.l.b16 %v2175
    %v2329 = vunpack.c.h.b16 %v2175
    %v2330 = vunpack.c.l.b16 %v2176
    %v2331 = vunpack.c.h.b16 %v2176
    %v2332 = vunpack.c.l.b16 %v2177
    %v2333 = vunpack.c.h.b16 %v2177
    %v2334 = vunpack.c.l.b16 %v2178
    %v2335 = vunpack.c.h.b16 %v2178
    %v2336 = vunpack.c.l.b16 %v2179
    %v2337 = vunpack.c.h.b16 %v2179
    %v2338 = vunpack.c.l.b16 %v2180
    %v2339 = vunpack.c.h.b16 %v2180
    %v2340 = vunpack.c.l.b16 %v2181
    %v2341 = vunpack.c.h.b16 %v2181
    %v2342 = vunpack.c.l.b16 %v2182
    %v2343 = vunpack.c.h.b16 %v2182
    %v2344 = vunpack.c.l.b16 %v2183
    %v2345 = vunpack.c.h.b16 %v2183
    %v2346 = vunpack.c.l.b16 %v2184
    %v2347 = vunpack.c.h.b16 %v2184
    %v2348 = vunpack.c.l.b16 %v2185
    %v2349 = vunpack.c.h.b16 %v2185
    %v2350 = vunpack.c.l.b16 %v2186
    %v2351 = vunpack.c.h.b16 %v2186
    %v2352 = vunpack.c.l.b16 %v2187
    %v2353 = vunpack.c.h.b16 %v2187
    %v2354 = vunpack.c.l.b16 %v2188
    %v2355 = vunpack.c.h.b16 %v2188
    %v2356 = vunpack.c.l.b16 %v2189
    %v2357 = vunpack.c.h.b16 %v2189
    %v2358 = vunpack.c.l.b16 %v2190
    %v2359 = vunpack.c.h.b16 %v2190
    %v2360 = vunpack.c.l.b16 %v2191
    %v2361 = vunpack.c.h.b16 %v2191
    %v2362 = vunpack.c.l.b16 %v2192
    %v2363 = vunpack.c.h.b16 %v2192
    %v2364 = vunpack.c.l.b16 %v2193
    %v2365 = vunpack.c.h.b16 %v2193
    %v2366 = vunpack.c.l.b16 %v2194
    %v2367 = vunpack.c.h.b16 %v2194
    %v2368 = vunpack.c.l.b16 %v2195
    %v2369 = vunpack.c.h.b16 %v2195
    %v2370 = vunpack.c.l.b16 %v2196
    %v2371 = vunpack.c.h.b16 %v2196
    %v2372 = vunpack.c.l.b16 %v2197
    %v2373 = vunpack.c.h.b16 %v2197
    %v2374 = vunpack.c.l.b16 %v2198
    %v2375 = vunpack.c.h.b16 %v2198
    %v2376 = vunpack.c.l.b16 %v2199
    %v2377 = vunpack.c.h.b16 %v2199
    %v2378 = vunpack.c.l.b16 %v2200
    %v2379 = vunpack.c.h.b16 %v2200
    %v2380 = vunpack.c.l.b16 %v2201
    %v2381 = vunpack.c.h.b16 %v2201
    %v2382 = vunpack.c.l.b16 %v2202
    %v2383 = vunpack.c.h.b16 %v2202
    %v2384 = vunpack.c.l.b16 %v2203
    %v2385 = vunpack.c.h.b16 %v2203
    %v2386 = vunpack.c.l.b16 %v2204
    %v2387 = vunpack.c.h.b16 %v2204
    %v2388 = vunpack.c.l.b16 %v2205
    %v2389 = vunpack.c.h.b16 %v2205
    %v2390 = vunpack.c.l.b16 %v2206
    %v2391 = vunpack.c.h.b16 %v2206
    %v2392 = vunpack.c.l.b16 %v2207
    %v2393 = vunpack.c.h.b16 %v2207
    %v2394 = vunpack.c.l.b16 %v2208
    %v2395 = vunpack.c.h.b16 %v2208
    %v2396 = vunpack.c.l.b16 %v2209
    %v2397 = vunpack.c.h.b16 %v2209
    %v2398 = vunpack.c.l.b16 %v2210
    %v2399 = vunpack.c.h.b16 %v2210
    %v2400 = vunpack.c.l.b16 %v2211
    %v2401 = vunpack.c.h.b16 %v2211
    %v2402 = vunpack.c.l.b16 %v2212
    %v2403 = vunpack.c.h.b16 %v2212
    %v2404 = vunpack.c.l.b16 %v2213
    %v2405 = vunpack.c.h.b16 %v2213
    %v2406 = vunpack.c.l.b16 %v2214
    %v2407 = vunpack.c.h.b16 %v2214
    %v2408 = vunpack.c.l.b16 %v2215
    %v2409 = vunpack.c.h.b16 %v2215
    %v2410 = vunpack.c.l.b16 %v2216
    %v2411 = vunpack.c.h.b16 %v2216
    %v2412 = vunpack.c.l.b16 %v2217
    %v2413 = vunpack.c.h.b16 %v2217
    %v2414 = vunpack.c.l.b16 %v2218
    %v2415 = vunpack.c.h.b16 %v2218
    %v2416 = vunpack.c.l.b16 %v2219
    %v2417 = vunpack.c.h.b16 %v2219
    %v2418 = vunpack.c.l.b16 %v2220
    %v2419 = vunpack.c.h.b16 %v2220
    %v2420 = vunpack.c.l.b16 %v2221
    %v2421 = vunpack.c.h.b16 %v2221
    %v2422 = vunpack.c.l.b16 %v2222
    %v2423 = vunpack.c.h.b16 %v2222
    %v2424 = vunpack.c.l.b16 %v2223
    %v2425 = vunpack.c.h.b16 %v2223
    %v2426 = vunpack.c.l.b16 %v2224
    %v2427 = vunpack.c.h.b16 %v2224
    %v2428 = vunpack.c.l.b16 %v2225
    %v2429 = vunpack.c.h.b16 %v2225
    %v2430 = vpack.c.b16 %v2304, %v2302
    %v2431 = vpack.c.b16 %v2305, %v2303
    %v2432 = vpack.c.b16 %v2308, %v2306
    %v2433 = vpack.c.b16 %v2309, %v2307
    %v2434 = vpack.c.b16 %v2312, %v2310
    %v2435 = vpack.c.b16 %v2313, %v2311
    %v2436 = vpack.c.b16 %v2316, %v2314
    %v2437 = vpack.c.b16 %v2317, %v2315
    %v2438 = vpack.c.b16 %v2320, %v2318
    %v2439 = vpack.c.b16 %v2321, %v2319
    %v2440 = vpack.c.b16 %v2324, %v2322
    %v2441 = vpack.c.b16 %v2325, %v2323
    %v2442 = vpack.c.b16 %v2328, %v2326
    %v2443 = vpack.c.b16 %v2329, %v2327
    %v2444 = vpack.c.b16 %v2332, %v2330
    %v2445 = vpack.c.b16 %v2333, %v2331
    %v2446 = vpack.c.b16 %v2336, %v2334
    %v2447 = vpack.c.b16 %v2337, %v2335
    %v2448 = vpack.c.b16 %v2340, %v2338
    %v2449 = vpack.c.b16 %v2341, %v2339
    %v2450 = vpack.c.b16 %v2344, %v2342
    %v2451 = vpack.c.b16 %v2345, %v2343
    %v2452 = vpack.c.b16 %v2348, %v2346
    %v2453 = vpack.c.b16 %v2349, %v2347
    %v2454 = vpack.c.b16 %v2352, %v2350
    %v2455 = vpack.c.b16 %v2353, %v2351
    %v2456 = vpack.c.b16 %v2356, %v2354
    %v2457 = vpack.c.b16 %v2357, %v2355
    %v2458 = vpack.c.b16 %v2360, %v2358
    %v2459 = vpack.c.b16 %v2361, %v2359
    %v2460 = vpack.c.b16 %v2364, %v2362
    %v2461 = vpack.c.b16 %v2365, %v2363
    %v2462 = vpack.c.b16 %v2368, %v2366
    %v2463 = vpack.c.b16 %v2369, %v2367
    %v2464 = vpack.c.b16 %v2372, %v2370
    %v2465 = vpack.c.b16 %v2373, %v2371
    %v2466 = vpack.c.b16 %v2376, %v2374
    %v2467 = vpack.c.b16 %v2377, %v2375
    %v2468 = vpack.c.b16 %v2380, %v2378
    %v2469 = vpack.c.b16 %v2381, %v2379
    %v2470 = vpack.c.b16 %v2384, %v2382
    %v2471 = vpack.c.b16 %v2385, %v2383
    %v2472 = vpack.c.b16 %v2388, %v2386
    %v2473 = vpack.c.b16 %v2389, %v2387
    %v2474 = vpack.c.b16 %v2392, %v2390
    %v2475 = vpack.c.b16 %v2393, %v2391
    %v2476 = vpack.c.b16 %v2396, %v2394
    %v2477 = vpack.c.b16 %v2397, %v2395
    %v2478 = vpack.c.b16 %v2400, %v2398
    %v2479 = vpack.c.b16 %v2401, %v2399
    %v2480 = vpack.c.b16 %v2404, %v2402
    %v2481 = vpack.c.b16 %v2405, %v2403
    %v2482 = vpack.c.b16 %v2408, %v2406
    %v2483 = vpack.c.b16 %v2409, %v2407
    %v2484 = vpack.c.b16 %v2412, %v2410
    %v2485 = vpack.c.b16 %v2413, %v2411
    %v2486 = vpack.c.b16 %v2416, %v2414
    %v2487 = vpack.c.b16 %v2417, %v2415
    %v2488 = vpack.c.b16 %v2420, %v2418
    %v2489 = vpack.c.b16 %v2421, %v2419
    %v2490 = vpack.c.b16 %v2424, %v2422
    %v2491 = vpack.c.b16 %v2425, %v2423
    %v2492 = vpack.c.b16 %v2428, %v2426
    %v2493 = vpack.c.b16 %v2429, %v2427
    %2558 = vmatprep.subr.bf16.mxu0 %v2431
    %2559 = vmatpush1.bf16.msra.mxu0 %v2430
    %2560 = vmatprep.subr.bf16.mxu0 %v2433
    %2561 = vmatpush1.bf16.msra.mxu0 %v2432
    %2562 = vmatprep.subr.bf16.mxu0 %v2435
    %2563 = vmatpush1.bf16.msra.mxu0 %v2434
    %2564 = vmatprep.subr.bf16.mxu0 %v2437
    %2565 = vmatpush1.bf16.msra.mxu0 %v2436
    %2566 = vmatprep.subr.bf16.mxu0 %v2439
    %2567 = vmatpush1.bf16.msra.mxu0 %v2438
    %2568 = vmatprep.subr.bf16.mxu0 %v2441
    %2569 = vmatpush1.bf16.msra.mxu0 %v2440
    %2570 = vmatprep.subr.bf16.mxu0 %v2443
    %2571 = vmatpush1.bf16.msra.mxu0 %v2442
    %2572 = vmatprep.subr.bf16.mxu0 %v2445
    %2573 = vmatpush1.bf16.msra.mxu0 %v2444
    %2574 = vmatprep.subr.bf16.mxu0 %v2447
    %2575 = vmatpush1.bf16.msra.mxu0 %v2446
    %2576 = vmatprep.subr.bf16.mxu0 %v2449
    %2577 = vmatpush1.bf16.msra.mxu0 %v2448
    %2578 = vmatprep.subr.bf16.mxu0 %v2451
    %2579 = vmatpush1.bf16.msra.mxu0 %v2450
    %2580 = vmatprep.subr.bf16.mxu0 %v2453
    %2581 = vmatpush1.bf16.msra.mxu0 %v2452
    %2582 = vmatprep.subr.bf16.mxu0 %v2455
    %2583 = vmatpush1.bf16.msra.mxu0 %v2454
    %2584 = vmatprep.subr.bf16.mxu0 %v2457
    %2585 = vmatpush1.bf16.msra.mxu0 %v2456
    %2586 = vmatprep.subr.bf16.mxu0 %v2459
    %2587 = vmatpush1.bf16.msra.mxu0 %v2458
    %2588 = vmatprep.subr.bf16.mxu0 %v2461
    %2589 = vmatpush1.bf16.msra.mxu0 %v2460
    %2590 = vmatprep.mubr.bf16.mxu0 %v2155
    %2591 = vmatmul.mubr.bf16.gmra.mrb[0].mxu0 %v2154
    %v2592 = vpop.f32.mrb[0].mxu0
    %v2593 = vadd.f32 %v2231, %v2592
    %v2594 = vpop.f32.mrb[0].mxu0
    %v2595 = vadd.f32 %v2235, %v2594
    %v2596 = vpop.f32.mrb[0].mxu0
    %v2597 = vadd.f32 %v2231, %v2596
    %v2598 = vpop.f32.mrb[0].mxu0
    %v2599 = vadd.f32 %v2235, %v2598
    %2600 = vmatprep.mubr.bf16.mxu0 %v2159
    %2601 = vmatmul.mubr.bf16.gmra.mrb[0].mxu0 %v2158
    %v2602 = vpop.f32.mrb[0].mxu0
    %v2603 = vadd.f32 %v2231, %v2602
    %v2604 = vpop.f32.mrb[0].mxu0
    %v2605 = vadd.f32 %v2235, %v2604
    %v2606 = vpop.f32.mrb[0].mxu0
    %v2607 = vadd.f32 %v2231, %v2606
    %v2608 = vpop.f32.mrb[0].mxu0
    %v2609 = vadd.f32 %v2235, %v2608
    %2610 = vdwg.mxu0
    %2611 = vmatprep.subr.bf16.mxu0 %v2463
    %2612 = vmatpush1.bf16.msra.mxu0 %v2462
    %2613 = vmatprep.subr.bf16.mxu0 %v2465
    %2614 = vmatpush1.bf16.msra.mxu0 %v2464
    %2615 = vmatprep.subr.bf16.mxu0 %v2467
    %2616 = vmatpush1.bf16.msra.mxu0 %v2466
    %2617 = vmatprep.subr.bf16.mxu0 %v2469
    %2618 = vmatpush1.bf16.msra.mxu0 %v2468
    %2619 = vmatprep.subr.bf16.mxu0 %v2471
    %2620 = vmatpush1.bf16.msra.mxu0 %v2470
    %2621 = vmatprep.subr.bf16.mxu0 %v2473
    %2622 = vmatpush1.bf16.msra.mxu0 %v2472
    %2623 = vmatprep.subr.bf16.mxu0 %v2475
    %2624 = vmatpush1.bf16.msra.mxu0 %v2474
    %2625 = vmatprep.subr.bf16.mxu0 %v2477
    %2626 = vmatpush1.bf16.msra.mxu0 %v2476
    %2627 = vmatprep.subr.bf16.mxu0 %v2479
    %2628 = vmatpush1.bf16.msra.mxu0 %v2478
    %2629 = vmatprep.subr.bf16.mxu0 %v2481
    %2630 = vmatpush1.bf16.msra.mxu0 %v2480
    %2631 = vmatprep.subr.bf16.mxu0 %v2483
    %2632 = vmatpush1.bf16.msra.mxu0 %v2482
    %2633 = vmatprep.subr.bf16.mxu0 %v2485
    %2634 = vmatpush1.bf16.msra.mxu0 %v2484
    %2635 = vmatprep.subr.bf16.mxu0 %v2487
    %2636 = vmatpush1.bf16.msra.mxu0 %v2486
    %2637 = vmatprep.subr.bf16.mxu0 %v2489
    %2638 = vmatpush1.bf16.msra.mxu0 %v2488
    %2639 = vmatprep.subr.bf16.mxu0 %v2491
    %2640 = vmatpush1.bf16.msra.mxu0 %v2490
    %2641 = vmatprep.subr.bf16.mxu0 %v2493
    %2642 = vmatpush1.bf16.msra.mxu0 %v2492
    %2643 = vmatprep.mubr.bf16.mxu0 %v2157
    %2644 = vmatmul.mubr.bf16.gmra.mrb[0].mxu0 %v2156
    %v2645 = vpop.f32.mrb[0].mxu0
    %v2646 = vadd.f32 %v2593, %v2645
    %v2647 = vpop.f32.mrb[0].mxu0
    %v2648 = vadd.f32 %v2595, %v2647
    %v2649 = vpop.f32.mrb[0].mxu0
    %v2650 = vadd.f32 %v2597, %v2649
    %v2651 = vpop.f32.mrb[0].mxu0
    %v2652 = vadd.f32 %v2599, %v2651
    %2653 = vmatprep.mubr.bf16.mxu0 %v2161
    %2654 = vmatmul.mubr.bf16.gmra.mrb[0].mxu0 %v2160
    %v2655 = vpop.f32.mrb[0].mxu0
    %v2656 = vadd.f32 %v2603, %v2655
    %v2657 = vpop.f32.mrb[0].mxu0
    %v2658 = vadd.f32 %v2605, %v2657
    %v2659 = vpop.f32.mrb[0].mxu0
    %v2660 = vadd.f32 %v2607, %v2659
    %v2661 = vpop.f32.mrb[0].mxu0
    %v2662 = vadd.f32 %v2609, %v2661
    %2663 = vdwg.mxu0
    %v2664 = vmax.f32 %v2646, 0.0
    %v2665 = vmax.f32 %v2648, 0.0
    %v2666 = vmax.f32 %v2650, 0.0
    %v2667 = vmax.f32 %v2652, 0.0
    %v2668 = vmax.f32 %v2656, 0.0
    %v2669 = vmax.f32 %v2658, 0.0
    %v2670 = vmax.f32 %v2660, 0.0
    %v2671 = vmax.f32 %v2662, 0.0
    %v2672 = vpack.c.bf16 %v2666, %v2664
    %v2673 = vpack.c.bf16 %v2667, %v2665
    %v2674 = vpack.c.bf16 %v2670, %v2668
    %v2675 = vpack.c.bf16 %v2671, %v2669
    %v2676 = vld [vmem:[%s5] sm:$0xf]
    %v2677 = vld [vmem:[%s5 + $0x4] sm:$0xf]
    %v2678 = vld [vmem:[%s5 + $0x8] sm:$0xf]
    %v2679 = vld [vmem:[%s5 + $0xc] sm:$0xf]
    %v2680 = vld [vmem:[%s5 + $0x10] sm:$0xf]
    %v2681 = vld [vmem:[%s5 + $0x14] sm:$0xf]
    %v2682 = vld [vmem:[%s5 + $0x18] sm:$0xf]
    %v2683 = vld [vmem:[%s5 + $0x1c] sm:$0xf]
    %v2684 = vld [vmem:[%s5 + $0x20] sm:$0xf]
    %v2685 = vld [vmem:[%s5 + $0x24] sm:$0xf]
    %v2686 = vld [vmem:[%s5 + $0x28] sm:$0xf]
    %v2687 = vld [vmem:[%s5 + $0x2c] sm:$0xf]
    %v2688 = vld [vmem:[%s5 + $0x30] sm:$0xf]
    %v2689 = vld [vmem:[%s5 + $0x34] sm:$0xf]
    %v2690 = vld [vmem:[%s5 + $0x38] sm:$0xf]
    %v2691 = vld [vmem:[%s5 + $0x3c] sm:$0xf]
    %v2692 = vld [vmem:[%s5 + $0x40] sm:$0xf]
    %v2693 = vld [vmem:[%s5 + $0x44] sm:$0xf]
    %v2694 = vld [vmem:[%s5 + $0x48] sm:$0xf]
    %v2695 = vld [vmem:[%s5 + $0x4c] sm:$0xf]
    %v2696 = vld [vmem:[%s5 + $0x50] sm:$0xf]
    %v2697 = vld [vmem:[%s5 + $0x54] sm:$0xf]
    %v2698 = vld [vmem:[%s5 + $0x58] sm:$0xf]
    %v2699 = vld [vmem:[%s5 + $0x5c] sm:$0xf]
    %v2700 = vld [vmem:[%s5 + $0x60] sm:$0xf]
    %v2701 = vld [vmem:[%s5 + $0x64] sm:$0xf]
    %v2702 = vld [vmem:[%s5 + $0x68] sm:$0xf]
    %v2703 = vld [vmem:[%s5 + $0x6c] sm:$0xf]
    %v2704 = vld [vmem:[%s5 + $0x70] sm:$0xf]
    %v2705 = vld [vmem:[%s5 + $0x74] sm:$0xf]
    %v2706 = vld [vmem:[%s5 + $0x78] sm:$0xf]
    %v2707 = vld [vmem:[%s5 + $0x7c] sm:$0xf]
    %v2708 = vld [vmem:[%s6] sm:$0x1]
    %v2710 = vlaneseq
    %v2711 = vshrl.u32 %v2710, 7
    %v2712 = vsub.s32 0, %v2711
    %v2713 = vrot.slane %v2708, %v2712
    %v2747 = vunpack.c.l.b16 %v2676
    %v2748 = vunpack.c.l.b16 %v2677
    %v2749 = vunpack.c.l.b16 %v2678
    %v2750 = vunpack.c.l.b16 %v2679
    %v2751 = vunpack.c.l.b16 %v2680
    %v2752 = vunpack.c.l.b16 %v2681
    %v2753 = vunpack.c.l.b16 %v2682
    %v2754 = vunpack.c.l.b16 %v2683
    %v2755 = vunpack.c.l.b16 %v2684
    %v2756 = vunpack.c.l.b16 %v2685
    %v2757 = vunpack.c.l.b16 %v2686
    %v2758 = vunpack.c.l.b16 %v2687
    %v2759 = vunpack.c.l.b16 %v2688
    %v2760 = vunpack.c.l.b16 %v2689
    %v2761 = vunpack.c.l.b16 %v2690
    %v2762 = vunpack.c.l.b16 %v2691
    %v2763 = vunpack.c.l.b16 %v2692
    %v2764 = vunpack.c.l.b16 %v2693
    %v2765 = vunpack.c.l.b16 %v2694
    %v2766 = vunpack.c.l.b16 %v2695
    %v2767 = vunpack.c.l.b16 %v2696
    %v2768 = vunpack.c.l.b16 %v2697
    %v2769 = vunpack.c.l.b16 %v2698
    %v2770 = vunpack.c.l.b16 %v2699
    %v2771 = vunpack.c.l.b16 %v2700
    %v2772 = vunpack.c.l.b16 %v2701
    %v2773 = vunpack.c.l.b16 %v2702
    %v2774 = vunpack.c.l.b16 %v2703
    %v2775 = vunpack.c.l.b16 %v2704
    %v2776 = vunpack.c.l.b16 %v2705
    %v2777 = vunpack.c.l.b16 %v2706
    %v2778 = vunpack.c.l.b16 %v2707
    %v2779 = vpack.c.b16 %v2748, %v2747
    %v2780 = vpack.c.b16 %v2750, %v2749
    %v2781 = vpack.c.b16 %v2752, %v2751
    %v2782 = vpack.c.b16 %v2754, %v2753
    %v2783 = vpack.c.b16 %v2756, %v2755
    %v2784 = vpack.c.b16 %v2758, %v2757
    %v2785 = vpack.c.b16 %v2760, %v2759
    %v2786 = vpack.c.b16 %v2762, %v2761
    %v2787 = vpack.c.b16 %v2764, %v2763
    %v2788 = vpack.c.b16 %v2766, %v2765
    %v2789 = vpack.c.b16 %v2768, %v2767
    %v2790 = vpack.c.b16 %v2770, %v2769
    %v2791 = vpack.c.b16 %v2772, %v2771
    %v2792 = vpack.c.b16 %v2774, %v2773
    %v2793 = vpack.c.b16 %v2776, %v2775
    %v2794 = vpack.c.b16 %v2778, %v2777
    %2811 = vmatprep.subr.bf16.mxu0 0
    %2812 = vmatpush1.bf16.msra.mxu0 %v2779
    %2813 = vmatprep.subr.bf16.mxu0 0
    %2814 = vmatpush1.bf16.msra.mxu0 %v2780
    %2815 = vmatprep.subr.bf16.mxu0 0
    %2816 = vmatpush1.bf16.msra.mxu0 %v2781
    %2817 = vmatprep.subr.bf16.mxu0 0
    %2818 = vmatpush1.bf16.msra.mxu0 %v2782
    %2819 = vmatprep.subr.bf16.mxu0 0
    %2820 = vmatpush1.bf16.msra.mxu0 %v2783
    %2821 = vmatprep.subr.bf16.mxu0 0
    %2822 = vmatpush1.bf16.msra.mxu0 %v2784
    %2823 = vmatprep.subr.bf16.mxu0 0
    %2824 = vmatpush1.bf16.msra.mxu0 %v2785
    %2825 = vmatprep.subr.bf16.mxu0 0
    %2826 = vmatpush1.bf16.msra.mxu0 %v2786
    %2827 = vmatprep.subr.bf16.mxu0 0
    %2828 = vmatpush1.bf16.msra.mxu0 %v2787
    %2829 = vmatprep.subr.bf16.mxu0 0
    %2830 = vmatpush1.bf16.msra.mxu0 %v2788
    %2831 = vmatprep.subr.bf16.mxu0 0
    %2832 = vmatpush1.bf16.msra.mxu0 %v2789
    %2833 = vmatprep.subr.bf16.mxu0 0
    %2834 = vmatpush1.bf16.msra.mxu0 %v2790
    %2835 = vmatprep.subr.bf16.mxu0 0
    %2836 = vmatpush1.bf16.msra.mxu0 %v2791
    %2837 = vmatprep.subr.bf16.mxu0 0
    %2838 = vmatpush1.bf16.msra.mxu0 %v2792
    %2839 = vmatprep.subr.bf16.mxu0 0
    %2840 = vmatpush1.bf16.msra.mxu0 %v2793
    %2841 = vmatprep.subr.bf16.mxu0 0
    %2842 = vmatpush1.bf16.msra.mxu0 %v2794
    %2843 = vmatprep.mubr.bf16.mxu0 %v2673
    %2844 = vmatmul.mubr.bf16.gmra.mrb[0].mxu0 %v2672
    %v2845 = vpop.f32.mrb[0].mxu0
    %v2846 = vadd.f32 %v2713, %v2845
    %v2847 = vpop.f32.mrb[0].mxu0
    %v2848 = vpop.f32.mrb[0].mxu0
    %v2849 = vadd.f32 %v2713, %v2848
    %v2850 = vpop.f32.mrb[0].mxu0
    %2851 = vmatprep.mubr.bf16.mxu0 %v2675
    %2852 = vmatmul.mubr.bf16.gmra.mrb[0].mxu0 %v2674
    %v2853 = vpop.f32.mrb[0].mxu0
    %v2854 = vadd.f32 %v2713, %v2853
    %v2855 = vpop.f32.mrb[0].mxu0
    %v2856 = vpop.f32.mrb[0].mxu0
    %v2857 = vadd.f32 %v2713, %v2856
    %v2858 = vpop.f32.mrb[0].mxu0
    %2859 = vdwg.mxu0
    %vm2860 = vcmask 80896
    %2861 = vst.msk [vmem:[%s8] sm:$0xff] %vm2860, %v2846
    %2862 = vst.msk [vmem:[%s8 + $0x8] sm:$0xff] %vm2860, %v2849
    %2863 = vst.msk [vmem:[%s8 + $0x10] sm:$0xff] %vm2860, %v2854
    %2864 = vst.msk [vmem:[%s8 + $0x18] sm:$0xff] %vm2860, %v2857
    %v2865 = vsel %vm2860, %v2846, -inf
    %2866 = vmax.xlane.f32.xlu0 %v2865
    %v2867 = vpop.xlane.xlu0 %2866
    %v2868 = vsel %vm2860, %v2849, -inf
    %2869 = vmax.xlane.f32.xlu0 %v2868
    %v2870 = vpop.xlane.xlu0 %2869
    %v2871 = vsel %vm2860, %v2854, -inf
    %2872 = vmax.xlane.f32.xlu0 %v2871
    %v2873 = vpop.xlane.xlu0 %2872
    %v2874 = vsel %vm2860, %v2857, -inf
    %2875 = vmax.xlane.f32.xlu0 %v2874
    %v2876 = vpop.xlane.xlu0 %2875
    %v2877 = vsub.f32 %v2846, %v2867
    %v2878 = vsub.f32 %v2849, %v2870
    %v2879 = vsub.f32 %v2854, %v2873
    %v2880 = vsub.f32 %v2857, %v2876
    %v2881 = vmul.f32 %v2877, 1.442695
    %v2882 = vpow.pop %v2881
    %v2883 = vmul.f32 %v2878, 1.442695
    %v2884 = vpow.pop %v2883
    %v2885 = vmul.f32 %v2879, 1.442695
    %v2886 = vpow.pop %v2885
    %v2887 = vmul.f32 %v2880, 1.442695
    %v2888 = vpow.pop %v2887
    %v2889 = vsel %vm2860, %v2882, 0.0
    %2890 = vadd.xlane.f32.xlu0 %v2889
    %v2891 = vpop.xlane.xlu0 %2890
    %v2892 = vsel %vm2860, %v2884, 0.0
    %2893 = vadd.xlane.f32.xlu0 %v2892
    %v2894 = vpop.xlane.xlu0 %2893
    %v2895 = vsel %vm2860, %v2886, 0.0
    %2896 = vadd.xlane.f32.xlu0 %v2895
    %v2897 = vpop.xlane.xlu0 %2896
    %v2898 = vsel %vm2860, %v2888, 0.0
    %2899 = vadd.xlane.f32.xlu0 %v2898
    %v2900 = vpop.xlane.xlu0 %2899
    %v2901 = vlog2.pop %v2891
    %v2902 = vmul.f32 %v2901, 0.6931472
    %v2903 = vlog2.pop %v2894
    %v2904 = vmul.f32 %v2903, 0.6931472
    %v2905 = vlog2.pop %v2897
    %v2906 = vmul.f32 %v2905, 0.6931472
    %v2907 = vlog2.pop %v2900
    %v2908 = vmul.f32 %v2907, 0.6931472
    %v2909 = vadd.f32 %v2867, %v2902
    %v2910 = vadd.f32 %v2870, %v2904
    %v2911 = vadd.f32 %v2873, %v2906
    %v2912 = vadd.f32 %v2876, %v2908
    %v2913 = vsub.f32 %v2846, %v2909
    %v2914 = vsub.f32 %v2849, %v2910
    %v2915 = vsub.f32 %v2854, %v2911
    %v2916 = vsub.f32 %v2857, %v2912
    %v2917 = vlaneseq
    %v2918 = vand.u32 %v2917, 127
    %v2919 = vld [vmem:[%s7] sm:$0xff]
    %v2920 = vld [vmem:[%s7 + $0x8] sm:$0xff]
    %v2921 = vld [vmem:[%s7 + $0x10] sm:$0xff]
    %v2922 = vld [vmem:[%s7 + $0x18] sm:$0xff]
    %2923 = vset.pattern.permute.xlu0 0
    %2924 = vperm.xlu0 %2923, %v2919
    %v2925 = vpop.permute.xlu0 %2924
    %2926 = vset.pattern.permute.xlu0 0
    %2927 = vperm.xlu0 %2926, %v2920
    %v2928 = vpop.permute.xlu0 %2927
    %2929 = vset.pattern.permute.xlu0 0
    %2930 = vperm.xlu0 %2929, %v2921
    %v2931 = vpop.permute.xlu0 %2930
    %2932 = vset.pattern.permute.xlu0 0
    %2933 = vperm.xlu0 %2932, %v2922
    %v2934 = vpop.permute.xlu0 %2933
    %vm2935 = vcmp.eq.s32.totalorder %v2918, %v2925
    %vm2936 = vcmp.eq.s32.totalorder %v2918, %v2928
    %vm2937 = vcmp.eq.s32.totalorder %v2918, %v2931
    %vm2938 = vcmp.eq.s32.totalorder %v2918, %v2934
    %v2939 = vsel %vm2935, %v2913, 0.0
    %v2940 = vsel %vm2936, %v2914, 0.0
    %v2941 = vsel %vm2937, %v2915, 0.0
    %v2942 = vsel %vm2938, %v2916, 0.0
    %v2943 = vsel %vm2860, %v2939, 0.0
    %2944 = vadd.xlane.f32.xlu0 %v2943
    %v2945 = vpop.xlane.xlu0 %2944
    %v2946 = vsel %vm2860, %v2940, 0.0
    %2947 = vadd.xlane.f32.xlu0 %v2946
    %v2948 = vpop.xlane.xlu0 %2947
    %v2949 = vsel %vm2860, %v2941, 0.0
    %2950 = vadd.xlane.f32.xlu0 %v2949
    %v2951 = vpop.xlane.xlu0 %2950
    %v2952 = vsel %vm2860, %v2942, 0.0
    %2953 = vadd.xlane.f32.xlu0 %v2952
    %v2954 = vpop.xlane.xlu0 %2953
    %vm2955 = vcmask 7168
    %2956 = vst.msk [vmem:[%s9] sm:$0xff] %vm2955, %v2945
    %2957 = vst.msk [vmem:[%s9 + $0x8] sm:$0xff] %vm2955, %v2948
    %2958 = vst.msk [vmem:[%s9 + $0x10] sm:$0xff] %vm2955, %v2951
    %2959 = vst.msk [vmem:[%s9 + $0x18] sm:$0xff] %vm2955, %v2954
    // Predicated region
    $region42: #{tpu_custom_call.1} parent=1 // pred_check
      _
    $region43: #{tpu_custom_call.1} parent=1 // pred_check_branch
      %2961 = sbr.rel (0) target = $region45
    $region44: #{tpu_custom_call.1} parent=1 // pred_region
      _
    $region45: #{tpu_custom_call.1} parent=1 // pred_fallthru
      _
    // Predicated region
    $region46: #{tpu_custom_call.1} parent=1 // pred_check
      _
    $region47: #{tpu_custom_call.1} parent=1 // pred_check_branch
      %2963 = sbr.rel (0) target = $region49
    $region48: #{tpu_custom_call.1} parent=1 // pred_region
      _
    $region49: #{tpu_custom_call.1} parent=1 // pred_fallthru
      _
    // Predicated region
    $region50: #{tpu_custom_call.1} parent=1 // pred_check
      _
    $region51: #{tpu_custom_call.1} parent=1 // pred_check_branch
      %2965 = sbr.rel (0) target = $region53
    $region52: #{tpu_custom_call.1} parent=1 // pred_region
      _
    $region53: #{tpu_custom_call.1} parent=1 // pred_fallthru
      _
    // Predicated region
    $region54: #{tpu_custom_call.1} parent=1 // pred_check
      _
    $region55: #{tpu_custom_call.1} parent=1 // pred_check_branch
      %2967 = sbr.rel (0) target = $region57
    $region56: #{tpu_custom_call.1} parent=1 // pred_region
      _
    $region57: #{tpu_custom_call.1} parent=1 // pred_fallthru
      _
    %2968 = vsyncpa [#allocation3], 1
    %2969 = vsyncpa [#allocation5], 1

// kernel: tpu_custom_call.1
$region0: #{tpu_custom_call.1}
  #allocation0 [shape = 'u32[]', space=smem, size = 0x4, offset = 0x4, fixed_abs, tag = 'smem constant byte address 0x4 - core index']
  #allocation1 [shape = 'u32[144,128]{1,0:T(1,128)}', space=vmem, size = 0x12000, scoped, tag = 'internal scratch']
  %s0 = inlined_call_operand.vmem [shape: bf16[32,1024], index: 0, kind: input, shape index: {}]
  %s1 = inlined_call_operand.hbm [shape: bf16[1024,512], index: 1, kind: input, shape index: {}]
  %s2 = inlined_call_operand.vmem [shape: f32[1,512], index: 2, kind: input, shape index: {}]
  %s3 = inlined_call_operand.hbm [shape: bf16[512,256], index: 3, kind: input, shape index: {}]
  %s4 = inlined_call_operand.vmem [shape: f32[1,256], index: 4, kind: input, shape index: {}]
  %s5 = inlined_call_operand.vmem [shape: bf16[256,10], index: 5, kind: input, shape index: {}]
  %s6 = inlined_call_operand.vmem [shape: f32[1,10], index: 6, kind: input, shape index: {}]
  %s7 = inlined_call_operand.vmem [shape: s32[32,1], index: 7, kind: input, shape index: {}]
  %s8 = inlined_call_operand.vmem [shape: f32[32,10], index: 8, kind: output, shape index: {0}]
  %s9 = inlined_call_operand.vmem [shape: f32[32,1], index: 9, kind: output, shape index: {1}]
  %10 = xla_tuple %s8, %s9
  %s11 = sld [smem:[#allocation0]]
  $region58: #{tpu_custom_call.1} parent=0
    _
  %s13 = ssub.s32 1, %s11
  %s14 = scalar_select 0, %s13, %s11
  $region1: #{tpu_custom_call.1} parent=0
    #allocation2 [shape = 'u8[1048576]{0}', space=vmem, size = 0x100000, scoped, tag = 'input window, operand 1, single buffered']
    #allocation3 [shape = 's32[1]{0}', space=sflag, size = 0x4, scoped, tag = 'scoped memory for tpu_custom_call.1']
    #allocation4 [shape = 'u8[262144]{0}', space=vmem, size = 0x40000, scoped, tag = 'input window, operand 3, single buffered']
    #allocation5 [shape = 's32[1]{0}', space=sflag, size = 0x4, scoped, tag = 'scoped memory for tpu_custom_call.1']
    %15 = vsyncpa [#allocation3], 0
    %16 = vsyncpa [#allocation5], 0
    // Predicated region
    $region2: #{tpu_custom_call.1} parent=1 // pred_check
      _
    $region3: #{tpu_custom_call.1} parent=1 // pred_check_branch
      %18 = sbr.rel (0) target = $region5
    $region4: #{tpu_custom_call.1} parent=1 // pred_region
      _
    $region5: #{tpu_custom_call.1} parent=1 // pred_fallthru
      _
    // Predicated region
    $region6: #{tpu_custom_call.1} parent=1 // pred_check
      _
    $region7: #{tpu_custom_call.1} parent=1 // pred_check_branch
      %20 = sbr.rel (0) target = $region9
    $region8: #{tpu_custom_call.1} parent=1 // pred_region
      %s22 = ssub.s32 32768, 32768
      %23 = vsyncadd [#allocation3], %s22
      %s24 = sshll.u32 [#allocation2], 4
      %s25 = int_to_ptr.vmem [resolvable:$true] %s24
      %30 = dma.hbm_to_vmem [thread:$0]  %s1, 32768, %s25, [#allocation3], 256, 256, 16
    $region9: #{tpu_custom_call.1} parent=1 // pred_fallthru
      _
    // Predicated region
    $region10: #{tpu_custom_call.1} parent=1 // pred_check
      _
    $region11: #{tpu_custom_call.1} parent=1 // pred_check_branch
      %32 = sbr.rel (0) target = $region13
    $region12: #{tpu_custom_call.1} parent=1 // pred_region
      _
    $region13: #{tpu_custom_call.1} parent=1 // pred_fallthru
      _
    // Predicated region
    $region14: #{tpu_custom_call.1} parent=1 // pred_check
      _
    $region15: #{tpu_custom_call.1} parent=1 // pred_check_branch
      %34 = sbr.rel (0) target = $region17
    $region16: #{tpu_custom_call.1} parent=1 // pred_region
      %s36 = ssub.s32 8192, 8192
      %37 = vsyncadd [#allocation5], %s36
      %s38 = sshll.u32 [#allocation4], 4
      %s39 = int_to_ptr.vmem [resolvable:$true] %s38
      %44 = dma.hbm_to_vmem [thread:$0]  %s3, 8192, %s39, [#allocation5], 128, 128, 8
    $region17: #{tpu_custom_call.1} parent=1 // pred_fallthru
      _
    // Predicated region
    $region18: #{tpu_custom_call.1} parent=1 // pred_check
      _
    $region19: #{tpu_custom_call.1} parent=1 // pred_check_branch
      %46 = sbr.rel (0) target = $region21
    $region20: #{tpu_custom_call.1} parent=1 // pred_region
      _
    $region21: #{tpu_custom_call.1} parent=1 // pred_fallthru
      _
    // Predicated region
    $region22: #{tpu_custom_call.1} parent=1 // pred_check
      _
    $region23: #{tpu_custom_call.1} parent=1 // pred_check_branch
      %48 = sbr.rel (0) target = $region25
    $region24: #{tpu_custom_call.1} parent=1 // pred_region
      _
    $region25: #{tpu_custom_call.1} parent=1 // pred_fallthru
      _
    // Predicated region
    $region26: #{tpu_custom_call.1} parent=1 // pred_check
      _
    $region27: #{tpu_custom_call.1} parent=1 // pred_check_branch
      %50 = sbr.rel (0) target = $region29
    $region28: #{tpu_custom_call.1} parent=1 // pred_region
      _
    $region29: #{tpu_custom_call.1} parent=1 // pred_fallthru
      _
    // Predicated region
    $region30: #{tpu_custom_call.1} parent=1 // pred_check
      _
    $region31: #{tpu_custom_call.1} parent=1 // pred_check_branch
      %52 = sbr.rel (0) target = $region33
    $region32: #{tpu_custom_call.1} parent=1 // pred_region
      _
    $region33: #{tpu_custom_call.1} parent=1 // pred_fallthru
      _
    // Predicated region
    $region34: #{tpu_custom_call.1} parent=1 // pred_check
      _
    $region35: #{tpu_custom_call.1} parent=1 // pred_check_branch
      %54 = sbr.rel (0) target = $region37
    $region36: #{tpu_custom_call.1} parent=1 // pred_region
      %55 = dma.done [#allocation3], 32768
    $region37: #{tpu_custom_call.1} parent=1 // pred_fallthru
      _
    // Predicated region
    $region38: #{tpu_custom_call.1} parent=1 // pred_check
      _
    $region39: #{tpu_custom_call.1} parent=1 // pred_check_branch
      %57 = sbr.rel (0) target = $region41
    $region40: #{tpu_custom_call.1} parent=1 // pred_region
      %58 = dma.done [#allocation5], 8192
    $region41: #{tpu_custom_call.1} parent=1 // pred_fallthru
      _
    %v60 = vld [vmem:[%s0] sm:$0xff]
    %v61 = vld [vmem:[%s0 + $0x8] sm:$0xff]
    %v62 = vld [vmem:[%s0 + $0x10] sm:$0xff]
    %v63 = vld [vmem:[%s0 + $0x18] sm:$0xff]
    %v64 = vld [vmem:[%s0 + $0x20] sm:$0xff]
    %v65 = vld [vmem:[%s0 + $0x28] sm:$0xff]
    %v66 = vld [vmem:[%s0 + $0x30] sm:$0xff]
    %v67 = vld [vmem:[%s0 + $0x38] sm:$0xff]
    %v68 = vld [vmem:[%s0 + $0x40] sm:$0xff]
    %v69 = vld [vmem:[%s0 + $0x48] sm:$0xff]
    %v70 = vld [vmem:[%s0 + $0x50] sm:$0xff]
    %v71 = vld [vmem:[%s0 + $0x58] sm:$0xff]
    %v72 = vld [vmem:[%s0 + $0x60] sm:$0xff]
    %v73 = vld [vmem:[%s0 + $0x68] sm:$0xff]
    %v74 = vld [vmem:[%s0 + $0x70] sm:$0xff]
    %v75 = vld [vmem:[%s0 + $0x78] sm:$0xff]
    %v76 = vld [vmem:[#allocation2] sm:$0xff]
    %v77 = vld [vmem:[#allocation2 + $0x8] sm:$0xff]
    %v78 = vld [vmem:[#allocation2 + $0x10] sm:$0xff]
    %v79 = vld [vmem:[#allocation2 + $0x18] sm:$0xff]
    %v80 = vld [vmem:[#allocation2 + $0x20] sm:$0xff]
    %v81 = vld [vmem:[#allocation2 + $0x28] sm:$0xff]
    %v82 = vld [vmem:[#allocation2 + $0x30] sm:$0xff]
    %v83 = vld [vmem:[#allocation2 + $0x38] sm:$0xff]
    %v84 = vld [vmem:[#allocation2 + $0x40] sm:$0xff]
    %v85 = vld [vmem:[#allocation2 + $0x48] sm:$0xff]
    %v86 = vld [vmem:[#allocation2 + $0x50] sm:$0xff]
    %v87 = vld [vmem:[#allocation2 + $0x58] sm:$0xff]
    %v88 = vld [vmem:[#allocation2 + $0x60] sm:$0xff]
    %v89 = vld [vmem:[#allocation2 + $0x68] sm:$0xff]
    %v90 = vld [vmem:[#allocation2 + $0x70] sm:$0xff]
    %v91 = vld [vmem:[#allocation2 + $0x78] sm:$0xff]
    %v92 = vld [vmem:[#allocation2 + $0x80] sm:$0xff]
    %v93 = vld [vmem:[#allocation2 + $0x88] sm:$0xff]
    %v94 = vld [vmem:[#allocation2 + $0x90] sm:$0xff]
    %v95 = vld [vmem:[#allocation2 + $0x98] sm:$0xff]
    %v96 = vld [vmem:[#allocation2 + $0xa0] sm:$0xff]
    %v97 = vld [vmem:[#allocation2 + $0xa8] sm:$0xff]
    %v98 = vld [vmem:[#allocation2 + $0xb0] sm:$0xff]
    %v99 = vld [vmem:[#allocation2 + $0xb8] sm:$0xff]
    %v100 = vld [vmem:[#allocation2 + $0xc0] sm:$0xff]
    %v101 = vld [vmem:[#allocation2 + $0xc8] sm:$0xff]
    %v102 = vld [vmem:[#allocation2 + $0xd0] sm:$0xff]
    %v103 = vld [vmem:[#allocation2 + $0xd8] sm:$0xff]
    %v104 = vld [vmem:[#allocation2 + $0xe0] sm:$0xff]
    %v105 = vld [vmem:[#allocation2 + $0xe8] sm:$0xff]
    %v106 = vld [vmem:[#allocation2 + $0xf0] sm:$0xff]
    %v107 = vld [vmem:[#allocation2 + $0xf8] sm:$0xff]
    %v108 = vld [vmem:[#allocation2 + $0x100] sm:$0xff]
    %v109 = vld [vmem:[#allocation2 + $0x108] sm:$0xff]
    %v110 = vld [vmem:[#allocation2 + $0x110] sm:$0xff]
    %v111 = vld [vmem:[#allocation2 + $0x118] sm:$0xff]
    %v112 = vld [vmem:[#allocation2 + $0x120] sm:$0xff]
    %v113 = vld [vmem:[#allocation2 + $0x128] sm:$0xff]
    %v114 = vld [vmem:[#allocation2 + $0x130] sm:$0xff]
    %v115 = vld [vmem:[#allocation2 + $0x138] sm:$0xff]
    %v116 = vld [vmem:[#allocation2 + $0x140] sm:$0xff]
    %v117 = vld [vmem:[#allocation2 + $0x148] sm:$0xff]
    %v118 = vld [vmem:[#allocation2 + $0x150] sm:$0xff]
    %v119 = vld [vmem:[#allocation2 + $0x158] sm:$0xff]
    %v120 = vld [vmem:[#allocation2 + $0x160] sm:$0xff]
    %v121 = vld [vmem:[#allocation2 + $0x168] sm:$0xff]
    %v122 = vld [vmem:[#allocation2 + $0x170] sm:$0xff]
    %v123 = vld [vmem:[#allocation2 + $0x178] sm:$0xff]
    %v124 = vld [vmem:[#allocation2 + $0x180] sm:$0xff]
    %v125 = vld [vmem:[#allocation2 + $0x188] sm:$0xff]
    %v126 = vld [vmem:[#allocation2 + $0x190] sm:$0xff]
    %v127 = vld [vmem:[#allocation2 + $0x198] sm:$0xff]
    %v128 = vld [vmem:[#allocation2 + $0x1a0] sm:$0xff]
    %v129 = vld [vmem:[#allocation2 + $0x1a8] sm:$0xff]
    %v130 = vld [vmem:[#allocation2 + $0x1b0] sm:$0xff]
    %v131 = vld [vmem:[#allocation2 + $0x1b8] sm:$0xff]
    %v132 = vld [vmem:[#allocation2 + $0x1c0] sm:$0xff]
    %v133 = vld [vmem:[#allocation2 + $0x1c8] sm:$0xff]
    %v134 = vld [vmem:[#allocation2 + $0x1d0] sm:$0xff]
    %v135 = vld [vmem:[#allocation2 + $0x1d8] sm:$0xff]
    %v136 = vld [vmem:[#allocation2 + $0x1e0] sm:$0xff]
    %v137 = vld [vmem:[#allocation2 + $0x1e8] sm:$0xff]
    %v138 = vld [vmem:[#allocation2 + $0x1f0] sm:$0xff]
    %v139 = vld [vmem:[#allocation2 + $0x1f8] sm:$0xff]
    %v140 = vld [vmem:[#allocation2 + $0x200] sm:$0xff]
    %v141 = vld [vmem:[#allocation2 + $0x208] sm:$0xff]
    %v142 = vld [vmem:[#allocation2 + $0x210] sm:$0xff]
    %v143 = vld [vmem:[#allocation2 + $0x218] sm:$0xff]
    %v144 = vld [vmem:[#allocation2 + $0x220] sm:$0xff]
    %v145 = vld [vmem:[#allocation2 + $0x228] sm:$0xff]
    %v146 = vld [vmem:[#allocation2 + $0x230] sm:$0xff]
    %v147 = vld [vmem:[#allocation2 + $0x238] sm:$0xff]
    %v148 = vld [vmem:[#allocation2 + $0x240] sm:$0xff]
    %v149 = vld [vmem:[#allocation2 + $0x248] sm:$0xff]
    %v150 = vld [vmem:[#allocation2 + $0x250] sm:$0xff]
    %v151 = vld [vmem:[#allocation2 + $0x258] sm:$0xff]
    %v152 = vld [vmem:[#allocation2 + $0x260] sm:$0xff]
    %v153 = vld [vmem:[#allocation2 + $0x268] sm:$0xff]
    %v154 = vld [vmem:[#allocation2 + $0x270] sm:$0xff]
    %v155 = vld [vmem:[#allocation2 + $0x278] sm:$0xff]
    %v156 = vld [vmem:[#allocation2 + $0x280] sm:$0xff]
    %v157 = vld [vmem:[#allocation2 + $0x288] sm:$0xff]
    %v158 = vld [vmem:[#allocation2 + $0x290] sm:$0xff]
    %v159 = vld [vmem:[#allocation2 + $0x298] sm:$0xff]
    %v160 = vld [vmem:[#allocation2 + $0x2a0] sm:$0xff]
    %v161 = vld [vmem:[#allocation2 + $0x2a8] sm:$0xff]
    %v162 = vld [vmem:[#allocation2 + $0x2b0] sm:$0xff]
    %v163 = vld [vmem:[#allocation2 + $0x2b8] sm:$0xff]
    %v164 = vld [vmem:[#allocation2 + $0x2c0] sm:$0xff]
    %v165 = vld [vmem:[#allocation2 + $0x2c8] sm:$0xff]
    %v166 = vld [vmem:[#allocation2 + $0x2d0] sm:$0xff]
    %v167 = vld [vmem:[#allocation2 + $0x2d8] sm:$0xff]
    %v168 = vld [vmem:[#allocation2 + $0x2e0] sm:$0xff]
    %v169 = vld [vmem:[#allocation2 + $0x2e8] sm:$0xff]
    %v170 = vld [vmem:[#allocation2 + $0x2f0] sm:$0xff]
    %v171 = vld [vmem:[#allocation2 + $0x2f8] sm:$0xff]
    %v172 = vld [vmem:[#allocation2 + $0x300] sm:$0xff]
    %v173 = vld [vmem:[#allocation2 + $0x308] sm:$0xff]
    %v174 = vld [vmem:[#allocation2 + $0x310] sm:$0xff]
    %v175 = vld [vmem:[#allocation2 + $0x318] sm:$0xff]
    %v176 = vld [vmem:[#allocation2 + $0x320] sm:$0xff]
    %v177 = vld [vmem:[#allocation2 + $0x328] sm:$0xff]
    %v178 = vld [vmem:[#allocation2 + $0x330] sm:$0xff]
    %v179 = vld [vmem:[#allocation2 + $0x338] sm:$0xff]
    %v180 = vld [vmem:[#allocation2 + $0x340] sm:$0xff]
    %v181 = vld [vmem:[#allocation2 + $0x348] sm:$0xff]
    %v182 = vld [vmem:[#allocation2 + $0x350] sm:$0xff]
    %v183 = vld [vmem:[#allocation2 + $0x358] sm:$0xff]
    %v184 = vld [vmem:[#allocation2 + $0x360] sm:$0xff]
    %v185 = vld [vmem:[#allocation2 + $0x368] sm:$0xff]
    %v186 = vld [vmem:[#allocation2 + $0x370] sm:$0xff]
    %v187 = vld [vmem:[#allocation2 + $0x378] sm:$0xff]
    %v188 = vld [vmem:[#allocation2 + $0x380] sm:$0xff]
    %v189 = vld [vmem:[#allocation2 + $0x388] sm:$0xff]
    %v190 = vld [vmem:[#allocation2 + $0x390] sm:$0xff]
    %v191 = vld [vmem:[#allocation2 + $0x398] sm:$0xff]
    %v192 = vld [vmem:[#allocation2 + $0x3a0] sm:$0xff]
    %v193 = vld [vmem:[#allocation2 + $0x3a8] sm:$0xff]
    %v194 = vld [vmem:[#allocation2 + $0x3b0] sm:$0xff]
    %v195 = vld [vmem:[#allocation2 + $0x3b8] sm:$0xff]
    %v196 = vld [vmem:[#allocation2 + $0x3c0] sm:$0xff]
    %v197 = vld [vmem:[#allocation2 + $0x3c8] sm:$0xff]
    %v198 = vld [vmem:[#allocation2 + $0x3d0] sm:$0xff]
    %v199 = vld [vmem:[#allocation2 + $0x3d8] sm:$0xff]
    %v200 = vld [vmem:[#allocation2 + $0x3e0] sm:$0xff]
    %v201 = vld [vmem:[#allocation2 + $0x3e8] sm:$0xff]
    %v202 = vld [vmem:[#allocation2 + $0x3f0] sm:$0xff]
    %v203 = vld [vmem:[#allocation2 + $0x3f8] sm:$0xff]
    %v204 = vld [vmem:[#allocation2 + $0x400] sm:$0xff]
    %v205 = vld [vmem:[#allocation2 + $0x408] sm:$0xff]
    %v206 = vld [vmem:[#allocation2 + $0x410] sm:$0xff]
    %v207 = vld [vmem:[#allocation2 + $0x418] sm:$0xff]
    %v208 = vld [vmem:[#allocation2 + $0x420] sm:$0xff]
    %v209 = vld [vmem:[#allocation2 + $0x428] sm:$0xff]
    %v210 = vld [vmem:[#allocation2 + $0x430] sm:$0xff]
    %v211 = vld [vmem:[#allocation2 + $0x438] sm:$0xff]
    %v212 = vld [vmem:[#allocation2 + $0x440] sm:$0xff]
    %v213 = vld [vmem:[#allocation2 + $0x448] sm:$0xff]
    %v214 = vld [vmem:[#allocation2 + $0x450] sm:$0xff]
    %v215 = vld [vmem:[#allocation2 + $0x458] sm:$0xff]
    %v216 = vld [vmem:[#allocation2 + $0x460] sm:$0xff]
    %v217 = vld [vmem:[#allocation2 + $0x468] sm:$0xff]
    %v218 = vld [vmem:[#allocation2 + $0x470] sm:$0xff]
    %v219 = vld [vmem:[#allocation2 + $0x478] sm:$0xff]
    %v220 = vld [vmem:[#allocation2 + $0x480] sm:$0xff]
    %v221 = vld [vmem:[#allocation2 + $0x488] sm:$0xff]
    %v222 = vld [vmem:[#allocation2 + $0x490] sm:$0xff]
    %v223 = vld [vmem:[#allocation2 + $0x498] sm:$0xff]
    %v224 = vld [vmem:[#allocation2 + $0x4a0] sm:$0xff]
    %v225 = vld [vmem:[#allocation2 + $0x4a8] sm:$0xff]
    %v226 = vld [vmem:[#allocation2 + $0x4b0] sm:$0xff]
    %v227 = vld [vmem:[#allocation2 + $0x4b8] sm:$0xff]
    %v228 = vld [vmem:[#allocation2 + $0x4c0] sm:$0xff]
    %v229 = vld [vmem:[#allocation2 + $0x4c8] sm:$0xff]
    %v230 = vld [vmem:[#allocation2 + $0x4d0] sm:$0xff]
    %v231 = vld [vmem:[#allocation2 + $0x4d8] sm:$0xff]
    %v232 = vld [vmem:[#allocation2 + $0x4e0] sm:$0xff]
    %v233 = vld [vmem:[#allocation2 + $0x4e8] sm:$0xff]
    %v234 = vld [vmem:[#allocation2 + $0x4f0] sm:$0xff]
    %v235 = vld [vmem:[#allocation2 + $0x4f8] sm:$0xff]
    %v236 = vld [vmem:[#allocation2 + $0x500] sm:$0xff]
    %v237 = vld [vmem:[#allocation2 + $0x508] sm:$0xff]
    %v238 = vld [vmem:[#allocation2 + $0x510] sm:$0xff]
    %v239 = vld [vmem:[#allocation2 + $0x518] sm:$0xff]
    %v240 = vld [vmem:[#allocation2 + $0x520] sm:$0xff]
    %v241 = vld [vmem:[#allocation2 + $0x528] sm:$0xff]
    %v242 = vld [vmem:[#allocation2 + $0x530] sm:$0xff]
    %v243 = vld [vmem:[#allocation2 + $0x538] sm:$0xff]
    %v244 = vld [vmem:[#allocation2 + $0x540] sm:$0xff]
    %v245 = vld [vmem:[#allocation2 + $0x548] sm:$0xff]
    %v246 = vld [vmem:[#allocation2 + $0x550] sm:$0xff]
    %v247 = vld [vmem:[#allocation2 + $0x558] sm:$0xff]
    %v248 = vld [vmem:[#allocation2 + $0x560] sm:$0xff]
    %v249 = vld [vmem:[#allocation2 + $0x568] sm:$0xff]
    %v250 = vld [vmem:[#allocation2 + $0x570] sm:$0xff]
    %v251 = vld [vmem:[#allocation2 + $0x578] sm:$0xff]
    %v252 = vld [vmem:[#allocation2 + $0x580] sm:$0xff]
    %v253 = vld [vmem:[#allocation2 + $0x588] sm:$0xff]
    %v254 = vld [vmem:[#allocation2 + $0x590] sm:$0xff]
    %v255 = vld [vmem:[#allocation2 + $0x598] sm:$0xff]
    %v256 = vld [vmem:[#allocation2 + $0x5a0] sm:$0xff]
    %v257 = vld [vmem:[#allocation2 + $0x5a8] sm:$0xff]
    %v258 = vld [vmem:[#allocation2 + $0x5b0] sm:$0xff]
    %v259 = vld [vmem:[#allocation2 + $0x5b8] sm:$0xff]
    %v260 = vld [vmem:[#allocation2 + $0x5c0] sm:$0xff]
    %v261 = vld [vmem:[#allocation2 + $0x5c8] sm:$0xff]
    %v262 = vld [vmem:[#allocation2 + $0x5d0] sm:$0xff]
    %v263 = vld [vmem:[#allocation2 + $0x5d8] sm:$0xff]
    %v264 = vld [vmem:[#allocation2 + $0x5e0] sm:$0xff]
    %v265 = vld [vmem:[#allocation2 + $0x5e8] sm:$0xff]
    %v266 = vld [vmem:[#allocation2 + $0x5f0] sm:$0xff]
    %v267 = vld [vmem:[#allocation2 + $0x5f8] sm:$0xff]
    %v268 = vld [vmem:[#allocation2 + $0x600] sm:$0xff]
    %v269 = vld [vmem:[#allocation2 + $0x608] sm:$0xff]
    %v270 = vld [vmem:[#allocation2 + $0x610] sm:$0xff]
    %v271 = vld [vmem:[#allocation2 + $0x618] sm:$0xff]
    %v272 = vld [vmem:[#allocation2 + $0x620] sm:$0xff]
    %v273 = vld [vmem:[#allocation2 + $0x628] sm:$0xff]
    %v274 = vld [vmem:[#allocation2 + $0x630] sm:$0xff]
    %v275 = vld [vmem:[#allocation2 + $0x638] sm:$0xff]
    %v276 = vld [vmem:[#allocation2 + $0x640] sm:$0xff]
    %v277 = vld [vmem:[#allocation2 + $0x648] sm:$0xff]
    %v278 = vld [vmem:[#allocation2 + $0x650] sm:$0xff]
    %v279 = vld [vmem:[#allocation2 + $0x658] sm:$0xff]
    %v280 = vld [vmem:[#allocation2 + $0x660] sm:$0xff]
    %v281 = vld [vmem:[#allocation2 + $0x668] sm:$0xff]
    %v282 = vld [vmem:[#allocation2 + $0x670] sm:$0xff]
    %v283 = vld [vmem:[#allocation2 + $0x678] sm:$0xff]
    %v284 = vld [vmem:[#allocation2 + $0x680] sm:$0xff]
    %v285 = vld [vmem:[#allocation2 + $0x688] sm:$0xff]
    %v286 = vld [vmem:[#allocation2 + $0x690] sm:$0xff]
    %v287 = vld [vmem:[#allocation2 + $0x698] sm:$0xff]
    %v288 = vld [vmem:[#allocation2 + $0x6a0] sm:$0xff]
    %v289 = vld [vmem:[#allocation2 + $0x6a8] sm:$0xff]
    %v290 = vld [vmem:[#allocation2 + $0x6b0] sm:$0xff]
    %v291 = vld [vmem:[#allocation2 + $0x6b8] sm:$0xff]
    %v292 = vld [vmem:[#allocation2 + $0x6c0] sm:$0xff]
    %v293 = vld [vmem:[#allocation2 + $0x6c8] sm:$0xff]
    %v294 = vld [vmem:[#allocation2 + $0x6d0] sm:$0xff]
    %v295 = vld [vmem:[#allocation2 + $0x6d8] sm:$0xff]
    %v296 = vld [vmem:[#allocation2 + $0x6e0] sm:$0xff]
    %v297 = vld [vmem:[#allocation2 + $0x6e8] sm:$0xff]
    %v298 = vld [vmem:[#allocation2 + $0x6f0] sm:$0xff]
    %v299 = vld [vmem:[#allocation2 + $0x6f8] sm:$0xff]
    %v300 = vld [vmem:[#allocation2 + $0x700] sm:$0xff]
    %v301 = vld [vmem:[#allocation2 + $0x708] sm:$0xff]
    %v302 = vld [vmem:[#allocation2 + $0x710] sm:$0xff]
    %v303 = vld [vmem:[#allocation2 + $0x718] sm:$0xff]
    %v304 = vld [vmem:[#allocation2 + $0x720] sm:$0xff]
    %v305 = vld [vmem:[#allocation2 + $0x728] sm:$0xff]
    %v306 = vld [vmem:[#allocation2 + $0x730] sm:$0xff]
    %v307 = vld [vmem:[#allocation2 + $0x738] sm:$0xff]
    %v308 = vld [vmem:[#allocation2 + $0x740] sm:$0xff]
    %v309 = vld [vmem:[#allocation2 + $0x748] sm:$0xff]
    %v310 = vld [vmem:[#allocation2 + $0x750] sm:$0xff]
    %v311 = vld [vmem:[#allocation2 + $0x758] sm:$0xff]
    %v312 = vld [vmem:[#allocation2 + $0x760] sm:$0xff]
    %v313 = vld [vmem:[#allocation2 + $0x768] sm:$0xff]
    %v314 = vld [vmem:[#allocation2 + $0x770] sm:$0xff]
    %v315 = vld [vmem:[#allocation2 + $0x778] sm:$0xff]
    %v316 = vld [vmem:[#allocation2 + $0x780] sm:$0xff]
    %v317 = vld [vmem:[#allocation2 + $0x788] sm:$0xff]
    %v318 = vld [vmem:[#allocation2 + $0x790] sm:$0xff]
    %v319 = vld [vmem:[#allocation2 + $0x798] sm:$0xff]
    %v320 = vld [vmem:[#allocation2 + $0x7a0] sm:$0xff]
    %v321 = vld [vmem:[#allocation2 + $0x7a8] sm:$0xff]
    %v322 = vld [vmem:[#allocation2 + $0x7b0] sm:$0xff]
    %v323 = vld [vmem:[#allocation2 + $0x7b8] sm:$0xff]
    %v324 = vld [vmem:[#allocation2 + $0x7c0] sm:$0xff]
    %v325 = vld [vmem:[#allocation2 + $0x7c8] sm:$0xff]
    %v326 = vld [vmem:[#allocation2 + $0x7d0] sm:$0xff]
    %v327 = vld [vmem:[#allocation2 + $0x7d8] sm:$0xff]
    %v328 = vld [vmem:[#allocation2 + $0x7e0] sm:$0xff]
    %v329 = vld [vmem:[#allocation2 + $0x7e8] sm:$0xff]
    %v330 = vld [vmem:[#allocation2 + $0x7f0] sm:$0xff]
    %v331 = vld [vmem:[#allocation2 + $0x7f8] sm:$0xff]
    %v332 = vld [vmem:[%s2] sm:$0xf]
    %v334 = vlaneseq
    %v335 = vshrl.u32 %v334, 7
    %v336 = vsub.s32 0, %v335
    %v337 = vrot.slane %v332, %v336
    %v338 = vlaneseq
    %v339 = vshrl.u32 %v338, 7
    %v340 = vsub.s32 1, %v339
    %v341 = vrot.slane %v332, %v340
    %v342 = vlaneseq
    %v343 = vshrl.u32 %v342, 7
    %v344 = vsub.s32 2, %v343
    %v345 = vrot.slane %v332, %v344
    %v346 = vlaneseq
    %v347 = vshrl.u32 %v346, 7
    %v348 = vsub.s32 3, %v347
    %v349 = vrot.slane %v332, %v348
    %v370 = vunpack.c.l.b16 %v60
    %v371 = vunpack.c.h.b16 %v60
    %v372 = vunpack.c.l.b16 %v61
    %v373 = vunpack.c.h.b16 %v61
    %v374 = vunpack.c.l.b16 %v62
    %v375 = vunpack.c.h.b16 %v62
    %v376 = vunpack.c.l.b16 %v63
    %v377 = vunpack.c.h.b16 %v63
    %v378 = vunpack.c.l.b16 %v64
    %v379 = vunpack.c.h.b16 %v64
    %v380 = vunpack.c.l.b16 %v65
    %v381 = vunpack.c.h.b16 %v65
    %v382 = vunpack.c.l.b16 %v66
    %v383 = vunpack.c.h.b16 %v66
    %v384 = vunpack.c.l.b16 %v67
    %v385 = vunpack.c.h.b16 %v67
    %v386 = vunpack.c.l.b16 %v68
    %v387 = vunpack.c.h.b16 %v68
    %v388 = vunpack.c.l.b16 %v69
    %v389 = vunpack.c.h.b16 %v69
    %v390 = vunpack.c.l.b16 %v70
    %v391 = vunpack.c.h.b16 %v70
    %v392 = vunpack.c.l.b16 %v71
    %v393 = vunpack.c.h.b16 %v71
    %v394 = vunpack.c.l.b16 %v72
    %v395 = vunpack.c.h.b16 %v72
    %v396 = vunpack.c.l.b16 %v73
    %v397 = vunpack.c.h.b16 %v73
    %v398 = vunpack.c.l.b16 %v74
    %v399 = vunpack.c.h.b16 %v74
    %v400 = vunpack.c.l.b16 %v75
    %v401 = vunpack.c.h.b16 %v75
    %v402 = vpack.c.b16 %v378, %v370
    %v403 = vpack.c.b16 %v379, %v371
    %v404 = vpack.c.b16 %v380, %v372
    %v405 = vpack.c.b16 %v381, %v373
    %v406 = vpack.c.b16 %v382, %v374
    %v407 = vpack.c.b16 %v383, %v375
    %v408 = vpack.c.b16 %v384, %v376
    %v409 = vpack.c.b16 %v385, %v377
    %v410 = vpack.c.b16 %v394, %v386
    %v411 = vpack.c.b16 %v395, %v387
    %v412 = vpack.c.b16 %v396, %v388
    %v413 = vpack.c.b16 %v397, %v389
    %v414 = vpack.c.b16 %v398, %v390
    %v415 = vpack.c.b16 %v399, %v391
    %v416 = vpack.c.b16 %v400, %v392
    %v417 = vpack.c.b16 %v401, %v393
    %v690 = vunpack.c.l.b16 %v76
    %v691 = vunpack.c.h.b16 %v76
    %v692 = vunpack.c.l.b16 %v77
    %v693 = vunpack.c.h.b16 %v77
    %v694 = vunpack.c.l.b16 %v78
    %v695 = vunpack.c.h.b16 %v78
    %v696 = vunpack.c.l.b16 %v79
    %v697 = vunpack.c.h.b16 %v79
    %v698 = vunpack.c.l.b16 %v80
    %v699 = vunpack.c.h.b16 %v80
    %v700 = vunpack.c.l.b16 %v81
    %v701 = vunpack.c.h.b16 %v81
    %v702 = vunpack.c.l.b16 %v82
    %v703 = vunpack.c.h.b16 %v82
    %v704 = vunpack.c.l.b16 %v83
    %v705 = vunpack.c.h.b16 %v83
    %v706 = vunpack.c.l.b16 %v84
    %v707 = vunpack.c.h.b16 %v84
    %v708 = vunpack.c.l.b16 %v85
    %v709 = vunpack.c.h.b16 %v85
    %v710 = vunpack.c.l.b16 %v86
    %v711 = vunpack.c.h.b16 %v86
    %v712 = vunpack.c.l.b16 %v87
    %v713 = vunpack.c.h.b16 %v87
    %v714 = vunpack.c.l.b16 %v88
    %v715 = vunpack.c.h.b16 %v88
    %v716 = vunpack.c.l.b16 %v89
    %v717 = vunpack.c.h.b16 %v89
    %v718 = vunpack.c.l.b16 %v90
    %v719 = vunpack.c.h.b16 %v90
    %v720 = vunpack.c.l.b16 %v91
    %v721 = vunpack.c.h.b16 %v91
    %v722 = vunpack.c.l.b16 %v92
    %v723 = vunpack.c.h.b16 %v92
    %v724 = vunpack.c.l.b16 %v93
    %v725 = vunpack.c.h.b16 %v93
    %v726 = vunpack.c.l.b16 %v94
    %v727 = vunpack.c.h.b16 %v94
    %v728 = vunpack.c.l.b16 %v95
    %v729 = vunpack.c.h.b16 %v95
    %v730 = vunpack.c.l.b16 %v96
    %v731 = vunpack.c.h.b16 %v96
    %v732 = vunpack.c.l.b16 %v97
    %v733 = vunpack.c.h.b16 %v97
    %v734 = vunpack.c.l.b16 %v98
    %v735 = vunpack.c.h.b16 %v98
    %v736 = vunpack.c.l.b16 %v99
    %v737 = vunpack.c.h.b16 %v99
    %v738 = vunpack.c.l.b16 %v100
    %v739 = vunpack.c.h.b16 %v100
    %v740 = vunpack.c.l.b16 %v101
    %v741 = vunpack.c.h.b16 %v101
    %v742 = vunpack.c.l.b16 %v102
    %v743 = vunpack.c.h.b16 %v102
    %v744 = vunpack.c.l.b16 %v103
    %v745 = vunpack.c.h.b16 %v103
    %v746 = vunpack.c.l.b16 %v104
    %v747 = vunpack.c.h.b16 %v104
    %v748 = vunpack.c.l.b16 %v105
    %v749 = vunpack.c.h.b16 %v105
    %v750 = vunpack.c.l.b16 %v106
    %v751 = vunpack.c.h.b16 %v106
    %v752 = vunpack.c.l.b16 %v107
    %v753 = vunpack.c.h.b16 %v107
    %v754 = vunpack.c.l.b16 %v108
    %v755 = vunpack.c.h.b16 %v108
    %v756 = vunpack.c.l.b16 %v109
    %v757 = vunpack.c.h.b16 %v109
    %v758 = vunpack.c.l.b16 %v110
    %v759 = vunpack.c.h.b16 %v110
    %v760 = vunpack.c.l.b16 %v111
    %v761 = vunpack.c.h.b16 %v111
    %v762 = vunpack.c.l.b16 %v112
    %v763 = vunpack.c.h.b16 %v112
    %v764 = vunpack.c.l.b16 %v113
    %v765 = vunpack.c.h.b16 %v113
    %v766 = vunpack.c.l.b16 %v114
    %v767 = vunpack.c.h.b16 %v114
    %v768 = vunpack.c.l.b16 %v115
    %v769 = vunpack.c.h.b16 %v115
    %v770 = vunpack.c.l.b16 %v116
    %v771 = vunpack.c.h.b16 %v116
    %v772 = vunpack.c.l.b16 %v117
    %v773 = vunpack.c.h.b16 %v117
    %v774 = vunpack.c.l.b16 %v118
    %v775 = vunpack.c.h.b16 %v118
    %v776 = vunpack.c.l.b16 %v119
    %v777 = vunpack.c.h.b16 %v119
    %v778 = vunpack.c.l.b16 %v120
    %v779 = vunpack.c.h.b16 %v120
    %v780 = vunpack.c.l.b16 %v121
    %v781 = vunpack.c.h.b16 %v121
    %v782 = vunpack.c.l.b16 %v122
    %v783 = vunpack.c.h.b16 %v122
    %v784 = vunpack.c.l.b16 %v123
    %v785 = vunpack.c.h.b16 %v123
    %v786 = vunpack.c.l.b16 %v124
    %v787 = vunpack.c.h.b16 %v124
    %v788 = vunpack.c.l.b16 %v125
    %v789 = vunpack.c.h.b16 %v125
    %v790 = vunpack.c.l.b16 %v126
    %v791 = vunpack.c.h.b16 %v126
    %v792 = vunpack.c.l.b16 %v127
    %v793 = vunpack.c.h.b16 %v127
    %v794 = vunpack.c.l.b16 %v128
    %v795 = vunpack.c.h.b16 %v128
    %v796 = vunpack.c.l.b16 %v129
    %v797 = vunpack.c.h.b16 %v129
    %v798 = vunpack.c.l.b16 %v130
    %v799 = vunpack.c.h.b16 %v130
    %v800 = vunpack.c.l.b16 %v131
    %v801 = vunpack.c.h.b16 %v131
    %v802 = vunpack.c.l.b16 %v132
    %v803 = vunpack.c.h.b16 %v132
    %v804 = vunpack.c.l.b16 %v133
    %v805 = vunpack.c.h.b16 %v133
    %v806 = vunpack.c.l.b16 %v134
    %v807 = vunpack.c.h.b16 %v134
    %v808 = vunpack.c.l.b16 %v135
    %v809 = vunpack.c.h.b16 %v135
    %v810 = vunpack.c.l.b16 %v136
    %v811 = vunpack.c.h.b16 %v136
    %v812 = vunpack.c.l.b16 %v137
    %v813 = vunpack.c.h.b16 %v137
    %v814 = vunpack.c.l.b16 %v138
    %v815 = vunpack.c.h.b16 %v138
    %v816 = vunpack.c.l.b16 %v139
    %v817 = vunpack.c.h.b16 %v139
    %v818 = vunpack.c.l.b16 %v140
    %v819 = vunpack.c.h.b16 %v140
    %v820 = vunpack.c.l.b16 %v141
    %v821 = vunpack.c.h.b16 %v141
    %v822 = vunpack.c.l.b16 %v142
    %v823 = vunpack.c.h.b16 %v142
    %v824 = vunpack.c.l.b16 %v143
    %v825 = vunpack.c.h.b16 %v143
    %v826 = vunpack.c.l.b16 %v144
    %v827 = vunpack.c.h.b16 %v144
    %v828 = vunpack.c.l.b16 %v145
    %v829 = vunpack.c.h.b16 %v145
    %v830 = vunpack.c.l.b16 %v146
    %v831 = vunpack.c.h.b16 %v146
    %v832 = vunpack.c.l.b16 %v147
    %v833 = vunpack.c.h.b16 %v147
    %v834 = vunpack.c.l.b16 %v148
    %v835 = vunpack.c.h.b16 %v148
    %v836 = vunpack.c.l.b16 %v149
    %v837 = vunpack.c.h.b16 %v149
    %v838 = vunpack.c.l.b16 %v150
    %v839 = vunpack.c.h.b16 %v150
    %v840 = vunpack.c.l.b16 %v151
    %v841 = vunpack.c.h.b16 %v151
    %v842 = vunpack.c.l.b16 %v152
    %v843 = vunpack.c.h.b16 %v152
    %v844 = vunpack.c.l.b16 %v153
    %v845 = vunpack.c.h.b16 %v153
    %v846 = vunpack.c.l.b16 %v154
    %v847 = vunpack.c.h.b16 %v154
    %v848 = vunpack.c.l.b16 %v155
    %v849 = vunpack.c.h.b16 %v155
    %v850 = vunpack.c.l.b16 %v156
    %v851 = vunpack.c.h.b16 %v156
    %v852 = vunpack.c.l.b16 %v157
    %v853 = vunpack.c.h.b16 %v157
    %v854 = vunpack.c.l.b16 %v158
    %v855 = vunpack.c.h.b16 %v158
    %v856 = vunpack.c.l.b16 %v159
    %v857 = vunpack.c.h.b16 %v159
    %v858 = vunpack.c.l.b16 %v160
    %v859 = vunpack.c.h.b16 %v160
    %v860 = vunpack.c.l.b16 %v161
    %v861 = vunpack.c.h.b16 %v161
    %v862 = vunpack.c.l.b16 %v162
    %v863 = vunpack.c.h.b16 %v162
    %v864 = vunpack.c.l.b16 %v163
    %v865 = vunpack.c.h.b16 %v163
    %v866 = vunpack.c.l.b16 %v164
    %v867 = vunpack.c.h.b16 %v164
    %v868 = vunpack.c.l.b16 %v165
    %v869 = vunpack.c.h.b16 %v165
    %v870 = vunpack.c.l.b16 %v166
    %v871 = vunpack.c.h.b16 %v166
    %v872 = vunpack.c.l.b16 %v167
    %v873 = vunpack.c.h.b16 %v167
    %v874 = vunpack.c.l.b16 %v168
    %v875 = vunpack.c.h.b16 %v168
    %v876 = vunpack.c.l.b16 %v169
    %v877 = vunpack.c.h.b16 %v169
    %v878 = vunpack.c.l.b16 %v170
    %v879 = vunpack.c.h.b16 %v170
    %v880 = vunpack.c.l.b16 %v171
    %v881 = vunpack.c.h.b16 %v171
    %v882 = vunpack.c.l.b16 %v172
    %v883 = vunpack.c.h.b16 %v172
    %v884 = vunpack.c.l.b16 %v173
    %v885 = vunpack.c.h.b16 %v173
    %v886 = vunpack.c.l.b16 %v174
    %v887 = vunpack.c.h.b16 %v174
    %v888 = vunpack.c.l.b16 %v175
    %v889 = vunpack.c.h.b16 %v175
    %v890 = vunpack.c.l.b16 %v176
    %v891 = vunpack.c.h.b16 %v176
    %v892 = vunpack.c.l.b16 %v177
    %v893 = vunpack.c.h.b16 %v177
    %v894 = vunpack.c.l.b16 %v178
    %v895 = vunpack.c.h.b16 %v178
    %v896 = vunpack.c.l.b16 %v179
    %v897 = vunpack.c.h.b16 %v179
    %v898 = vunpack.c.l.b16 %v180
    %v899 = vunpack.c.h.b16 %v180
    %v900 = vunpack.c.l.b16 %v181
    %v901 = vunpack.c.h.b16 %v181
    %v902 = vunpack.c.l.b16 %v182
    %v903 = vunpack.c.h.b16 %v182
    %v904 = vunpack.c.l.b16 %v183
    %v905 = vunpack.c.h.b16 %v183
    %v906 = vunpack.c.l.b16 %v184
    %v907 = vunpack.c.h.b16 %v184
    %v908 = vunpack.c.l.b16 %v185
    %v909 = vunpack.c.h.b16 %v185
    %v910 = vunpack.c.l.b16 %v186
    %v911 = vunpack.c.h.b16 %v186
    %v912 = vunpack.c.l.b16 %v187
    %v913 = vunpack.c.h.b16 %v187
    %v914 = vunpack.c.l.b16 %v188
    %v915 = vunpack.c.h.b16 %v188
    %v916 = vunpack.c.l.b16 %v189
    %v917 = vunpack.c.h.b16 %v189
    %v918 = vunpack.c.l.b16 %v190
    %v919 = vunpack.c.h.b16 %v190
    %v920 = vunpack.c.l.b16 %v191
    %v921 = vunpack.c.h.b16 %v191
    %v922 = vunpack.c.l.b16 %v192
    %v923 = vunpack.c.h.b16 %v192
    %v924 = vunpack.c.l.b16 %v193
    %v925 = vunpack.c.h.b16 %v193
    %v926 = vunpack.c.l.b16 %v194
    %v927 = vunpack.c.h.b16 %v194
    %v928 = vunpack.c.l.b16 %v195
    %v929 = vunpack.c.h.b16 %v195
    %v930 = vunpack.c.l.b16 %v196
    %v931 = vunpack.c.h.b16 %v196
    %v932 = vunpack.c.l.b16 %v197
    %v933 = vunpack.c.h.b16 %v197
    %v934 = vunpack.c.l.b16 %v198
    %v935 = vunpack.c.h.b16 %v198
    %v936 = vunpack.c.l.b16 %v199
    %v937 = vunpack.c.h.b16 %v199
    %v938 = vunpack.c.l.b16 %v200
    %v939 = vunpack.c.h.b16 %v200
    %v940 = vunpack.c.l.b16 %v201
    %v941 = vunpack.c.h.b16 %v201
    %v942 = vunpack.c.l.b16 %v202
    %v943 = vunpack.c.h.b16 %v202
    %v944 = vunpack.c.l.b16 %v203
    %v945 = vunpack.c.h.b16 %v203
    %v946 = vunpack.c.l.b16 %v204
    %v947 = vunpack.c.h.b16 %v204
    %v948 = vunpack.c.l.b16 %v205
    %v949 = vunpack.c.h.b16 %v205
    %v950 = vunpack.c.l.b16 %v206
    %v951 = vunpack.c.h.b16 %v206
    %v952 = vunpack.c.l.b16 %v207
    %v953 = vunpack.c.h.b16 %v207
    %v954 = vunpack.c.l.b16 %v208
    %v955 = vunpack.c.h.b16 %v208
    %v956 = vunpack.c.l.b16 %v209
    %v957 = vunpack.c.h.b16 %v209
    %v958 = vunpack.c.l.b16 %v210
    %v959 = vunpack.c.h.b16 %v210
    %v960 = vunpack.c.l.b16 %v211
    %v961 = vunpack.c.h.b16 %v211
    %v962 = vunpack.c.l.b16 %v212
    %v963 = vunpack.c.h.b16 %v212
    %v964 = vunpack.c.l.b16 %v213
    %v965 = vunpack.c.h.b16 %v213
    %v966 = vunpack.c.l.b16 %v214
    %v967 = vunpack.c.h.b16 %v214
    %v968 = vunpack.c.l.b16 %v215
    %v969 = vunpack.c.h.b16 %v215
    %v970 = vunpack.c.l.b16 %v216
    %v971 = vunpack.c.h.b16 %v216
    %v972 = vunpack.c.l.b16 %v217
    %v973 = vunpack.c.h.b16 %v217
    %v974 = vunpack.c.l.b16 %v218
    %v975 = vunpack.c.h.b16 %v218
    %v976 = vunpack.c.l.b16 %v219
    %v977 = vunpack.c.h.b16 %v219
    %v978 = vunpack.c.l.b16 %v220
    %v979 = vunpack.c.h.b16 %v220
    %v980 = vunpack.c.l.b16 %v221
    %v981 = vunpack.c.h.b16 %v221
    %v982 = vunpack.c.l.b16 %v222
    %v983 = vunpack.c.h.b16 %v222
    %v984 = vunpack.c.l.b16 %v223
    %v985 = vunpack.c.h.b16 %v223
    %v986 = vunpack.c.l.b16 %v224
    %v987 = vunpack.c.h.b16 %v224
    %v988 = vunpack.c.l.b16 %v225
    %v989 = vunpack.c.h.b16 %v225
    %v990 = vunpack.c.l.b16 %v226
    %v991 = vunpack.c.h.b16 %v226
    %v992 = vunpack.c.l.b16 %v227
    %v993 = vunpack.c.h.b16 %v227
    %v994 = vunpack.c.l.b16 %v228
    %v995 = vunpack.c.h.b16 %v228
    %v996 = vunpack.c.l.b16 %v229
    %v997 = vunpack.c.h.b16 %v229
    %v998 = vunpack.c.l.b16 %v230
    %v999 = vunpack.c.h.b16 %v230
    %v1000 = vunpack.c.l.b16 %v231
    %v1001 = vunpack.c.h.b16 %v231
    %v1002 = vunpack.c.l.b16 %v232
    %v1003 = vunpack.c.h.b16 %v232
    %v1004 = vunpack.c.l.b16 %v233
    %v1005 = vunpack.c.h.b16 %v233
    %v1006 = vunpack.c.l.b16 %v234
    %v1007 = vunpack.c.h.b16 %v234
    %v1008 = vunpack.c.l.b16 %v235
    %v1009 = vunpack.c.h.b16 %v235
    %v1010 = vunpack.c.l.b16 %v236
    %v1011 = vunpack.c.h.b16 %v236
    %v1012 = vunpack.c.l.b16 %v237
    %v1013 = vunpack.c.h.b16 %v237
    %v1014 = vunpack.c.l.b16 %v238
    %v1015 = vunpack.c.h.b16 %v238
    %v1016 = vunpack.c.l.b16 %v239
    %v1017 = vunpack.c.h.b16 %v239
    %v1018 = vunpack.c.l.b16 %v240
    %v1019 = vunpack.c.h.b16 %v240
    %v1020 = vunpack.c.l.b16 %v241
    %v1021 = vunpack.c.h.b16 %v241
    %v1022 = vunpack.c.l.b16 %v242
    %v1023 = vunpack.c.h.b16 %v242
    %v1024 = vunpack.c.l.b16 %v243
    %v1025 = vunpack.c.h.b16 %v243
    %v1026 = vunpack.c.l.b16 %v244
    %v1027 = vunpack.c.h.b16 %v244
    %v1028 = vunpack.c.l.b16 %v245
    %v1029 = vunpack.c.h.b16 %v245
    %v1030 = vunpack.c.l.b16 %v246
    %v1031 = vunpack.c.h.b16 %v246
    %v1032 = vunpack.c.l.b16 %v247
    %v1033 = vunpack.c.h.b16 %v247
    %v1034 = vunpack.c.l.b16 %v248
    %v1035 = vunpack.c.h.b16 %v248
    %v1036 = vunpack.c.l.b16 %v249
    %v1037 = vunpack.c.h.b16 %v249
    %v1038 = vunpack.c.l.b16 %v250
    %v1039 = vunpack.c.h.b16 %v250
    %v1040 = vunpack.c.l.b16 %v251
    %v1041 = vunpack.c.h.b16 %v251
    %v1042 = vunpack.c.l.b16 %v252
    %v1043 = vunpack.c.h.b16 %v252
    %v1044 = vunpack.c.l.b16 %v253
    %v1045 = vunpack.c.h.b16 %v253
    %v1046 = vunpack.c.l.b16 %v254
    %v1047 = vunpack.c.h.b16 %v254
    %v1048 = vunpack.c.l.b16 %v255
    %v1049 = vunpack.c.h.b16 %v255
    %v1050 = vunpack.c.l.b16 %v256
    %v1051 = vunpack.c.h.b16 %v256
    %v1052 = vunpack.c.l.b16 %v257
    %v1053 = vunpack.c.h.b16 %v257
    %v1054 = vunpack.c.l.b16 %v258
    %v1055 = vunpack.c.h.b16 %v258
    %v1056 = vunpack.c.l.b16 %v259
    %v1057 = vunpack.c.h.b16 %v259
    %v1058 = vunpack.c.l.b16 %v260
    %v1059 = vunpack.c.h.b16 %v260
    %v1060 = vunpack.c.l.b16 %v261
    %v1061 = vunpack.c.h.b16 %v261
    %v1062 = vunpack.c.l.b16 %v262
    %v1063 = vunpack.c.h.b16 %v262
    %v1064 = vunpack.c.l.b16 %v263
    %v1065 = vunpack.c.h.b16 %v263
    %v1066 = vunpack.c.l.b16 %v264
    %v1067 = vunpack.c.h.b16 %v264
    %v1068 = vunpack.c.l.b16 %v265
    %v1069 = vunpack.c.h.b16 %v265
    %v1070 = vunpack.c.l.b16 %v266
    %v1071 = vunpack.c.h.b16 %v266
    %v1072 = vunpack.c.l.b16 %v267
    %v1073 = vunpack.c.h.b16 %v267
    %v1074 = vunpack.c.l.b16 %v268
    %v1075 = vunpack.c.h.b16 %v268
    %v1076 = vunpack.c.l.b16 %v269
    %v1077 = vunpack.c.h.b16 %v269
    %v1078 = vunpack.c.l.b16 %v270
    %v1079 = vunpack.c.h.b16 %v270
    %v1080 = vunpack.c.l.b16 %v271
    %v1081 = vunpack.c.h.b16 %v271
    %v1082 = vunpack.c.l.b16 %v272
    %v1083 = vunpack.c.h.b16 %v272
    %v1084 = vunpack.c.l.b16 %v273
    %v1085 = vunpack.c.h.b16 %v273
    %v1086 = vunpack.c.l.b16 %v274
    %v1087 = vunpack.c.h.b16 %v274
    %v1088 = vunpack.c.l.b16 %v275
    %v1089 = vunpack.c.h.b16 %v275
    %v1090 = vunpack.c.l.b16 %v276
    %v1091 = vunpack.c.h.b16 %v276
    %v1092 = vunpack.c.l.b16 %v277
    %v1093 = vunpack.c.h.b16 %v277
    %v1094 = vunpack.c.l.b16 %v278
    %v1095 = vunpack.c.h.b16 %v278
    %v1096 = vunpack.c.l.b16 %v279
    %v1097 = vunpack.c.h.b16 %v279
    %v1098 = vunpack.c.l.b16 %v280
    %v1099 = vunpack.c.h.b16 %v280
    %v1100 = vunpack.c.l.b16 %v281
    %v1101 = vunpack.c.h.b16 %v281
    %v1102 = vunpack.c.l.b16 %v282
    %v1103 = vunpack.c.h.b16 %v282
    %v1104 = vunpack.c.l.b16 %v283
    %v1105 = vunpack.c.h.b16 %v283
    %v1106 = vunpack.c.l.b16 %v284
    %v1107 = vunpack.c.h.b16 %v284
    %v1108 = vunpack.c.l.b16 %v285
    %v1109 = vunpack.c.h.b16 %v285
    %v1110 = vunpack.c.l.b16 %v286
    %v1111 = vunpack.c.h.b16 %v286
    %v1112 = vunpack.c.l.b16 %v287
    %v1113 = vunpack.c.h.b16 %v287
    %v1114 = vunpack.c.l.b16 %v288
    %v1115 = vunpack.c.h.b16 %v288
    %v1116 = vunpack.c.l.b16 %v289
    %v1117 = vunpack.c.h.b16 %v289
    %v1118 = vunpack.c.l.b16 %v290
    %v1119 = vunpack.c.h.b16 %v290
    %v1120 = vunpack.c.l.b16 %v291
    %v1121 = vunpack.c.h.b16 %v291
    %v1122 = vunpack.c.l.b16 %v292
    %v1123 = vunpack.c.h.b16 %v292
    %v1124 = vunpack.c.l.b16 %v293
    %v1125 = vunpack.c.h.b16 %v293
    %v1126 = vunpack.c.l.b16 %v294
    %v1127 = vunpack.c.h.b16 %v294
    %v1128 = vunpack.c.l.b16 %v295
    %v1129 = vunpack.c.h.b16 %v295
    %v1130 = vunpack.c.l.b16 %v296
    %v1131 = vunpack.c.h.b16 %v296
    %v1132 = vunpack.c.l.b16 %v297
    %v1133 = vunpack.c.h.b16 %v297
    %v1134 = vunpack.c.l.b16 %v298
    %v1135 = vunpack.c.h.b16 %v298
    %v1136 = vunpack.c.l.b16 %v299
    %v1137 = vunpack.c.h.b16 %v299
    %v1138 = vunpack.c.l.b16 %v300
    %v1139 = vunpack.c.h.b16 %v300
    %v1140 = vunpack.c.l.b16 %v301
    %v1141 = vunpack.c.h.b16 %v301
    %v1142 = vunpack.c.l.b16 %v302
    %v1143 = vunpack.c.h.b16 %v302
    %v1144 = vunpack.c.l.b16 %v303
    %v1145 = vunpack.c.h.b16 %v303
    %v1146 = vunpack.c.l.b16 %v304
    %v1147 = vunpack.c.h.b16 %v304
    %v1148 = vunpack.c.l.b16 %v305
    %v1149 = vunpack.c.h.b16 %v305
    %v1150 = vunpack.c.l.b16 %v306
    %v1151 = vunpack.c.h.b16 %v306
    %v1152 = vunpack.c.l.b16 %v307
    %v1153 = vunpack.c.h.b16 %v307
    %v1154 = vunpack.c.l.b16 %v308
    %v1155 = vunpack.c.h.b16 %v308
    %v1156 = vunpack.c.l.b16 %v309
    %v1157 = vunpack.c.h.b16 %v309
    %v1158 = vunpack.c.l.b16 %v310
    %v1159 = vunpack.c.h.b16 %v310
    %v1160 = vunpack.c.l.b16 %v311
    %v1161 = vunpack.c.h.b16 %v311
    %v1162 = vunpack.c.l.b16 %v312
    %v1163 = vunpack.c.h.b16 %v312
    %v1164 = vunpack.c.l.b16 %v313
    %v1165 = vunpack.c.h.b16 %v313
    %v1166 = vunpack.c.l.b16 %v314
    %v1167 = vunpack.c.h.b16 %v314
    %v1168 = vunpack.c.l.b16 %v315
    %v1169 = vunpack.c.h.b16 %v315
    %v1170 = vunpack.c.l.b16 %v316
    %v1171 = vunpack.c.h.b16 %v316
    %v1172 = vunpack.c.l.b16 %v317
    %v1173 = vunpack.c.h.b16 %v317
    %v1174 = vunpack.c.l.b16 %v318
    %v1175 = vunpack.c.h.b16 %v318
    %v1176 = vunpack.c.l.b16 %v319
    %v1177 = vunpack.c.h.b16 %v319
    %v1178 = vunpack.c.l.b16 %v320
    %v1179 = vunpack.c.h.b16 %v320
    %v1180 = vunpack.c.l.b16 %v321
    %v1181 = vunpack.c.h.b16 %v321
    %v1182 = vunpack.c.l.b16 %v322
    %v1183 = vunpack.c.h.b16 %v322
    %v1184 = vunpack.c.l.b16 %v323
    %v1185 = vunpack.c.h.b16 %v323
    %v1186 = vunpack.c.l.b16 %v324
    %v1187 = vunpack.c.h.b16 %v324
    %v1188 = vunpack.c.l.b16 %v325
    %v1189 = vunpack.c.h.b16 %v325
    %v1190 = vunpack.c.l.b16 %v326
    %v1191 = vunpack.c.h.b16 %v326
    %v1192 = vunpack.c.l.b16 %v327
    %v1193 = vunpack.c.h.b16 %v327
    %v1194 = vunpack.c.l.b16 %v328
    %v1195 = vunpack.c.h.b16 %v328
    %v1196 = vunpack.c.l.b16 %v329
    %v1197 = vunpack.c.h.b16 %v329
    %v1198 = vunpack.c.l.b16 %v330
    %v1199 = vunpack.c.h.b16 %v330
    %v1200 = vunpack.c.l.b16 %v331
    %v1201 = vunpack.c.h.b16 %v331
    %v1202 = vpack.c.b16 %v694, %v690
    %v1203 = vpack.c.b16 %v695, %v691
    %v1204 = vpack.c.b16 %v696, %v692
    %v1205 = vpack.c.b16 %v697, %v693
    %v1206 = vpack.c.b16 %v702, %v698
    %v1207 = vpack.c.b16 %v703, %v699
    %v1208 = vpack.c.b16 %v704, %v700
    %v1209 = vpack.c.b16 %v705, %v701
    %v1210 = vpack.c.b16 %v710, %v706
    %v1211 = vpack.c.b16 %v711, %v707
    %v1212 = vpack.c.b16 %v712, %v708
    %v1213 = vpack.c.b16 %v713, %v709
    %v1214 = vpack.c.b16 %v718, %v714
    %v1215 = vpack.c.b16 %v719, %v715
    %v1216 = vpack.c.b16 %v720, %v716
    %v1217 = vpack.c.b16 %v721, %v717
    %v1218 = vpack.c.b16 %v726, %v722
    %v1219 = vpack.c.b16 %v727, %v723
    %v1220 = vpack.c.b16 %v728, %v724
    %v1221 = vpack.c.b16 %v729, %v725
    %v1222 = vpack.c.b16 %v734, %v730
    %v1223 = vpack.c.b16 %v735, %v731
    %v1224 = vpack.c.b16 %v736, %v732
    %v1225 = vpack.c.b16 %v737, %v733
    %v1226 = vpack.c.b16 %v742, %v738
    %v1227 = vpack.c.b16 %v743, %v739
    %v1228 = vpack.c.b16 %v744, %v740
    %v1229 = vpack.c.b16 %v745, %v741
    %v1230 = vpack.c.b16 %v750, %v746
    %v1231 = vpack.c.b16 %v751, %v747
    %v1232 = vpack.c.b16 %v752, %v748
    %v1233 = vpack.c.b16 %v753, %v749
    %v1234 = vpack.c.b16 %v758, %v754
    %v1235 = vpack.c.b16 %v759, %v755
    %v1236 = vpack.c.b16 %v760, %v756
    %v1237 = vpack.c.b16 %v761, %v757
    %v1238 = vpack.c.b16 %v766, %v762
    %v1239 = vpack.c.b16 %v767, %v763
    %v1240 = vpack.c.b16 %v768, %v764
    %v1241 = vpack.c.b16 %v769, %v765
    %v1242 = vpack.c.b16 %v774, %v770
    %v1243 = vpack.c.b16 %v775, %v771
    %v1244 = vpack.c.b16 %v776, %v772
    %v1245 = vpack.c.b16 %v777, %v773
    %v1246 = vpack.c.b16 %v782, %v778
    %v1247 = vpack.c.b16 %v783, %v779
    %v1248 = vpack.c.b16 %v784, %v780
    %v1249 = vpack.c.b16 %v785, %v781
    %v1250 = vpack.c.b16 %v790, %v786
    %v1251 = vpack.c.b16 %v791, %v787
    %v1252 = vpack.c.b16 %v792, %v788
    %v1253 = vpack.c.b16 %v793, %v789
    %v1254 = vpack.c.b16 %v798, %v794
    %v1255 = vpack.c.b16 %v799, %v795
    %v1256 = vpack.c.b16 %v800, %v796
    %v1257 = vpack.c.b16 %v801, %v797
    %v1258 = vpack.c.b16 %v806, %v802
    %v1259 = vpack.c.b16 %v807, %v803
    %v1260 = vpack.c.b16 %v808, %v804
    %v1261 = vpack.c.b16 %v809, %v805
    %v1262 = vpack.c.b16 %v814, %v810
    %v1263 = vpack.c.b16 %v815, %v811
    %v1264 = vpack.c.b16 %v816, %v812
    %v1265 = vpack.c.b16 %v817, %v813
    %v1266 = vpack.c.b16 %v822, %v818
    %v1267 = vpack.c.b16 %v823, %v819
    %v1268 = vpack.c.b16 %v824, %v820
    %v1269 = vpack.c.b16 %v825, %v821
    %v1270 = vpack.c.b16 %v830, %v826
    %v1271 = vpack.c.b16 %v831, %v827
    %v1272 = vpack.c.b16 %v832, %v828
    %v1273 = vpack.c.b16 %v833, %v829
    %v1274 = vpack.c.b16 %v838, %v834
    %v1275 = vpack.c.b16 %v839, %v835
    %v1276 = vpack.c.b16 %v840, %v836
    %v1277 = vpack.c.b16 %v841, %v837
    %v1278 = vpack.c.b16 %v846, %v842
    %v1279 = vpack.c.b16 %v847, %v843
    %v1280 = vpack.c.b16 %v848, %v844
    %v1281 = vpack.c.b16 %v849, %v845
    %v1282 = vpack.c.b16 %v854, %v850
    %v1283 = vpack.c.b16 %v855, %v851
    %v1284 = vpack.c.b16 %v856, %v852
    %v1285 = vpack.c.b16 %v857, %v853
    %v1286 = vpack.c.b16 %v862, %v858
    %v1287 = vpack.c.b16 %v863, %v859
    %v1288 = vpack.c.b16 %v864, %v860
    %v1289 = vpack.c.b16 %v865, %v861
    %v1290 = vpack.c.b16 %v870, %v866
    %v1291 = vpack.c.b16 %v871, %v867
    %v1292 = vpack.c.b16 %v872, %v868
    %v1293 = vpack.c.b16 %v873, %v869
    %v1294 = vpack.c.b16 %v878, %v874
    %v1295 = vpack.c.b16 %v879, %v875
    %v1296 = vpack.c.b16 %v880, %v876
    %v1297 = vpack.c.b16 %v881, %v877
    %v1298 = vpack.c.b16 %v886, %v882
    %v1299 = vpack.c.b16 %v887, %v883
    %v1300 = vpack.c.b16 %v888, %v884
    %v1301 = vpack.c.b16 %v889, %v885
    %v1302 = vpack.c.b16 %v894, %v890
    %v1303 = vpack.c.b16 %v895, %v891
    %v1304 = vpack.c.b16 %v896, %v892
    %v1305 = vpack.c.b16 %v897, %v893
    %v1306 = vpack.c.b16 %v902, %v898
    %v1307 = vpack.c.b16 %v903, %v899
    %v1308 = vpack.c.b16 %v904, %v900
    %v1309 = vpack.c.b16 %v905, %v901
    %v1310 = vpack.c.b16 %v910, %v906
    %v1311 = vpack.c.b16 %v911, %v907
    %v1312 = vpack.c.b16 %v912, %v908
    %v1313 = vpack.c.b16 %v913, %v909
    %v1314 = vpack.c.b16 %v918, %v914
    %v1315 = vpack.c.b16 %v919, %v915
    %v1316 = vpack.c.b16 %v920, %v916
    %v1317 = vpack.c.b16 %v921, %v917
    %v1318 = vpack.c.b16 %v926, %v922
    %v1319 = vpack.c.b16 %v927, %v923
    %v1320 = vpack.c.b16 %v928, %v924
    %v1321 = vpack.c.b16 %v929, %v925
    %v1322 = vpack.c.b16 %v934, %v930
    %v1323 = vpack.c.b16 %v935, %v931
    %v1324 = vpack.c.b16 %v936, %v932
    %v1325 = vpack.c.b16 %v937, %v933
    %v1326 = vpack.c.b16 %v942, %v938
    %v1327 = vpack.c.b16 %v943, %v939
    %v1328 = vpack.c.b16 %v944, %v940
    %v1329 = vpack.c.b16 %v945, %v941
    %v1330 = vpack.c.b16 %v950, %v946
    %v1331 = vpack.c.b16 %v951, %v947
    %v1332 = vpack.c.b16 %v952, %v948
    %v1333 = vpack.c.b16 %v953, %v949
    %v1334 = vpack.c.b16 %v958, %v954
    %v1335 = vpack.c.b16 %v959, %v955
    %v1336 = vpack.c.b16 %v960, %v956
    %v1337 = vpack.c.b16 %v961, %v957
    %v1338 = vpack.c.b16 %v966, %v962
    %v1339 = vpack.c.b16 %v967, %v963
    %v1340 = vpack.c.b16 %v968, %v964
    %v1341 = vpack.c.b16 %v969, %v965
    %v1342 = vpack.c.b16 %v974, %v970
    %v1343 = vpack.c.b16 %v975, %v971
    %v1344 = vpack.c.b16 %v976, %v972
    %v1345 = vpack.c.b16 %v977, %v973
    %v1346 = vpack.c.b16 %v982, %v978
    %v1347 = vpack.c.b16 %v983, %v979
    %v1348 = vpack.c.b16 %v984, %v980
    %v1349 = vpack.c.b16 %v985, %v981
    %v1350 = vpack.c.b16 %v990, %v986
    %v1351 = vpack.c.b16 %v991, %v987
    %v1352 = vpack.c.b16 %v992, %v988
    %v1353 = vpack.c.b16 %v993, %v989
    %v1354 = vpack.c.b16 %v998, %v994
    %v1355 = vpack.c.b16 %v999, %v995
    %v1356 = vpack.c.b16 %v1000, %v996
    %v1357 = vpack.c.b16 %v1001, %v997
    %v1358 = vpack.c.b16 %v1006, %v1002
    %v1359 = vpack.c.b16 %v1007, %v1003
    %v1360 = vpack.c.b16 %v1008, %v1004
    %v1361 = vpack.c.b16 %v1009, %v1005
    %v1362 = vpack.c.b16 %v1014, %v1010
    %v1363 = vpack.c.b16 %v1015, %v1011
    %v1364 = vpack.c.b16 %v1016, %v1012
    %v1365 = vpack.c.b16 %v1017, %v1013
    %v1366 = vpack.c.b16 %v1022, %v1018
    %v1367 = vpack.c.b16 %v1023, %v1019
    %v1368 = vpack.c.b16 %v1024, %v1020
    %v1369 = vpack.c.b16 %v1025, %v1021
    %v1370 = vpack.c.b16 %v1030, %v1026
    %v1371 = vpack.c.b16 %v1031, %v1027
    %v1372 = vpack.c.b16 %v1032, %v1028
    %v1373 = vpack.c.b16 %v1033, %v1029
    %v1374 = vpack.c.b16 %v1038, %v1034
    %v1375 = vpack.c.b16 %v1039, %v1035
    %v1376 = vpack.c.b16 %v1040, %v1036
    %v1377 = vpack.c.b16 %v1041, %v1037
    %v1378 = vpack.c.b16 %v1046, %v1042
    %v1379 = vpack.c.b16 %v1047, %v1043
    %v1380 = vpack.c.b16 %v1048, %v1044
    %v1381 = vpack.c.b16 %v1049, %v1045
    %v1382 = vpack.c.b16 %v1054, %v1050
    %v1383 = vpack.c.b16 %v1055, %v1051
    %v1384 = vpack.c.b16 %v1056, %v1052
    %v1385 = vpack.c.b16 %v1057, %v1053
    %v1386 = vpack.c.b16 %v1062, %v1058
    %v1387 = vpack.c.b16 %v1063, %v1059
    %v1388 = vpack.c.b16 %v1064, %v1060
    %v1389 = vpack.c.b16 %v1065, %v1061
    %v1390 = vpack.c.b16 %v1070, %v1066
    %v1391 = vpack.c.b16 %v1071, %v1067
    %v1392 = vpack.c.b16 %v1072, %v1068
    %v1393 = vpack.c.b16 %v1073, %v1069
    %v1394 = vpack.c.b16 %v1078, %v1074
    %v1395 = vpack.c.b16 %v1079, %v1075
    %v1396 = vpack.c.b16 %v1080, %v1076
    %v1397 = vpack.c.b16 %v1081, %v1077
    %v1398 = vpack.c.b16 %v1086, %v1082
    %v1399 = vpack.c.b16 %v1087, %v1083
    %v1400 = vpack.c.b16 %v1088, %v1084
    %v1401 = vpack.c.b16 %v1089, %v1085
    %v1402 = vpack.c.b16 %v1094, %v1090
    %v1403 = vpack.c.b16 %v1095, %v1091
    %v1404 = vpack.c.b16 %v1096, %v1092
    %v1405 = vpack.c.b16 %v1097, %v1093
    %v1406 = vpack.c.b16 %v1102, %v1098
    %v1407 = vpack.c.b16 %v1103, %v1099
    %v1408 = vpack.c.b16 %v1104, %v1100
    %v1409 = vpack.c.b16 %v1105, %v1101
    %v1410 = vpack.c.b16 %v1110, %v1106
    %v1411 = vpack.c.b16 %v1111, %v1107
    %v1412 = vpack.c.b16 %v1112, %v1108
    %v1413 = vpack.c.b16 %v1113, %v1109
    %v1414 = vpack.c.b16 %v1118, %v1114
    %v1415 = vpack.c.b16 %v1119, %v1115
    %v1416 = vpack.c.b16 %v1120, %v1116
    %v1417 = vpack.c.b16 %v1121, %v1117
    %v1418 = vpack.c.b16 %v1126, %v1122
    %v1419 = vpack.c.b16 %v1127, %v1123
    %v1420 = vpack.c.b16 %v1128, %v1124
    %v1421 = vpack.c.b16 %v1129, %v1125
    %v1422 = vpack.c.b16 %v1134, %v1130
    %v1423 = vpack.c.b16 %v1135, %v1131
    %v1424 = vpack.c.b16 %v1136, %v1132
    %v1425 = vpack.c.b16 %v1137, %v1133
    %v1426 = vpack.c.b16 %v1142, %v1138
    %v1427 = vpack.c.b16 %v1143, %v1139
    %v1428 = vpack.c.b16 %v1144, %v1140
    %v1429 = vpack.c.b16 %v1145, %v1141
    %v1430 = vpack.c.b16 %v1150, %v1146
    %v1431 = vpack.c.b16 %v1151, %v1147
    %v1432 = vpack.c.b16 %v1152, %v1148
    %v1433 = vpack.c.b16 %v1153, %v1149
    %v1434 = vpack.c.b16 %v1158, %v1154
    %v1435 = vpack.c.b16 %v1159, %v1155
    %v1436 = vpack.c.b16 %v1160, %v1156
    %v1437 = vpack.c.b16 %v1161, %v1157
    %v1438 = vpack.c.b16 %v1166, %v1162
    %v1439 = vpack.c.b16 %v1167, %v1163
    %v1440 = vpack.c.b16 %v1168, %v1164
    %v1441 = vpack.c.b16 %v1169, %v1165
    %v1442 = vpack.c.b16 %v1174, %v1170
    %v1443 = vpack.c.b16 %v1175, %v1171
    %v1444 = vpack.c.b16 %v1176, %v1172
    %v1445 = vpack.c.b16 %v1177, %v1173
    %v1446 = vpack.c.b16 %v1182, %v1178
    %v1447 = vpack.c.b16 %v1183, %v1179
    %v1448 = vpack.c.b16 %v1184, %v1180
    %v1449 = vpack.c.b16 %v1185, %v1181
    %v1450 = vpack.c.b16 %v1190, %v1186
    %v1451 = vpack.c.b16 %v1191, %v1187
    %v1452 = vpack.c.b16 %v1192, %v1188
    %v1453 = vpack.c.b16 %v1193, %v1189
    %v1454 = vpack.c.b16 %v1198, %v1194
    %v1455 = vpack.c.b16 %v1199, %v1195
    %v1456 = vpack.c.b16 %v1200, %v1196
    %v1457 = vpack.c.b16 %v1201, %v1197
    %1714 = vmatprep.subr.bf16.mxu0 %v1203
    %1715 = vmatpush1.bf16.msra.mxu0 %v1202
    %1716 = vmatprep.subr.bf16.mxu0 %v1207
    %1717 = vmatpush1.bf16.msra.mxu0 %v1206
    %1718 = vmatprep.subr.bf16.mxu0 %v1211
    %1719 = vmatpush1.bf16.msra.mxu0 %v1210
    %1720 = vmatprep.subr.bf16.mxu0 %v1215
    %1721 = vmatpush1.bf16.msra.mxu0 %v1214
    %1722 = vmatprep.subr.bf16.mxu0 %v1219
    %1723 = vmatpush1.bf16.msra.mxu0 %v1218
    %1724 = vmatprep.subr.bf16.mxu0 %v1223
    %1725 = vmatpush1.bf16.msra.mxu0 %v1222
    %1726 = vmatprep.subr.bf16.mxu0 %v1227
    %1727 = vmatpush1.bf16.msra.mxu0 %v1226
    %1728 = vmatprep.subr.bf16.mxu0 %v1231
    %1729 = vmatpush1.bf16.msra.mxu0 %v1230
    %1730 = vmatprep.subr.bf16.mxu0 %v1235
    %1731 = vmatpush1.bf16.msra.mxu0 %v1234
    %1732 = vmatprep.subr.bf16.mxu0 %v1239
    %1733 = vmatpush1.bf16.msra.mxu0 %v1238
    %1734 = vmatprep.subr.bf16.mxu0 %v1243
    %1735 = vmatpush1.bf16.msra.mxu0 %v1242
    %1736 = vmatprep.subr.bf16.mxu0 %v1247
    %1737 = vmatpush1.bf16.msra.mxu0 %v1246
    %1738 = vmatprep.subr.bf16.mxu0 %v1251
    %1739 = vmatpush1.bf16.msra.mxu0 %v1250
    %1740 = vmatprep.subr.bf16.mxu0 %v1255
    %1741 = vmatpush1.bf16.msra.mxu0 %v1254
    %1742 = vmatprep.subr.bf16.mxu0 %v1259
    %1743 = vmatpush1.bf16.msra.mxu0 %v1258
    %1744 = vmatprep.subr.bf16.mxu0 %v1263
    %1745 = vmatpush1.bf16.msra.mxu0 %v1262
    %1746 = vmatprep.mubr.bf16.mxu0 %v403
    %1747 = vmatmul.mubr.bf16.gmra.mrb[0].mxu0 %v402
    %v1748 = vpop.f32.mrb[0].mxu0
    %v1749 = vadd.f32 %v337, %v1748
    %v1750 = vpop.f32.mrb[0].mxu0
    %v1751 = vadd.f32 %v341, %v1750
    %v1752 = vpop.f32.mrb[0].mxu0
    %v1753 = vadd.f32 %v337, %v1752
    %v1754 = vpop.f32.mrb[0].mxu0
    %v1755 = vadd.f32 %v341, %v1754
    %1756 = vmatprep.mubr.bf16.mxu0 %v411
    %1757 = vmatmul.mubr.bf16.gmra.mrb[0].mxu0 %v410
    %v1758 = vpop.f32.mrb[0].mxu0
    %v1759 = vadd.f32 %v337, %v1758
    %v1760 = vpop.f32.mrb[0].mxu0
    %v1761 = vadd.f32 %v341, %v1760
    %v1762 = vpop.f32.mrb[0].mxu0
    %v1763 = vadd.f32 %v337, %v1762
    %v1764 = vpop.f32.mrb[0].mxu0
    %v1765 = vadd.f32 %v341, %v1764
    %1766 = vdwg.mxu0
    %1767 = vmatprep.subr.bf16.mxu0 %v1267
    %1768 = vmatpush1.bf16.msra.mxu0 %v1266
    %1769 = vmatprep.subr.bf16.mxu0 %v1271
    %1770 = vmatpush1.bf16.msra.mxu0 %v1270
    %1771 = vmatprep.subr.bf16.mxu0 %v1275
    %1772 = vmatpush1.bf16.msra.mxu0 %v1274
    %1773 = vmatprep.subr.bf16.mxu0 %v1279
    %1774 = vmatpush1.bf16.msra.mxu0 %v1278
    %1775 = vmatprep.subr.bf16.mxu0 %v1283
    %1776 = vmatpush1.bf16.msra.mxu0 %v1282
    %1777 = vmatprep.subr.bf16.mxu0 %v1287
    %1778 = vmatpush1.bf16.msra.mxu0 %v1286
    %1779 = vmatprep.subr.bf16.mxu0 %v1291
    %1780 = vmatpush1.bf16.msra.mxu0 %v1290
    %1781 = vmatprep.subr.bf16.mxu0 %v1295
    %1782 = vmatpush1.bf16.msra.mxu0 %v1294
    %1783 = vmatprep.subr.bf16.mxu0 %v1299
    %1784 = vmatpush1.bf16.msra.mxu0 %v1298
    %1785 = vmatprep.subr.bf16.mxu0 %v1303
    %1786 = vmatpush1.bf16.msra.mxu0 %v1302
    %1787 = vmatprep.subr.bf16.mxu0 %v1307
    %1788 = vmatpush1.bf16.msra.mxu0 %v1306
    %1789 = vmatprep.subr.bf16.mxu0 %v1311
    %1790 = vmatpush1.bf16.msra.mxu0 %v1310
    %1791 = vmatprep.subr.bf16.mxu0 %v1315
    %1792 = vmatpush1.bf16.msra.mxu0 %v1314
    %1793 = vmatprep.subr.bf16.mxu0 %v1319
    %1794 = vmatpush1.bf16.msra.mxu0 %v1318
    %1795 = vmatprep.subr.bf16.mxu0 %v1323
    %1796 = vmatpush1.bf16.msra.mxu0 %v1322
    %1797 = vmatprep.subr.bf16.mxu0 %v1327
    %1798 = vmatpush1.bf16.msra.mxu0 %v1326
    %1799 = vmatprep.mubr.bf16.mxu0 %v405
    %1800 = vmatmul.mubr.bf16.gmra.mrb[0].mxu0 %v404
    %v1801 = vpop.f32.mrb[0].mxu0
    %v1802 = vadd.f32 %v1749, %v1801
    %v1803 = vpop.f32.mrb[0].mxu0
    %v1804 = vadd.f32 %v1751, %v1803
    %v1805 = vpop.f32.mrb[0].mxu0
    %v1806 = vadd.f32 %v1753, %v1805
    %v1807 = vpop.f32.mrb[0].mxu0
    %v1808 = vadd.f32 %v1755, %v1807
    %1809 = vmatprep.mubr.bf16.mxu0 %v413
    %1810 = vmatmul.mubr.bf16.gmra.mrb[0].mxu0 %v412
    %v1811 = vpop.f32.mrb[0].mxu0
    %v1812 = vadd.f32 %v1759, %v1811
    %v1813 = vpop.f32.mrb[0].mxu0
    %v1814 = vadd.f32 %v1761, %v1813
    %v1815 = vpop.f32.mrb[0].mxu0
    %v1816 = vadd.f32 %v1763, %v1815
    %v1817 = vpop.f32.mrb[0].mxu0
    %v1818 = vadd.f32 %v1765, %v1817
    %1819 = vdwg.mxu0
    %1820 = vmatprep.subr.bf16.mxu0 %v1331
    %1821 = vmatpush1.bf16.msra.mxu0 %v1330
    %1822 = vmatprep.subr.bf16.mxu0 %v1335
    %1823 = vmatpush1.bf16.msra.mxu0 %v1334
    %1824 = vmatprep.subr.bf16.mxu0 %v1339
    %1825 = vmatpush1.bf16.msra.mxu0 %v1338
    %1826 = vmatprep.subr.bf16.mxu0 %v1343
    %1827 = vmatpush1.bf16.msra.mxu0 %v1342
    %1828 = vmatprep.subr.bf16.mxu0 %v1347
    %1829 = vmatpush1.bf16.msra.mxu0 %v1346
    %1830 = vmatprep.subr.bf16.mxu0 %v1351
    %1831 = vmatpush1.bf16.msra.mxu0 %v1350
    %1832 = vmatprep.subr.bf16.mxu0 %v1355
    %1833 = vmatpush1.bf16.msra.mxu0 %v1354
    %1834 = vmatprep.subr.bf16.mxu0 %v1359
    %1835 = vmatpush1.bf16.msra.mxu0 %v1358
    %1836 = vmatprep.subr.bf16.mxu0 %v1363
    %1837 = vmatpush1.bf16.msra.mxu0 %v1362
    %1838 = vmatprep.subr.bf16.mxu0 %v1367
    %1839 = vmatpush1.bf16.msra.mxu0 %v1366
    %1840 = vmatprep.subr.bf16.mxu0 %v1371
    %1841 = vmatpush1.bf16.msra.mxu0 %v1370
    %1842 = vmatprep.subr.bf16.mxu0 %v1375
    %1843 = vmatpush1.bf16.msra.mxu0 %v1374
    %1844 = vmatprep.subr.bf16.mxu0 %v1379
    %1845 = vmatpush1.bf16.msra.mxu0 %v1378
    %1846 = vmatprep.subr.bf16.mxu0 %v1383
    %1847 = vmatpush1.bf16.msra.mxu0 %v1382
    %1848 = vmatprep.subr.bf16.mxu0 %v1387
    %1849 = vmatpush1.bf16.msra.mxu0 %v1386
    %1850 = vmatprep.subr.bf16.mxu0 %v1391
    %1851 = vmatpush1.bf16.msra.mxu0 %v1390
    %1852 = vmatprep.mubr.bf16.mxu0 %v407
    %1853 = vmatmul.mubr.bf16.gmra.mrb[0].mxu0 %v406
    %v1854 = vpop.f32.mrb[0].mxu0
    %v1855 = vadd.f32 %v1802, %v1854
    %v1856 = vpop.f32.mrb[0].mxu0
    %v1857 = vadd.f32 %v1804, %v1856
    %v1858 = vpop.f32.mrb[0].mxu0
    %v1859 = vadd.f32 %v1806, %v1858
    %v1860 = vpop.f32.mrb[0].mxu0
    %v1861 = vadd.f32 %v1808, %v1860
    %1862 = vmatprep.mubr.bf16.mxu0 %v415
    %1863 = vmatmul.mubr.bf16.gmra.mrb[0].mxu0 %v414
    %v1864 = vpop.f32.mrb[0].mxu0
    %v1865 = vadd.f32 %v1812, %v1864
    %v1866 = vpop.f32.mrb[0].mxu0
    %v1867 = vadd.f32 %v1814, %v1866
    %v1868 = vpop.f32.mrb[0].mxu0
    %v1869 = vadd.f32 %v1816, %v1868
    %v1870 = vpop.f32.mrb[0].mxu0
    %v1871 = vadd.f32 %v1818, %v1870
    %1872 = vdwg.mxu0
    %1873 = vmatprep.subr.bf16.mxu0 %v1395
    %1874 = vmatpush1.bf16.msra.mxu0 %v1394
    %1875 = vmatprep.subr.bf16.mxu0 %v1399
    %1876 = vmatpush1.bf16.msra.mxu0 %v1398
    %1877 = vmatprep.subr.bf16.mxu0 %v1403
    %1878 = vmatpush1.bf16.msra.mxu0 %v1402
    %1879 = vmatprep.subr.bf16.mxu0 %v1407
    %1880 = vmatpush1.bf16.msra.mxu0 %v1406
    %1881 = vmatprep.subr.bf16.mxu0 %v1411
    %1882 = vmatpush1.bf16.msra.mxu0 %v1410
    %1883 = vmatprep.subr.bf16.mxu0 %v1415
    %1884 = vmatpush1.bf16.msra.mxu0 %v1414
    %1885 = vmatprep.subr.bf16.mxu0 %v1419
    %1886 = vmatpush1.bf16.msra.mxu0 %v1418
    %1887 = vmatprep.subr.bf16.mxu0 %v1423
    %1888 = vmatpush1.bf16.msra.mxu0 %v1422
    %1889 = vmatprep.subr.bf16.mxu0 %v1427
    %1890 = vmatpush1.bf16.msra.mxu0 %v1426
    %1891 = vmatprep.subr.bf16.mxu0 %v1431
    %1892 = vmatpush1.bf16.msra.mxu0 %v1430
    %1893 = vmatprep.subr.bf16.mxu0 %v1435
    %1894 = vmatpush1.bf16.msra.mxu0 %v1434
    %1895 = vmatprep.subr.bf16.mxu0 %v1439
    %1896 = vmatpush1.bf16.msra.mxu0 %v1438
    %1897 = vmatprep.subr.bf16.mxu0 %v1443
    %1898 = vmatpush1.bf16.msra.mxu0 %v1442
    %1899 = vmatprep.subr.bf16.mxu0 %v1447
    %1900 = vmatpush1.bf16.msra.mxu0 %v1446
    %1901 = vmatprep.subr.bf16.mxu0 %v1451
    %1902 = vmatpush1.bf16.msra.mxu0 %v1450
    %1903 = vmatprep.subr.bf16.mxu0 %v1455
    %1904 = vmatpush1.bf16.msra.mxu0 %v1454
    %1905 = vmatprep.mubr.bf16.mxu0 %v409
    %1906 = vmatmul.mubr.bf16.gmra.mrb[0].mxu0 %v408
    %v1907 = vpop.f32.mrb[0].mxu0
    %v1908 = vadd.f32 %v1855, %v1907
    %v1909 = vpop.f32.mrb[0].mxu0
    %v1910 = vadd.f32 %v1857, %v1909
    %v1911 = vpop.f32.mrb[0].mxu0
    %v1912 = vadd.f32 %v1859, %v1911
    %v1913 = vpop.f32.mrb[0].mxu0
    %v1914 = vadd.f32 %v1861, %v1913
    %1915 = vmatprep.mubr.bf16.mxu0 %v417
    %1916 = vmatmul.mubr.bf16.gmra.mrb[0].mxu0 %v416
    %v1917 = vpop.f32.mrb[0].mxu0
    %v1918 = vadd.f32 %v1865, %v1917
    %v1919 = vpop.f32.mrb[0].mxu0
    %v1920 = vadd.f32 %v1867, %v1919
    %v1921 = vpop.f32.mrb[0].mxu0
    %v1922 = vadd.f32 %v1869, %v1921
    %v1923 = vpop.f32.mrb[0].mxu0
    %v1924 = vadd.f32 %v1871, %v1923
    %1925 = vdwg.mxu0
    %1926 = vmatprep.subr.bf16.mxu0 %v1205
    %1927 = vmatpush1.bf16.msra.mxu0 %v1204
    %1928 = vmatprep.subr.bf16.mxu0 %v1209
    %1929 = vmatpush1.bf16.msra.mxu0 %v1208
    %1930 = vmatprep.subr.bf16.mxu0 %v1213
    %1931 = vmatpush1.bf16.msra.mxu0 %v1212
    %1932 = vmatprep.subr.bf16.mxu0 %v1217
    %1933 = vmatpush1.bf16.msra.mxu0 %v1216
    %1934 = vmatprep.subr.bf16.mxu0 %v1221
    %1935 = vmatpush1.bf16.msra.mxu0 %v1220
    %1936 = vmatprep.subr.bf16.mxu0 %v1225
    %1937 = vmatpush1.bf16.msra.mxu0 %v1224
    %1938 = vmatprep.subr.bf16.mxu0 %v1229
    %1939 = vmatpush1.bf16.msra.mxu0 %v1228
    %1940 = vmatprep.subr.bf16.mxu0 %v1233
    %1941 = vmatpush1.bf16.msra.mxu0 %v1232
    %1942 = vmatprep.subr.bf16.mxu0 %v1237
    %1943 = vmatpush1.bf16.msra.mxu0 %v1236
    %1944 = vmatprep.subr.bf16.mxu0 %v1241
    %1945 = vmatpush1.bf16.msra.mxu0 %v1240
    %1946 = vmatprep.subr.bf16.mxu0 %v1245
    %1947 = vmatpush1.bf16.msra.mxu0 %v1244
    %1948 = vmatprep.subr.bf16.mxu0 %v1249
    %1949 = vmatpush1.bf16.msra.mxu0 %v1248
    %1950 = vmatprep.subr.bf16.mxu0 %v1253
    %1951 = vmatpush1.bf16.msra.mxu0 %v1252
    %1952 = vmatprep.subr.bf16.mxu0 %v1257
    %1953 = vmatpush1.bf16.msra.mxu0 %v1256
    %1954 = vmatprep.subr.bf16.mxu0 %v1261
    %1955 = vmatpush1.bf16.msra.mxu0 %v1260
    %1956 = vmatprep.subr.bf16.mxu0 %v1265
    %1957 = vmatpush1.bf16.msra.mxu0 %v1264
    %1958 = vmatprep.mubr.bf16.mxu0 %v403
    %1959 = vmatmul.mubr.bf16.gmra.mrb[0].mxu0 %v402
    %v1960 = vpop.f32.mrb[0].mxu0
    %v1961 = vadd.f32 %v345, %v1960
    %v1962 = vpop.f32.mrb[0].mxu0
    %v1963 = vadd.f32 %v349, %v1962
    %v1964 = vpop.f32.mrb[0].mxu0
    %v1965 = vadd.f32 %v345, %v1964
    %v1966 = vpop.f32.mrb[0].mxu0
    %v1967 = vadd.f32 %v349, %v1966
    %1968 = vmatprep.mubr.bf16.mxu0 %v411
    %1969 = vmatmul.mubr.bf16.gmra.mrb[0].mxu0 %v410
    %v1970 = vpop.f32.mrb[0].mxu0
    %v1971 = vadd.f32 %v345, %v1970
    %v1972 = vpop.f32.mrb[0].mxu0
    %v1973 = vadd.f32 %v349, %v1972
    %v1974 = vpop.f32.mrb[0].mxu0
    %v1975 = vadd.f32 %v345, %v1974
    %v1976 = vpop.f32.mrb[0].mxu0
    %v1977 = vadd.f32 %v349, %v1976
    %1978 = vdwg.mxu0
    %1979 = vmatprep.subr.bf16.mxu0 %v1269
    %1980 = vmatpush1.bf16.msra.mxu0 %v1268
    %1981 = vmatprep.subr.bf16.mxu0 %v1273
    %1982 = vmatpush1.bf16.msra.mxu0 %v1272
    %1983 = vmatprep.subr.bf16.mxu0 %v1277
    %1984 = vmatpush1.bf16.msra.mxu0 %v1276
    %1985 = vmatprep.subr.bf16.mxu0 %v1281
    %1986 = vmatpush1.bf16.msra.mxu0 %v1280
    %1987 = vmatprep.subr.bf16.mxu0 %v1285
    %1988 = vmatpush1.bf16.msra.mxu0 %v1284
    %1989 = vmatprep.subr.bf16.mxu0 %v1289
    %1990 = vmatpush1.bf16.msra.mxu0 %v1288
    %1991 = vmatprep.subr.bf16.mxu0 %v1293
    %1992 = vmatpush1.bf16.msra.mxu0 %v1292
    %1993 = vmatprep.subr.bf16.mxu0 %v1297
    %1994 = vmatpush1.bf16.msra.mxu0 %v1296
    %1995 = vmatprep.subr.bf16.mxu0 %v1301
    %1996 = vmatpush1.bf16.msra.mxu0 %v1300
    %1997 = vmatprep.subr.bf16.mxu0 %v1305
    %1998 = vmatpush1.bf16.msra.mxu0 %v1304
    %1999 = vmatprep.subr.bf16.mxu0 %v1309
    %2000 = vmatpush1.bf16.msra.mxu0 %v1308
    %2001 = vmatprep.subr.bf16.mxu0 %v1313
    %2002 = vmatpush1.bf16.msra.mxu0 %v1312
    %2003 = vmatprep.subr.bf16.mxu0 %v1317
    %2004 = vmatpush1.bf16.msra.mxu0 %v1316
    %2005 = vmatprep.subr.bf16.mxu0 %v1321
    %2006 = vmatpush1.bf16.msra.mxu0 %v1320
    %2007 = vmatprep.subr.bf16.mxu0 %v1325
    %2008 = vmatpush1.bf16.msra.mxu0 %v1324
    %2009 = vmatprep.subr.bf16.mxu0 %v1329
    %2010 = vmatpush1.bf16.msra.mxu0 %v1328
    %2011 = vmatprep.mubr.bf16.mxu0 %v405
    %2012 = vmatmul.mubr.bf16.gmra.mrb[0].mxu0 %v404
    %v2013 = vpop.f32.mrb[0].mxu0
    %v2014 = vadd.f32 %v1961, %v2013
    %v2015 = vpop.f32.mrb[0].mxu0
    %v2016 = vadd.f32 %v1963, %v2015
    %v2017 = vpop.f32.mrb[0].mxu0
    %v2018 = vadd.f32 %v1965, %v2017
    %v2019 = vpop.f32.mrb[0].mxu0
    %v2020 = vadd.f32 %v1967, %v2019
    %2021 = vmatprep.mubr.bf16.mxu0 %v413
    %2022 = vmatmul.mubr.bf16.gmra.mrb[0].mxu0 %v412
    %v2023 = vpop.f32.mrb[0].mxu0
    %v2024 = vadd.f32 %v1971, %v2023
    %v2025 = vpop.f32.mrb[0].mxu0
    %v2026 = vadd.f32 %v1973, %v2025
    %v2027 = vpop.f32.mrb[0].mxu0
    %v2028 = vadd.f32 %v1975, %v2027
    %v2029 = vpop.f32.mrb[0].mxu0
    %v2030 = vadd.f32 %v1977, %v2029
    %2031 = vdwg.mxu0
    %2032 = vmatprep.subr.bf16.mxu0 %v1333
    %2033 = vmatpush1.bf16.msra.mxu0 %v1332
    %2034 = vmatprep.subr.bf16.mxu0 %v1337
    %2035 = vmatpush1.bf16.msra.mxu0 %v1336
    %2036 = vmatprep.subr.bf16.mxu0 %v1341
    %2037 = vmatpush1.bf16.msra.mxu0 %v1340
    %2038 = vmatprep.subr.bf16.mxu0 %v1345
    %2039 = vmatpush1.bf16.msra.mxu0 %v1344
    %2040 = vmatprep.subr.bf16.mxu0 %v1349
    %2041 = vmatpush1.bf16.msra.mxu0 %v1348
    %2042 = vmatprep.subr.bf16.mxu0 %v1353
    %2043 = vmatpush1.bf16.msra.mxu0 %v1352
    %2044 = vmatprep.subr.bf16.mxu0 %v1357
    %2045 = vmatpush1.bf16.msra.mxu0 %v1356
    %2046 = vmatprep.subr.bf16.mxu0 %v1361
    %2047 = vmatpush1.bf16.msra.mxu0 %v1360
    %2048 = vmatprep.subr.bf16.mxu0 %v1365
    %2049 = vmatpush1.bf16.msra.mxu0 %v1364
    %2050 = vmatprep.subr.bf16.mxu0 %v1369
    %2051 = vmatpush1.bf16.msra.mxu0 %v1368
    %2052 = vmatprep.subr.bf16.mxu0 %v1373
    %2053 = vmatpush1.bf16.msra.mxu0 %v1372
    %2054 = vmatprep.subr.bf16.mxu0 %v1377
    %2055 = vmatpush1.bf16.msra.mxu0 %v1376
    %2056 = vmatprep.subr.bf16.mxu0 %v1381
    %2057 = vmatpush1.bf16.msra.mxu0 %v1380
    %2058 = vmatprep.subr.bf16.mxu0 %v1385
    %2059 = vmatpush1.bf16.msra.mxu0 %v1384
    %2060 = vmatprep.subr.bf16.mxu0 %v1389
    %2061 = vmatpush1.bf16.msra.mxu0 %v1388
    %2062 = vmatprep.subr.bf16.mxu0 %v1393
    %2063 = vmatpush1.bf16.msra.mxu0 %v1392
    %2064 = vmatprep.mubr.bf16.mxu0 %v407
    %2065 = vmatmul.mubr.bf16.gmra.mrb[0].mxu0 %v406
    %v2066 = vpop.f32.mrb[0].mxu0
    %v2067 = vadd.f32 %v2014, %v2066
    %v2068 = vpop.f32.mrb[0].mxu0
    %v2069 = vadd.f32 %v2016, %v2068
    %v2070 = vpop.f32.mrb[0].mxu0
    %v2071 = vadd.f32 %v2018, %v2070
    %v2072 = vpop.f32.mrb[0].mxu0
    %v2073 = vadd.f32 %v2020, %v2072
    %2074 = vmatprep.mubr.bf16.mxu0 %v415
    %2075 = vmatmul.mubr.bf16.gmra.mrb[0].mxu0 %v414
    %v2076 = vpop.f32.mrb[0].mxu0
    %v2077 = vadd.f32 %v2024, %v2076
    %v2078 = vpop.f32.mrb[0].mxu0
    %v2079 = vadd.f32 %v2026, %v2078
    %v2080 = vpop.f32.mrb[0].mxu0
    %v2081 = vadd.f32 %v2028, %v2080
    %v2082 = vpop.f32.mrb[0].mxu0
    %v2083 = vadd.f32 %v2030, %v2082
    %2084 = vdwg.mxu0
    %2085 = vmatprep.subr.bf16.mxu0 %v1397
    %2086 = vmatpush1.bf16.msra.mxu0 %v1396
    %2087 = vmatprep.subr.bf16.mxu0 %v1401
    %2088 = vmatpush1.bf16.msra.mxu0 %v1400
    %2089 = vmatprep.subr.bf16.mxu0 %v1405
    %2090 = vmatpush1.bf16.msra.mxu0 %v1404
    %2091 = vmatprep.subr.bf16.mxu0 %v1409
    %2092 = vmatpush1.bf16.msra.mxu0 %v1408
    %2093 = vmatprep.subr.bf16.mxu0 %v1413
    %2094 = vmatpush1.bf16.msra.mxu0 %v1412
    %2095 = vmatprep.subr.bf16.mxu0 %v1417
    %2096 = vmatpush1.bf16.msra.mxu0 %v1416
    %2097 = vmatprep.subr.bf16.mxu0 %v1421
    %2098 = vmatpush1.bf16.msra.mxu0 %v1420
    %2099 = vmatprep.subr.bf16.mxu0 %v1425
    %2100 = vmatpush1.bf16.msra.mxu0 %v1424
    %2101 = vmatprep.subr.bf16.mxu0 %v1429
    %2102 = vmatpush1.bf16.msra.mxu0 %v1428
    %2103 = vmatprep.subr.bf16.mxu0 %v1433
    %2104 = vmatpush1.bf16.msra.mxu0 %v1432
    %2105 = vmatprep.subr.bf16.mxu0 %v1437
    %2106 = vmatpush1.bf16.msra.mxu0 %v1436
    %2107 = vmatprep.subr.bf16.mxu0 %v1441
    %2108 = vmatpush1.bf16.msra.mxu0 %v1440
    %2109 = vmatprep.subr.bf16.mxu0 %v1445
    %2110 = vmatpush1.bf16.msra.mxu0 %v1444
    %2111 = vmatprep.subr.bf16.mxu0 %v1449
    %2112 = vmatpush1.bf16.msra.mxu0 %v1448
    %2113 = vmatprep.subr.bf16.mxu0 %v1453
    %2114 = vmatpush1.bf16.msra.mxu0 %v1452
    %2115 = vmatprep.subr.bf16.mxu0 %v1457
    %2116 = vmatpush1.bf16.msra.mxu0 %v1456
    %2117 = vmatprep.mubr.bf16.mxu0 %v409
    %2118 = vmatmul.mubr.bf16.gmra.mrb[0].mxu0 %v408
    %v2119 = vpop.f32.mrb[0].mxu0
    %v2120 = vadd.f32 %v2067, %v2119
    %v2121 = vpop.f32.mrb[0].mxu0
    %v2122 = vadd.f32 %v2069, %v2121
    %v2123 = vpop.f32.mrb[0].mxu0
    %v2124 = vadd.f32 %v2071, %v2123
    %v2125 = vpop.f32.mrb[0].mxu0
    %v2126 = vadd.f32 %v2073, %v2125
    %2127 = vmatprep.mubr.bf16.mxu0 %v417
    %2128 = vmatmul.mubr.bf16.gmra.mrb[0].mxu0 %v416
    %v2129 = vpop.f32.mrb[0].mxu0
    %v2130 = vadd.f32 %v2077, %v2129
    %v2131 = vpop.f32.mrb[0].mxu0
    %v2132 = vadd.f32 %v2079, %v2131
    %v2133 = vpop.f32.mrb[0].mxu0
    %v2134 = vadd.f32 %v2081, %v2133
    %v2135 = vpop.f32.mrb[0].mxu0
    %v2136 = vadd.f32 %v2083, %v2135
    %2137 = vdwg.mxu0
    %v2138 = vmax.f32 %v1908, 0.0
    %v2139 = vmax.f32 %v1910, 0.0
    %v2140 = vmax.f32 %v2120, 0.0
    %v2141 = vmax.f32 %v2122, 0.0
    %v2142 = vmax.f32 %v1912, 0.0
    %v2143 = vmax.f32 %v1914, 0.0
    %v2144 = vmax.f32 %v2124, 0.0
    %v2145 = vmax.f32 %v2126, 0.0
    %v2146 = vmax.f32 %v1918, 0.0
    %v2147 = vmax.f32 %v1920, 0.0
    %v2148 = vmax.f32 %v2130, 0.0
    %v2149 = vmax.f32 %v2132, 0.0
    %v2150 = vmax.f32 %v1922, 0.0
    %v2151 = vmax.f32 %v1924, 0.0
    %v2152 = vmax.f32 %v2134, 0.0
    %v2153 = vmax.f32 %v2136, 0.0
    %v2154 = vpack.c.bf16 %v2142, %v2138
    %v2155 = vpack.c.bf16 %v2143, %v2139
    %v2156 = vpack.c.bf16 %v2144, %v2140
    %v2157 = vpack.c.bf16 %v2145, %v2141
    %v2158 = vpack.c.bf16 %v2150, %v2146
    %v2159 = vpack.c.bf16 %v2151, %v2147
    %v2160 = vpack.c.bf16 %v2152, %v2148
    %v2161 = vpack.c.bf16 %v2153, %v2149
    %v2162 = vld [vmem:[#allocation4] sm:$0xff]
    %v2163 = vld [vmem:[#allocation4 + $0x8] sm:$0xff]
    %v2164 = vld [vmem:[#allocation4 + $0x10] sm:$0xff]
    %v2165 = vld [vmem:[#allocation4 + $0x18] sm:$0xff]
    %v2166 = vld [vmem:[#allocation4 + $0x20] sm:$0xff]
    %v2167 = vld [vmem:[#allocation4 + $0x28] sm:$0xff]
    %v2168 = vld [vmem:[#allocation4 + $0x30] sm:$0xff]
    %v2169 = vld [vmem:[#allocation4 + $0x38] sm:$0xff]
    %v2170 = vld [vmem:[#allocation4 + $0x40] sm:$0xff]
    %v2171 = vld [vmem:[#allocation4 + $0x48] sm:$0xff]
    %v2172 = vld [vmem:[#allocation4 + $0x50] sm:$0xff]
    %v2173 = vld [vmem:[#allocation4 + $0x58] sm:$0xff]
    %v2174 = vld [vmem:[#allocation4 + $0x60] sm:$0xff]
    %v2175 = vld [vmem:[#allocation4 + $0x68] sm:$0xff]
    %v2176 = vld [vmem:[#allocation4 + $0x70] sm:$0xff]
    %v2177 = vld [vmem:[#allocation4 + $0x78] sm:$0xff]
    %v2178 = vld [vmem:[#allocation4 + $0x80] sm:$0xff]
    %v2179 = vld [vmem:[#allocation4 + $0x88] sm:$0xff]
    %v2180 = vld [vmem:[#allocation4 + $0x90] sm:$0xff]
    %v2181 = vld [vmem:[#allocation4 + $0x98] sm:$0xff]
    %v2182 = vld [vmem:[#allocation4 + $0xa0] sm:$0xff]
    %v2183 = vld [vmem:[#allocation4 + $0xa8] sm:$0xff]
    %v2184 = vld [vmem:[#allocation4 + $0xb0] sm:$0xff]
    %v2185 = vld [vmem:[#allocation4 + $0xb8] sm:$0xff]
    %v2186 = vld [vmem:[#allocation4 + $0xc0] sm:$0xff]
    %v2187 = vld [vmem:[#allocation4 + $0xc8] sm:$0xff]
    %v2188 = vld [vmem:[#allocation4 + $0xd0] sm:$0xff]
    %v2189 = vld [vmem:[#allocation4 + $0xd8] sm:$0xff]
    %v2190 = vld [vmem:[#allocation4 + $0xe0] sm:$0xff]
    %v2191 = vld [vmem:[#allocation4 + $0xe8] sm:$0xff]
    %v2192 = vld [vmem:[#allocation4 + $0xf0] sm:$0xff]
    %v2193 = vld [vmem:[#allocation4 + $0xf8] sm:$0xff]
    %v2194 = vld [vmem:[#allocation4 + $0x100] sm:$0xff]
    %v2195 = vld [vmem:[#allocation4 + $0x108] sm:$0xff]
    %v2196 = vld [vmem:[#allocation4 + $0x110] sm:$0xff]
    %v2197 = vld [vmem:[#allocation4 + $0x118] sm:$0xff]
    %v2198 = vld [vmem:[#allocation4 + $0x120] sm:$0xff]
    %v2199 = vld [vmem:[#allocation4 + $0x128] sm:$0xff]
    %v2200 = vld [vmem:[#allocation4 + $0x130] sm:$0xff]
    %v2201 = vld [vmem:[#allocation4 + $0x138] sm:$0xff]
    %v2202 = vld [vmem:[#allocation4 + $0x140] sm:$0xff]
    %v2203 = vld [vmem:[#allocation4 + $0x148] sm:$0xff]
    %v2204 = vld [vmem:[#allocation4 + $0x150] sm:$0xff]
    %v2205 = vld [vmem:[#allocation4 + $0x158] sm:$0xff]
    %v2206 = vld [vmem:[#allocation4 + $0x160] sm:$0xff]
    %v2207 = vld [vmem:[#allocation4 + $0x168] sm:$0xff]
    %v2208 = vld [vmem:[#allocation4 + $0x170] sm:$0xff]
    %v2209 = vld [vmem:[#allocation4 + $0x178] sm:$0xff]
    %v2210 = vld [vmem:[#allocation4 + $0x180] sm:$0xff]
    %v2211 = vld [vmem:[#allocation4 + $0x188] sm:$0xff]
    %v2212 = vld [vmem:[#allocation4 + $0x190] sm:$0xff]
    %v2213 = vld [vmem:[#allocation4 + $0x198] sm:$0xff]
    %v2214 = vld [vmem:[#allocation4 + $0x1a0] sm:$0xff]
    %v2215 = vld [vmem:[#allocation4 + $0x1a8] sm:$0xff]
    %v2216 = vld [vmem:[#allocation4 + $0x1b0] sm:$0xff]
    %v2217 = vld [vmem:[#allocation4 + $0x1b8] sm:$0xff]
    %v2218 = vld [vmem:[#allocation4 + $0x1c0] sm:$0xff]
    %v2219 = vld [vmem:[#allocation4 + $0x1c8] sm:$0xff]
    %v2220 = vld [vmem:[#allocation4 + $0x1d0] sm:$0xff]
    %v2221 = vld [vmem:[#allocation4 + $0x1d8] sm:$0xff]
    %v2222 = vld [vmem:[#allocation4 + $0x1e0] sm:$0xff]
    %v2223 = vld [vmem:[#allocation4 + $0x1e8] sm:$0xff]
    %v2224 = vld [vmem:[#allocation4 + $0x1f0] sm:$0xff]
    %v2225 = vld [vmem:[#allocation4 + $0x1f8] sm:$0xff]
    %v2226 = vld [vmem:[%s4] sm:$0x3]
    %v2228 = vlaneseq
    %v2229 = vshrl.u32 %v2228, 7
    %v2230 = vsub.s32 0, %v2229
    %v2231 = vrot.slane %v2226, %v2230
    %v2232 = vlaneseq
    %v2233 = vshrl.u32 %v2232, 7
    %v2234 = vsub.s32 1, %v2233
    %v2235 = vrot.slane %v2226, %v2234
    %v2302 = vunpack.c.l.b16 %v2162
    %v2303 = vunpack.c.h.b16 %v2162
    %v2304 = vunpack.c.l.b16 %v2163
    %v2305 = vunpack.c.h.b16 %v2163
    %v2306 = vunpack.c.l.b16 %v2164
    %v2307 = vunpack.c.h.b16 %v2164
    %v2308 = vunpack.c.l.b16 %v2165
    %v2309 = vunpack.c.h.b16 %v2165
    %v2310 = vunpack.c.l.b16 %v2166
    %v2311 = vunpack.c.h.b16 %v2166
    %v2312 = vunpack.c.l.b16 %v2167
    %v2313 = vunpack.c.h.b16 %v2167
    %v2314 = vunpack.c.l.b16 %v2168
    %v2315 = vunpack.c.h.b16 %v2168
    %v2316 = vunpack.c.l.b16 %v2169
    %v2317 = vunpack.c.h.b16 %v2169
    %v2318 = vunpack.c.l.b16 %v2170
    %v2319 = vunpack.c.h.b16 %v2170
    %v2320 = vunpack.c.l.b16 %v2171
    %v2321 = vunpack.c.h.b16 %v2171
    %v2322 = vunpack.c.l.b16 %v2172
    %v2323 = vunpack.c.h.b16 %v2172
    %v2324 = vunpack.c.l.b16 %v2173
    %v2325 = vunpack.c.h.b16 %v2173
    %v2326 = vunpack.c.l.b16 %v2174
    %v2327 = vunpack.c.h.b16 %v2174
    %v2328 = vunpack.c.l.b16 %v2175
    %v2329 = vunpack.c.h.b16 %v2175
    %v2330 = vunpack.c.l.b16 %v2176
    %v2331 = vunpack.c.h.b16 %v2176
    %v2332 = vunpack.c.l.b16 %v2177
    %v2333 = vunpack.c.h.b16 %v2177
    %v2334 = vunpack.c.l.b16 %v2178
    %v2335 = vunpack.c.h.b16 %v2178
    %v2336 = vunpack.c.l.b16 %v2179
    %v2337 = vunpack.c.h.b16 %v2179
    %v2338 = vunpack.c.l.b16 %v2180
    %v2339 = vunpack.c.h.b16 %v2180
    %v2340 = vunpack.c.l.b16 %v2181
    %v2341 = vunpack.c.h.b16 %v2181
    %v2342 = vunpack.c.l.b16 %v2182
    %v2343 = vunpack.c.h.b16 %v2182
    %v2344 = vunpack.c.l.b16 %v2183
    %v2345 = vunpack.c.h.b16 %v2183
    %v2346 = vunpack.c.l.b16 %v2184
    %v2347 = vunpack.c.h.b16 %v2184
    %v2348 = vunpack.c.l.b16 %v2185
    %v2349 = vunpack.c.h.b16 %v2185
    %v2350 = vunpack.c.l.b16 %v2186
    %v2351 = vunpack.c.h.b16 %v2186
    %v2352 = vunpack.c.l.b16 %v2187
    %v2353 = vunpack.c.h.b16 %v2187
    %v2354 = vunpack.c.l.b16 %v2188
    %v2355 = vunpack.c.h.b16 %v2188
    %v2356 = vunpack.c.l.b16 %v2189
    %v2357 = vunpack.c.h.b16 %v2189
    %v2358 = vunpack.c.l.b16 %v2190
    %v2359 = vunpack.c.h.b16 %v2190
    %v2360 = vunpack.c.l.b16 %v2191
    %v2361 = vunpack.c.h.b16 %v2191
    %v2362 = vunpack.c.l.b16 %v2192
    %v2363 = vunpack.c.h.b16 %v2192
    %v2364 = vunpack.c.l.b16 %v2193
    %v2365 = vunpack.c.h.b16 %v2193
    %v2366 = vunpack.c.l.b16 %v2194
    %v2367 = vunpack.c.h.b16 %v2194
    %v2368 = vunpack.c.l.b16 %v2195
    %v2369 = vunpack.c.h.b16 %v2195
    %v2370 = vunpack.c.l.b16 %v2196
    %v2371 = vunpack.c.h.b16 %v2196
    %v2372 = vunpack.c.l.b16 %v2197
    %v2373 = vunpack.c.h.b16 %v2197
    %v2374 = vunpack.c.l.b16 %v2198
    %v2375 = vunpack.c.h.b16 %v2198
    %v2376 = vunpack.c.l.b16 %v2199
    %v2377 = vunpack.c.h.b16 %v2199
    %v2378 = vunpack.c.l.b16 %v2200
    %v2379 = vunpack.c.h.b16 %v2200
    %v2380 = vunpack.c.l.b16 %v2201
    %v2381 = vunpack.c.h.b16 %v2201
    %v2382 = vunpack.c.l.b16 %v2202
    %v2383 = vunpack.c.h.b16 %v2202
    %v2384 = vunpack.c.l.b16 %v2203
    %v2385 = vunpack.c.h.b16 %v2203
    %v2386 = vunpack.c.l.b16 %v2204
    %v2387 = vunpack.c.h.b16 %v2204
    %v2388 = vunpack.c.l.b16 %v2205
    %v2389 = vunpack.c.h.b16 %v2205
    %v2390 = vunpack.c.l.b16 %v2206
    %v2391 = vunpack.c.h.b16 %v2206
    %v2392 = vunpack.c.l.b16 %v2207
    %v2393 = vunpack.c.h.b16 %v2207
    %v2394 = vunpack.c.l.b16 %v2208
    %v2395 = vunpack.c.h.b16 %v2208
    %v2396 = vunpack.c.l.b16 %v2209
    %v2397 = vunpack.c.h.b16 %v2209
    %v2398 = vunpack.c.l.b16 %v2210
    %v2399 = vunpack.c.h.b16 %v2210
    %v2400 = vunpack.c.l.b16 %v2211
    %v2401 = vunpack.c.h.b16 %v2211
    %v2402 = vunpack.c.l.b16 %v2212
    %v2403 = vunpack.c.h.b16 %v2212
    %v2404 = vunpack.c.l.b16 %v2213
    %v2405 = vunpack.c.h.b16 %v2213
    %v2406 = vunpack.c.l.b16 %v2214
    %v2407 = vunpack.c.h.b16 %v2214
    %v2408 = vunpack.c.l.b16 %v2215
    %v2409 = vunpack.c.h.b16 %v2215
    %v2410 = vunpack.c.l.b16 %v2216
    %v2411 = vunpack.c.h.b16 %v2216
    %v2412 = vunpack.c.l.b16 %v2217
    %v2413 = vunpack.c.h.b16 %v2217
    %v2414 = vunpack.c.l.b16 %v2218
    %v2415 = vunpack.c.h.b16 %v2218
    %v2416 = vunpack.c.l.b16 %v2219
    %v2417 = vunpack.c.h.b16 %v2219
    %v2418 = vunpack.c.l.b16 %v2220
    %v2419 = vunpack.c.h.b16 %v2220
    %v2420 = vunpack.c.l.b16 %v2221
    %v2421 = vunpack.c.h.b16 %v2221
    %v2422 = vunpack.c.l.b16 %v2222
    %v2423 = vunpack.c.h.b16 %v2222
    %v2424 = vunpack.c.l.b16 %v2223
    %v2425 = vunpack.c.h.b16 %v2223
    %v2426 = vunpack.c.l.b16 %v2224
    %v2427 = vunpack.c.h.b16 %v2224
    %v2428 = vunpack.c.l.b16 %v2225
    %v2429 = vunpack.c.h.b16 %v2225
    %v2430 = vpack.c.b16 %v2304, %v2302
    %v2431 = vpack.c.b16 %v2305, %v2303
    %v2432 = vpack.c.b16 %v2308, %v2306
    %v2433 = vpack.c.b16 %v2309, %v2307
    %v2434 = vpack.c.b16 %v2312, %v2310
    %v2435 = vpack.c.b16 %v2313, %v2311
    %v2436 = vpack.c.b16 %v2316, %v2314
    %v2437 = vpack.c.b16 %v2317, %v2315
    %v2438 = vpack.c.b16 %v2320, %v2318
    %v2439 = vpack.c.b16 %v2321, %v2319
    %v2440 = vpack.c.b16 %v2324, %v2322
    %v2441 = vpack.c.b16 %v2325, %v2323
    %v2442 = vpack.c.b16 %v2328, %v2326
    %v2443 = vpack.c.b16 %v2329, %v2327
    %v2444 = vpack.c.b16 %v2332, %v2330
    %v2445 = vpack.c.b16 %v2333, %v2331
    %v2446 = vpack.c.b16 %v2336, %v2334
    %v2447 = vpack.c.b16 %v2337, %v2335
    %v2448 = vpack.c.b16 %v2340, %v2338
    %v2449 = vpack.c.b16 %v2341, %v2339
    %v2450 = vpack.c.b16 %v2344, %v2342
    %v2451 = vpack.c.b16 %v2345, %v2343
    %v2452 = vpack.c.b16 %v2348, %v2346
    %v2453 = vpack.c.b16 %v2349, %v2347
    %v2454 = vpack.c.b16 %v2352, %v2350
    %v2455 = vpack.c.b16 %v2353, %v2351
    %v2456 = vpack.c.b16 %v2356, %v2354
    %v2457 = vpack.c.b16 %v2357, %v2355
    %v2458 = vpack.c.b16 %v2360, %v2358
    %v2459 = vpack.c.b16 %v2361, %v2359
    %v2460 = vpack.c.b16 %v2364, %v2362
    %v2461 = vpack.c.b16 %v2365, %v2363
    %v2462 = vpack.c.b16 %v2368, %v2366
    %v2463 = vpack.c.b16 %v2369, %v2367
    %v2464 = vpack.c.b16 %v2372, %v2370
    %v2465 = vpack.c.b16 %v2373, %v2371
    %v2466 = vpack.c.b16 %v2376, %v2374
    %v2467 = vpack.c.b16 %v2377, %v2375
    %v2468 = vpack.c.b16 %v2380, %v2378
    %v2469 = vpack.c.b16 %v2381, %v2379
    %v2470 = vpack.c.b16 %v2384, %v2382
    %v2471 = vpack.c.b16 %v2385, %v2383
    %v2472 = vpack.c.b16 %v2388, %v2386
    %v2473 = vpack.c.b16 %v2389, %v2387
    %v2474 = vpack.c.b16 %v2392, %v2390
    %v2475 = vpack.c.b16 %v2393, %v2391
    %v2476 = vpack.c.b16 %v2396, %v2394
    %v2477 = vpack.c.b16 %v2397, %v2395
    %v2478 = vpack.c.b16 %v2400, %v2398
    %v2479 = vpack.c.b16 %v2401, %v2399
    %v2480 = vpack.c.b16 %v2404, %v2402
    %v2481 = vpack.c.b16 %v2405, %v2403
    %v2482 = vpack.c.b16 %v2408, %v2406
    %v2483 = vpack.c.b16 %v2409, %v2407
    %v2484 = vpack.c.b16 %v2412, %v2410
    %v2485 = vpack.c.b16 %v2413, %v2411
    %v2486 = vpack.c.b16 %v2416, %v2414
    %v2487 = vpack.c.b16 %v2417, %v2415
    %v2488 = vpack.c.b16 %v2420, %v2418
    %v2489 = vpack.c.b16 %v2421, %v2419
    %v2490 = vpack.c.b16 %v2424, %v2422
    %v2491 = vpack.c.b16 %v2425, %v2423
    %v2492 = vpack.c.b16 %v2428, %v2426
    %v2493 = vpack.c.b16 %v2429, %v2427
    %2558 = vmatprep.subr.bf16.mxu0 %v2431
    %2559 = vmatpush1.bf16.msra.mxu0 %v2430
    %2560 = vmatprep.subr.bf16.mxu0 %v2433
    %2561 = vmatpush1.bf16.msra.mxu0 %v2432
    %2562 = vmatprep.subr.bf16.mxu0 %v2435
    %2563 = vmatpush1.bf16.msra.mxu0 %v2434
    %2564 = vmatprep.subr.bf16.mxu0 %v2437
    %2565 = vmatpush1.bf16.msra.mxu0 %v2436
    %2566 = vmatprep.subr.bf16.mxu0 %v2439
    %2567 = vmatpush1.bf16.msra.mxu0 %v2438
    %2568 = vmatprep.subr.bf16.mxu0 %v2441
    %2569 = vmatpush1.bf16.msra.mxu0 %v2440
    %2570 = vmatprep.subr.bf16.mxu0 %v2443
    %2571 = vmatpush1.bf16.msra.mxu0 %v2442
    %2572 = vmatprep.subr.bf16.mxu0 %v2445
    %2573 = vmatpush1.bf16.msra.mxu0 %v2444
    %2574 = vmatprep.subr.bf16.mxu0 %v2447
    %2575 = vmatpush1.bf16.msra.mxu0 %v2446
    %2576 = vmatprep.subr.bf16.mxu0 %v2449
    %2577 = vmatpush1.bf16.msra.mxu0 %v2448
    %2578 = vmatprep.subr.bf16.mxu0 %v2451
    %2579 = vmatpush1.bf16.msra.mxu0 %v2450
    %2580 = vmatprep.subr.bf16.mxu0 %v2453
    %2581 = vmatpush1.bf16.msra.mxu0 %v2452
    %2582 = vmatprep.subr.bf16.mxu0 %v2455
    %2583 = vmatpush1.bf16.msra.mxu0 %v2454
    %2584 = vmatprep.subr.bf16.mxu0 %v2457
    %2585 = vmatpush1.bf16.msra.mxu0 %v2456
    %2586 = vmatprep.subr.bf16.mxu0 %v2459
    %2587 = vmatpush1.bf16.msra.mxu0 %v2458
    %2588 = vmatprep.subr.bf16.mxu0 %v2461
    %2589 = vmatpush1.bf16.msra.mxu0 %v2460
    %2590 = vmatprep.mubr.bf16.mxu0 %v2155
    %2591 = vmatmul.mubr.bf16.gmra.mrb[0].mxu0 %v2154
    %v2592 = vpop.f32.mrb[0].mxu0
    %v2593 = vadd.f32 %v2231, %v2592
    %v2594 = vpop.f32.mrb[0].mxu0
    %v2595 = vadd.f32 %v2235, %v2594
    %v2596 = vpop.f32.mrb[0].mxu0
    %v2597 = vadd.f32 %v2231, %v2596
    %v2598 = vpop.f32.mrb[0].mxu0
    %v2599 = vadd.f32 %v2235, %v2598
    %2600 = vmatprep.mubr.bf16.mxu0 %v2159
    %2601 = vmatmul.mubr.bf16.gmra.mrb[0].mxu0 %v2158
    %v2602 = vpop.f32.mrb[0].mxu0
    %v2603 = vadd.f32 %v2231, %v2602
    %v2604 = vpop.f32.mrb[0].mxu0
    %v2605 = vadd.f32 %v2235, %v2604
    %v2606 = vpop.f32.mrb[0].mxu0
    %v2607 = vadd.f32 %v2231, %v2606
    %v2608 = vpop.f32.mrb[0].mxu0
    %v2609 = vadd.f32 %v2235, %v2608
    %2610 = vdwg.mxu0
    %2611 = vmatprep.subr.bf16.mxu0 %v2463
    %2612 = vmatpush1.bf16.msra.mxu0 %v2462
    %2613 = vmatprep.subr.bf16.mxu0 %v2465
    %2614 = vmatpush1.bf16.msra.mxu0 %v2464
    %2615 = vmatprep.subr.bf16.mxu0 %v2467
    %2616 = vmatpush1.bf16.msra.mxu0 %v2466
    %2617 = vmatprep.subr.bf16.mxu0 %v2469
    %2618 = vmatpush1.bf16.msra.mxu0 %v2468
    %2619 = vmatprep.subr.bf16.mxu0 %v2471
    %2620 = vmatpush1.bf16.msra.mxu0 %v2470
    %2621 = vmatprep.subr.bf16.mxu0 %v2473
    %2622 = vmatpush1.bf16.msra.mxu0 %v2472
    %2623 = vmatprep.subr.bf16.mxu0 %v2475
    %2624 = vmatpush1.bf16.msra.mxu0 %v2474
    %2625 = vmatprep.subr.bf16.mxu0 %v2477
    %2626 = vmatpush1.bf16.msra.mxu0 %v2476
    %2627 = vmatprep.subr.bf16.mxu0 %v2479
    %2628 = vmatpush1.bf16.msra.mxu0 %v2478
    %2629 = vmatprep.subr.bf16.mxu0 %v2481
    %2630 = vmatpush1.bf16.msra.mxu0 %v2480
    %2631 = vmatprep.subr.bf16.mxu0 %v2483
    %2632 = vmatpush1.bf16.msra.mxu0 %v2482
    %2633 = vmatprep.subr.bf16.mxu0 %v2485
    %2634 = vmatpush1.bf16.msra.mxu0 %v2484
    %2635 = vmatprep.subr.bf16.mxu0 %v2487
    %2636 = vmatpush1.bf16.msra.mxu0 %v2486
    %2637 = vmatprep.subr.bf16.mxu0 %v2489
    %2638 = vmatpush1.bf16.msra.mxu0 %v2488
    %2639 = vmatprep.subr.bf16.mxu0 %v2491
    %2640 = vmatpush1.bf16.msra.mxu0 %v2490
    %2641 = vmatprep.subr.bf16.mxu0 %v2493
    %2642 = vmatpush1.bf16.msra.mxu0 %v2492
    %2643 = vmatprep.mubr.bf16.mxu0 %v2157
    %2644 = vmatmul.mubr.bf16.gmra.mrb[0].mxu0 %v2156
    %v2645 = vpop.f32.mrb[0].mxu0
    %v2646 = vadd.f32 %v2593, %v2645
    %v2647 = vpop.f32.mrb[0].mxu0
    %v2648 = vadd.f32 %v2595, %v2647
    %v2649 = vpop.f32.mrb[0].mxu0
    %v2650 = vadd.f32 %v2597, %v2649
    %v2651 = vpop.f32.mrb[0].mxu0
    %v2652 = vadd.f32 %v2599, %v2651
    %2653 = vmatprep.mubr.bf16.mxu0 %v2161
    %2654 = vmatmul.mubr.bf16.gmra.mrb[0].mxu0 %v2160
    %v2655 = vpop.f32.mrb[0].mxu0
    %v2656 = vadd.f32 %v2603, %v2655
    %v2657 = vpop.f32.mrb[0].mxu0
    %v2658 = vadd.f32 %v2605, %v2657
    %v2659 = vpop.f32.mrb[0].mxu0
    %v2660 = vadd.f32 %v2607, %v2659
    %v2661 = vpop.f32.mrb[0].mxu0
    %v2662 = vadd.f32 %v2609, %v2661
    %2663 = vdwg.mxu0
    %v2664 = vmax.f32 %v2646, 0.0
    %v2665 = vmax.f32 %v2648, 0.0
    %v2666 = vmax.f32 %v2650, 0.0
    %v2667 = vmax.f32 %v2652, 0.0
    %v2668 = vmax.f32 %v2656, 0.0
    %v2669 = vmax.f32 %v2658, 0.0
    %v2670 = vmax.f32 %v2660, 0.0
    %v2671 = vmax.f32 %v2662, 0.0
    %v2672 = vpack.c.bf16 %v2666, %v2664
    %v2673 = vpack.c.bf16 %v2667, %v2665
    %v2674 = vpack.c.bf16 %v2670, %v2668
    %v2675 = vpack.c.bf16 %v2671, %v2669
    %v2676 = vld [vmem:[%s5] sm:$0xf]
    %v2677 = vld [vmem:[%s5 + $0x4] sm:$0xf]
    %v2678 = vld [vmem:[%s5 + $0x8] sm:$0xf]
    %v2679 = vld [vmem:[%s5 + $0xc] sm:$0xf]
    %v2680 = vld [vmem:[%s5 + $0x10] sm:$0xf]
    %v2681 = vld [vmem:[%s5 + $0x14] sm:$0xf]
    %v2682 = vld [vmem:[%s5 + $0x18] sm:$0xf]
    %v2683 = vld [vmem:[%s5 + $0x1c] sm:$0xf]
    %v2684 = vld [vmem:[%s5 + $0x20] sm:$0xf]
    %v2685 = vld [vmem:[%s5 + $0x24] sm:$0xf]
    %v2686 = vld [vmem:[%s5 + $0x28] sm:$0xf]
    %v2687 = vld [vmem:[%s5 + $0x2c] sm:$0xf]
    %v2688 = vld [vmem:[%s5 + $0x30] sm:$0xf]
    %v2689 = vld [vmem:[%s5 + $0x34] sm:$0xf]
    %v2690 = vld [vmem:[%s5 + $0x38] sm:$0xf]
    %v2691 = vld [vmem:[%s5 + $0x3c] sm:$0xf]
    %v2692 = vld [vmem:[%s5 + $0x40] sm:$0xf]
    %v2693 = vld [vmem:[%s5 + $0x44] sm:$0xf]
    %v2694 = vld [vmem:[%s5 + $0x48] sm:$0xf]
    %v2695 = vld [vmem:[%s5 + $0x4c] sm:$0xf]
    %v2696 = vld [vmem:[%s5 + $0x50] sm:$0xf]
    %v2697 = vld [vmem:[%s5 + $0x54] sm:$0xf]
    %v2698 = vld [vmem:[%s5 + $0x58] sm:$0xf]
    %v2699 = vld [vmem:[%s5 + $0x5c] sm:$0xf]
    %v2700 = vld [vmem:[%s5 + $0x60] sm:$0xf]
    %v2701 = vld [vmem:[%s5 + $0x64] sm:$0xf]
    %v2702 = vld [vmem:[%s5 + $0x68] sm:$0xf]
    %v2703 = vld [vmem:[%s5 + $0x6c] sm:$0xf]
    %v2704 = vld [vmem:[%s5 + $0x70] sm:$0xf]
    %v2705 = vld [vmem:[%s5 + $0x74] sm:$0xf]
    %v2706 = vld [vmem:[%s5 + $0x78] sm:$0xf]
    %v2707 = vld [vmem:[%s5 + $0x7c] sm:$0xf]
    %v2708 = vld [vmem:[%s6] sm:$0x1]
    %v2710 = vlaneseq
    %v2711 = vshrl.u32 %v2710, 7
    %v2712 = vsub.s32 0, %v2711
    %v2713 = vrot.slane %v2708, %v2712
    %v2747 = vunpack.c.l.b16 %v2676
    %v2748 = vunpack.c.l.b16 %v2677
    %v2749 = vunpack.c.l.b16 %v2678
    %v2750 = vunpack.c.l.b16 %v2679
    %v2751 = vunpack.c.l.b16 %v2680
    %v2752 = vunpack.c.l.b16 %v2681
    %v2753 = vunpack.c.l.b16 %v2682
    %v2754 = vunpack.c.l.b16 %v2683
    %v2755 = vunpack.c.l.b16 %v2684
    %v2756 = vunpack.c.l.b16 %v2685
    %v2757 = vunpack.c.l.b16 %v2686
    %v2758 = vunpack.c.l.b16 %v2687
    %v2759 = vunpack.c.l.b16 %v2688
    %v2760 = vunpack.c.l.b16 %v2689
    %v2761 = vunpack.c.l.b16 %v2690
    %v2762 = vunpack.c.l.b16 %v2691
    %v2763 = vunpack.c.l.b16 %v2692
    %v2764 = vunpack.c.l.b16 %v2693
    %v2765 = vunpack.c.l.b16 %v2694
    %v2766 = vunpack.c.l.b16 %v2695
    %v2767 = vunpack.c.l.b16 %v2696
    %v2768 = vunpack.c.l.b16 %v2697
    %v2769 = vunpack.c.l.b16 %v2698
    %v2770 = vunpack.c.l.b16 %v2699
    %v2771 = vunpack.c.l.b16 %v2700
    %v2772 = vunpack.c.l.b16 %v2701
    %v2773 = vunpack.c.l.b16 %v2702
    %v2774 = vunpack.c.l.b16 %v2703
    %v2775 = vunpack.c.l.b16 %v2704
    %v2776 = vunpack.c.l.b16 %v2705
    %v2777 = vunpack.c.l.b16 %v2706
    %v2778 = vunpack.c.l.b16 %v2707
    %v2779 = vpack.c.b16 %v2748, %v2747
    %v2780 = vpack.c.b16 %v2750, %v2749
    %v2781 = vpack.c.b16 %v2752, %v2751
    %v2782 = vpack.c.b16 %v2754, %v2753
    %v2783 = vpack.c.b16 %v2756, %v2755
    %v2784 = vpack.c.b16 %v2758, %v2757
    %v2785 = vpack.c.b16 %v2760, %v2759
    %v2786 = vpack.c.b16 %v2762, %v2761
    %v2787 = vpack.c.b16 %v2764, %v2763
    %v2788 = vpack.c.b16 %v2766, %v2765
    %v2789 = vpack.c.b16 %v2768, %v2767
    %v2790 = vpack.c.b16 %v2770, %v2769
    %v2791 = vpack.c.b16 %v2772, %v2771
    %v2792 = vpack.c.b16 %v2774, %v2773
    %v2793 = vpack.c.b16 %v2776, %v2775
    %v2794 = vpack.c.b16 %v2778, %v2777
    %2811 = vmatprep.subr.bf16.mxu0 0
    %2812 = vmatpush1.bf16.msra.mxu0 %v2779
    %2813 = vmatprep.subr.bf16.mxu0 0
    %2814 = vmatpush1.bf16.msra.mxu0 %v2780
    %2815 = vmatprep.subr.bf16.mxu0 0
    %2816 = vmatpush1.bf16.msra.mxu0 %v2781
    %2817 = vmatprep.subr.bf16.mxu0 0
    %2818 = vmatpush1.bf16.msra.mxu0 %v2782
    %2819 = vmatprep.subr.bf16.mxu0 0
    %2820 = vmatpush1.bf16.msra.mxu0 %v2783
    %2821 = vmatprep.subr.bf16.mxu0 0
    %2822 = vmatpush1.bf16.msra.mxu0 %v2784
    %2823 = vmatprep.subr.bf16.mxu0 0
    %2824 = vmatpush1.bf16.msra.mxu0 %v2785
    %2825 = vmatprep.subr.bf16.mxu0 0
    %2826 = vmatpush1.bf16.msra.mxu0 %v2786
    %2827 = vmatprep.subr.bf16.mxu0 0
    %2828 = vmatpush1.bf16.msra.mxu0 %v2787
    %2829 = vmatprep.subr.bf16.mxu0 0
    %2830 = vmatpush1.bf16.msra.mxu0 %v2788
    %2831 = vmatprep.subr.bf16.mxu0 0
    %2832 = vmatpush1.bf16.msra.mxu0 %v2789
    %2833 = vmatprep.subr.bf16.mxu0 0
    %2834 = vmatpush1.bf16.msra.mxu0 %v2790
    %2835 = vmatprep.subr.bf16.mxu0 0
    %2836 = vmatpush1.bf16.msra.mxu0 %v2791
    %2837 = vmatprep.subr.bf16.mxu0 0
    %2838 = vmatpush1.bf16.msra.mxu0 %v2792
    %2839 = vmatprep.subr.bf16.mxu0 0
    %2840 = vmatpush1.bf16.msra.mxu0 %v2793
    %2841 = vmatprep.subr.bf16.mxu0 0
    %2842 = vmatpush1.bf16.msra.mxu0 %v2794
    %2843 = vmatprep.mubr.bf16.mxu0 %v2673
    %2844 = vmatmul.mubr.bf16.gmra.mrb[0].mxu0 %v2672
    %v2845 = vpop.f32.mrb[0].mxu0
    %v2846 = vadd.f32 %v2713, %v2845
    %v2847 = vpop.f32.mrb[0].mxu0
    %v2848 = vpop.f32.mrb[0].mxu0
    %v2849 = vadd.f32 %v2713, %v2848
    %v2850 = vpop.f32.mrb[0].mxu0
    %2851 = vmatprep.mubr.bf16.mxu0 %v2675
    %2852 = vmatmul.mubr.bf16.gmra.mrb[0].mxu0 %v2674
    %v2853 = vpop.f32.mrb[0].mxu0
    %v2854 = vadd.f32 %v2713, %v2853
    %v2855 = vpop.f32.mrb[0].mxu0
    %v2856 = vpop.f32.mrb[0].mxu0
    %v2857 = vadd.f32 %v2713, %v2856
    %v2858 = vpop.f32.mrb[0].mxu0
    %2859 = vdwg.mxu0
    %vm2860 = vcmask 80896
    %2861 = vst.msk [vmem:[%s8] sm:$0xff] %vm2860, %v2846
    %2862 = vst.msk [vmem:[%s8 + $0x8] sm:$0xff] %vm2860, %v2849
    %2863 = vst.msk [vmem:[%s8 + $0x10] sm:$0xff] %vm2860, %v2854
    %2864 = vst.msk [vmem:[%s8 + $0x18] sm:$0xff] %vm2860, %v2857
    %v2865 = vsel %vm2860, %v2846, -inf
    %2866 = vmax.xlane.f32.xlu0 %v2865
    %v2867 = vpop.xlane.xlu0 %2866
    %v2868 = vsel %vm2860, %v2849, -inf
    %2869 = vmax.xlane.f32.xlu0 %v2868
    %v2870 = vpop.xlane.xlu0 %2869
    %v2871 = vsel %vm2860, %v2854, -inf
    %2872 = vmax.xlane.f32.xlu0 %v2871
    %v2873 = vpop.xlane.xlu0 %2872
    %v2874 = vsel %vm2860, %v2857, -inf
    %2875 = vmax.xlane.f32.xlu0 %v2874
    %v2876 = vpop.xlane.xlu0 %2875
    %v2877 = vsub.f32 %v2846, %v2867
    %v2878 = vsub.f32 %v2849, %v2870
    %v2879 = vsub.f32 %v2854, %v2873
    %v2880 = vsub.f32 %v2857, %v2876
    %v2881 = vmul.f32 %v2877, 1.442695
    %v2882 = vpow.pop %v2881
    %v2883 = vmul.f32 %v2878, 1.442695
    %v2884 = vpow.pop %v2883
    %v2885 = vmul.f32 %v2879, 1.442695
    %v2886 = vpow.pop %v2885
    %v2887 = vmul.f32 %v2880, 1.442695
    %v2888 = vpow.pop %v2887
    %v2889 = vsel %vm2860, %v2882, 0.0
    %2890 = vadd.xlane.f32.xlu0 %v2889
    %v2891 = vpop.xlane.xlu0 %2890
    %v2892 = vsel %vm2860, %v2884, 0.0
    %2893 = vadd.xlane.f32.xlu0 %v2892
    %v2894 = vpop.xlane.xlu0 %2893
    %v2895 = vsel %vm2860, %v2886, 0.0
    %2896 = vadd.xlane.f32.xlu0 %v2895
    %v2897 = vpop.xlane.xlu0 %2896
    %v2898 = vsel %vm2860, %v2888, 0.0
    %2899 = vadd.xlane.f32.xlu0 %v2898
    %v2900 = vpop.xlane.xlu0 %2899
    %v2901 = vlog2.pop %v2891
    %v2902 = vmul.f32 %v2901, 0.6931472
    %v2903 = vlog2.pop %v2894
    %v2904 = vmul.f32 %v2903, 0.6931472
    %v2905 = vlog2.pop %v2897
    %v2906 = vmul.f32 %v2905, 0.6931472
    %v2907 = vlog2.pop %v2900
    %v2908 = vmul.f32 %v2907, 0.6931472
    %v2909 = vadd.f32 %v2867, %v2902
    %v2910 = vadd.f32 %v2870, %v2904
    %v2911 = vadd.f32 %v2873, %v2906
    %v2912 = vadd.f32 %v2876, %v2908
    %v2913 = vsub.f32 %v2846, %v2909
    %v2914 = vsub.f32 %v2849, %v2910
    %v2915 = vsub.f32 %v2854, %v2911
    %v2916 = vsub.f32 %v2857, %v2912
    %v2917 = vlaneseq
    %v2918 = vand.u32 %v2917, 127
    %v2919 = vld [vmem:[%s7] sm:$0xff]
    %v2920 = vld [vmem:[%s7 + $0x8] sm:$0xff]
    %v2921 = vld [vmem:[%s7 + $0x10] sm:$0xff]
    %v2922 = vld [vmem:[%s7 + $0x18] sm:$0xff]
    %2923 = vset.pattern.permute.xlu0 0
    %2924 = vperm.xlu0 %2923, %v2919
    %v2925 = vpop.permute.xlu0 %2924
    %2926 = vset.pattern.permute.xlu0 0
    %2927 = vperm.xlu0 %2926, %v2920
    %v2928 = vpop.permute.xlu0 %2927
    %2929 = vset.pattern.permute.xlu0 0
    %2930 = vperm.xlu0 %2929, %v2921
    %v2931 = vpop.permute.xlu0 %2930
    %2932 = vset.pattern.permute.xlu0 0
    %2933 = vperm.xlu0 %2932, %v2922
    %v2934 = vpop.permute.xlu0 %2933
    %vm2935 = vcmp.eq.s32.totalorder %v2918, %v2925
    %vm2936 = vcmp.eq.s32.totalorder %v2918, %v2928
    %vm2937 = vcmp.eq.s32.totalorder %v2918, %v2931
    %vm2938 = vcmp.eq.s32.totalorder %v2918, %v2934
    %v2939 = vsel %vm2935, %v2913, 0.0
    %v2940 = vsel %vm2936, %v2914, 0.0
    %v2941 = vsel %vm2937, %v2915, 0.0
    %v2942 = vsel %vm2938, %v2916, 0.0
    %v2943 = vsel %vm2860, %v2939, 0.0
    %2944 = vadd.xlane.f32.xlu0 %v2943
    %v2945 = vpop.xlane.xlu0 %2944
    %v2946 = vsel %vm2860, %v2940, 0.0
    %2947 = vadd.xlane.f32.xlu0 %v2946
    %v2948 = vpop.xlane.xlu0 %2947
    %v2949 = vsel %vm2860, %v2941, 0.0
    %2950 = vadd.xlane.f32.xlu0 %v2949
    %v2951 = vpop.xlane.xlu0 %2950
    %v2952 = vsel %vm2860, %v2942, 0.0
    %2953 = vadd.xlane.f32.xlu0 %v2952
    %v2954 = vpop.xlane.xlu0 %2953
    %vm2955 = vcmask 7168
    %2956 = vst.msk [vmem:[%s9] sm:$0xff] %vm2955, %v2945
    %2957 = vst.msk [vmem:[%s9 + $0x8] sm:$0xff] %vm2955, %v2948
    %2958 = vst.msk [vmem:[%s9 + $0x10] sm:$0xff] %vm2955, %v2951
    %2959 = vst.msk [vmem:[%s9 + $0x18] sm:$0xff] %vm2955, %v2954
    // Predicated region
    $region42: #{tpu_custom_call.1} parent=1 // pred_check
      _
    $region43: #{tpu_custom_call.1} parent=1 // pred_check_branch
      %2961 = sbr.rel (0) target = $region45
    $region44: #{tpu_custom_call.1} parent=1 // pred_region
      _
    $region45: #{tpu_custom_call.1} parent=1 // pred_fallthru
      _
    // Predicated region
    $region46: #{tpu_custom_call.1} parent=1 // pred_check
      _
    $region47: #{tpu_custom_call.1} parent=1 // pred_check_branch
      %2963 = sbr.rel (0) target = $region49
    $region48: #{tpu_custom_call.1} parent=1 // pred_region
      _
    $region49: #{tpu_custom_call.1} parent=1 // pred_fallthru
      _
    // Predicated region
    $region50: #{tpu_custom_call.1} parent=1 // pred_check
      _
    $region51: #{tpu_custom_call.1} parent=1 // pred_check_branch
      %2965 = sbr.rel (0) target = $region53
    $region52: #{tpu_custom_call.1} parent=1 // pred_region
      _
    $region53: #{tpu_custom_call.1} parent=1 // pred_fallthru
      _
    // Predicated region
    $region54: #{tpu_custom_call.1} parent=1 // pred_check
      _
    $region55: #{tpu_custom_call.1} parent=1 // pred_check_branch
      %2967 = sbr.rel (0) target = $region57
    $region56: #{tpu_custom_call.1} parent=1 // pred_region
      _
    $region57: #{tpu_custom_call.1} parent=1 // pred_fallthru
      _
    %2968 = vsyncpa [#allocation3], 1
    %2969 = vsyncpa [#allocation5], 1

</llo_original>
